<compile_context>
chip_gen: v7x
topology: tpu7x:2x2x1
jax: 0.10.0
libtpu: 0.0.40
codegen_flags: <defaults>
</compile_context>

<pallas_src>
import functools

import jax
import jax.numpy as jnp
from jax import lax
from jax.experimental import pallas as pl
from jax.experimental.pallas import tpu as pltpu


_N_SWEEPS = 10  # cyclic Jacobi sweeps; an 8x8 f32 converges in <=6, margin added


def _linear_vpu(inp, w, b):
    """inp @ w + b as unrolled VPU multiply-adds (contraction depth 2 or 4)."""
    k_in = w.shape[0]
    acc = inp[:, 0:1] * w[0:1, :]
    for k in range(1, k_in):                       # static unroll
        acc = acc + inp[:, k:k + 1] * w[k:k + 1, :]
    return acc + b


def _jacobi_rotate(a, p, q):
    """One two-sided Jacobi rotation zeroing a[p, q]; p, q are static ints."""
    app = a[p:p + 1, p:p + 1]
    aqq = a[q:q + 1, q:q + 1]
    apq = a[p:p + 1, q:q + 1]

    do_rot = jnp.abs(apq) > 1e-12
    safe_apq = jnp.where(do_rot, apq, 1.0)
    tau = (aqq - app) / (2.0 * safe_apq)
    sgn = jnp.where(tau >= 0.0, 1.0, -1.0)
    t = sgn / (jnp.abs(tau) + jnp.sqrt(1.0 + tau * tau))
    c = lax.rsqrt(1.0 + t * t)
    s = t * c
    c = jnp.where(do_rot, c, 1.0)
    s = jnp.where(do_rot, s, 0.0)

    n = a.shape[0]
    rid = lax.broadcasted_iota(jnp.int32, (n, n), 0)
    cid = lax.broadcasted_iota(jnp.int32, (n, n), 1)

    # Row update: A1 = J^T A
    row_p = a[p:p + 1, :]
    row_q = a[q:q + 1, :]
    a1 = jnp.where(rid == p, c * row_p - s * row_q,
                   jnp.where(rid == q, s * row_p + c * row_q, a))

    # Column update: A2 = A1 J
    col_p = a1[:, p:p + 1]
    col_q = a1[:, q:q + 1]
    a2 = jnp.where(cid == p, c * col_p - s * col_q,
                   jnp.where(cid == q, s * col_p + c * col_q, a1))
    return a2


def net_kernel(packed_ref, e_ref, l_ref, *, n, f_in, h, f_out):
    pk = packed_ref[...]                                       # (8, 8) f32, one DMA

    # Unpack the slab with static slices (vreg-resident).
    x = pk[:n, 0:f_in]                                         # (N, 2)
    w1 = pk[0:f_in, f_in:f_in + h]                             # (2, 4)
    b1 = pk[f_in:f_in + 1, f_in:f_in + h]                      # (1, 4)
    w2 = pk[0:h, f_in + h:f_in + h + f_out]                    # (4, 2)
    b2 = pk[h:h + 1, f_in + h:f_in + h + f_out]                # (1, 2)

    # fc1 -> sigmoid, fc2 -> sigmoid  (VPU + EUP, no MXU)
    h1 = jax.nn.sigmoid(_linear_vpu(x, w1, b1))                # (N, 4)
    y = jax.nn.sigmoid(_linear_vpu(h1, w2, b2))                # (N, 2)

    # Pairwise squared distances, feature dim unrolled.
    yt = jnp.transpose(y)                                      # (2, N) via XLU
    d0 = y[:, 0:1] - yt[0:1, :]
    dist = d0 * d0
    for k in range(1, f_out):                                  # static unroll
        dk = y[:, k:k + 1] - yt[k:k + 1, :]
        dist = dist + dk * dk

    adj = jnp.exp(-10.0 * dist)                                # AdjMat (N, N)
    rowsum = jnp.sum(adj, axis=1, keepdims=True)               # degrees (N, 1)

    rid = lax.broadcasted_iota(jnp.int32, (n, n), 0)
    cid = lax.broadcasted_iota(jnp.int32, (n, n), 1)
    eye = rid == cid
    lap = jnp.where(eye, rowsum - adj, -adj)                   # LapMat = D - A
    l_ref[...] = lap

    # In-kernel symmetric eigensolve: fixed-sweep cyclic Jacobi (VPU only).
    pairs = [(p_, q_) for p_ in range(n - 1) for q_ in range(p_ + 1, n)]

    def sweep(_, a):
        for (p_, q_) in pairs:                                 # static unroll
            a = _jacobi_rotate(a, p_, q_)
        return a

    a_diag = lax.fori_loop(0, _N_SWEEPS, sweep, lap)

    # diag -> |.| (torch.svd singular values) -> descending sort via rank-select.
    diag = jnp.where(eye, a_diag, 0.0)
    v_row = jnp.abs(jnp.sum(diag, axis=0, keepdims=True))      # (1, N)
    v_col = jnp.abs(jnp.sum(diag, axis=1, keepdims=True))      # (N, 1)
    greater = (v_col > v_row) | ((v_col == v_row) & (rid < cid))
    rank = jnp.sum(greater.astype(jnp.int32), axis=0, keepdims=True)  # (1, N)
    sel = rank == rid                                          # (N, N)
    e_ref[...] = jnp.sum(jnp.where(sel, v_row, 0.0), axis=1, keepdims=True)


def net_forward(x, w1, b1, w2, b2):
    n, f_in = x.shape
    h = w1.shape[1]
    f_out = w2.shape[1]
    n_cols = f_in + h + f_out
    n_rows = max(n, f_in + 1, h + 1)

    # Pack all inputs into one slab -> a single input DMA for the kernel.
    packed = jnp.zeros((n_rows, n_cols), jnp.float32)
    packed = packed.at[:n, 0:f_in].set(x)
    packed = packed.at[0:f_in, f_in:f_in + h].set(w1)
    packed = packed.at[f_in:f_in + 1, f_in:f_in + h].set(b1)
    packed = packed.at[0:h, f_in + h:].set(w2)
    packed = packed.at[h:h + 1, f_in + h:].set(b2)

    kernel = functools.partial(net_kernel, n=n, f_in=f_in, h=h, f_out=f_out)
    e2d, lap = pl.pallas_call(
        kernel,
        out_shape=(jax.ShapeDtypeStruct((n, 1), jnp.float32),   # spectrum
                   jax.ShapeDtypeStruct((n, n), jnp.float32)),  # Laplacian
        in_specs=[pl.BlockSpec(memory_space=pltpu.MemorySpace.VMEM)],
        out_specs=(pl.BlockSpec(memory_space=pltpu.MemorySpace.VMEM),
                   pl.BlockSpec(memory_space=pltpu.MemorySpace.VMEM)),
    )(packed)
    return e2d[:, 0], lap


def init_params(key):
    # Deterministic init mimicking nn.Linear.reset_parameters ranges
    # (uniform in [-1/sqrt(fan_in), 1/sqrt(fan_in)]).
    k1, k2, k3, k4 = jax.random.split(key, 4)
    b1_bound = 1.0 / jnp.sqrt(2.0)
    b2_bound = 1.0 / jnp.sqrt(4.0)
    w1 = jax.random.uniform(k1, (2, 4), jnp.float32, -b1_bound, b1_bound)
    b1 = jax.random.uniform(k2, (1, 4), jnp.float32, -b1_bound, b1_bound)
    w2 = jax.random.uniform(k3, (4, 2), jnp.float32, -b2_bound, b2_bound)
    b2 = jax.random.uniform(k4, (1, 2), jnp.float32, -b2_bound, b2_bound)
    return w1, b1, w2, b2


if __name__ == "__main__":
    key = jax.random.PRNGKey(0)
    kx, kp = jax.random.split(key)

    N = 8                                        # number of 2-D points
    x = jax.random.normal(kx, (N, 2), jnp.float32)
    w1, b1, w2, b2 = init_params(kp)

    e, L = jax.jit(net_forward)(x, w1, b1, w2, b2)
    jax.block_until_ready((e, L))

    assert L.shape == (N, N) and e.shape == (N,)
    # Laplacian rows sum to ~0; spectrum is sorted descending and non-negative.
    assert jnp.allclose(jnp.sum(L, axis=1), 0.0, atol=1e-5)
    assert bool(jnp.all(e[:-1] >= e[1:] - 1e-6))
    assert bool(jnp.all(e >= 0.0))
    # Cross-check the in-kernel Jacobi spectrum against XLA eigvalsh (test only).
    e_ref = jnp.sort(jnp.abs(jnp.linalg.eigvalsh(L)))[::-1]
    assert jnp.allclose(e, e_ref, atol=2e-3)
    print("KERNEL_OK")
</pallas_src>

<mosaic_0001>
module attributes {stable_mosaic.version = 11 : i64} {
  func.func @net_kernel(%arg0: memref<8x8xf32, #tpu.memory_space<vmem>>, %arg1: memref<8x1xf32, #tpu.memory_space<vmem>>, %arg2: memref<8x8xf32, #tpu.memory_space<vmem>>) attributes {dimension_semantics = [], scalar_prefetch = 0 : i64, scratch_operands = 0 : i64, tpu.core_type = #tpu.core_type<tc>} {
    %c0 = arith.constant 0 : index
    %c0_0 = arith.constant 0 : index
    %0 = vector.load %arg0[%c0, %c0_0] : memref<8x8xf32, #tpu.memory_space<vmem>>, vector<8x8xf32>
    %1 = vector.extract_strided_slice %0 {offsets = [0, 0], sizes = [8, 2], strides = [1, 1]} : vector<8x8xf32> to vector<8x2xf32>
    %2 = vector.extract_strided_slice %0 {offsets = [0, 2], sizes = [2, 4], strides = [1, 1]} : vector<8x8xf32> to vector<2x4xf32>
    %3 = vector.extract_strided_slice %0 {offsets = [2, 2], sizes = [1, 4], strides = [1, 1]} : vector<8x8xf32> to vector<1x4xf32>
    %4 = vector.extract_strided_slice %0 {offsets = [0, 6], sizes = [4, 2], strides = [1, 1]} : vector<8x8xf32> to vector<4x2xf32>
    %5 = vector.extract_strided_slice %0 {offsets = [4, 6], sizes = [1, 2], strides = [1, 1]} : vector<8x8xf32> to vector<1x2xf32>
    %6 = vector.extract_strided_slice %1 {offsets = [0, 0], sizes = [8, 1], strides = [1, 1]} : vector<8x2xf32> to vector<8x1xf32>
    %7 = vector.extract_strided_slice %2 {offsets = [0, 0], sizes = [1, 4], strides = [1, 1]} : vector<2x4xf32> to vector<1x4xf32>
    %8 = vector.broadcast %6 : vector<8x1xf32> to vector<8x4xf32>
    %9 = vector.broadcast %7 : vector<1x4xf32> to vector<8x4xf32>
    %10 = arith.mulf %8, %9 : vector<8x4xf32>
    %11 = vector.extract_strided_slice %1 {offsets = [0, 1], sizes = [8, 1], strides = [1, 1]} : vector<8x2xf32> to vector<8x1xf32>
    %12 = vector.extract_strided_slice %2 {offsets = [1, 0], sizes = [1, 4], strides = [1, 1]} : vector<2x4xf32> to vector<1x4xf32>
    %13 = vector.broadcast %11 : vector<8x1xf32> to vector<8x4xf32>
    %14 = vector.broadcast %12 : vector<1x4xf32> to vector<8x4xf32>
    %15 = arith.mulf %13, %14 : vector<8x4xf32>
    %16 = arith.addf %10, %15 : vector<8x4xf32>
    %17 = vector.broadcast %3 : vector<1x4xf32> to vector<8x4xf32>
    %18 = arith.addf %16, %17 : vector<8x4xf32>
    %19 = arith.negf %18 : vector<8x4xf32>
    %20 = math.exp %19 : vector<8x4xf32>
    %cst = arith.constant 1.000000e+00 : f32
    %21 = vector.broadcast %cst : f32 to vector<8x4xf32>
    %22 = arith.addf %21, %20 : vector<8x4xf32>
    %23 = arith.divf %21, %22 : vector<8x4xf32>
    %24 = vector.extract_strided_slice %23 {offsets = [0, 0], sizes = [8, 1], strides = [1, 1]} : vector<8x4xf32> to vector<8x1xf32>
    %25 = vector.extract_strided_slice %4 {offsets = [0, 0], sizes = [1, 2], strides = [1, 1]} : vector<4x2xf32> to vector<1x2xf32>
    %26 = vector.broadcast %24 : vector<8x1xf32> to vector<8x2xf32>
    %27 = vector.broadcast %25 : vector<1x2xf32> to vector<8x2xf32>
    %28 = arith.mulf %26, %27 : vector<8x2xf32>
    %29 = vector.extract_strided_slice %23 {offsets = [0, 1], sizes = [8, 1], strides = [1, 1]} : vector<8x4xf32> to vector<8x1xf32>
    %30 = vector.extract_strided_slice %4 {offsets = [1, 0], sizes = [1, 2], strides = [1, 1]} : vector<4x2xf32> to vector<1x2xf32>
    %31 = vector.broadcast %29 : vector<8x1xf32> to vector<8x2xf32>
    %32 = vector.broadcast %30 : vector<1x2xf32> to vector<8x2xf32>
    %33 = arith.mulf %31, %32 : vector<8x2xf32>
    %34 = arith.addf %28, %33 : vector<8x2xf32>
    %35 = vector.extract_strided_slice %23 {offsets = [0, 2], sizes = [8, 1], strides = [1, 1]} : vector<8x4xf32> to vector<8x1xf32>
    %36 = vector.extract_strided_slice %4 {offsets = [2, 0], sizes = [1, 2], strides = [1, 1]} : vector<4x2xf32> to vector<1x2xf32>
    %37 = vector.broadcast %35 : vector<8x1xf32> to vector<8x2xf32>
    %38 = vector.broadcast %36 : vector<1x2xf32> to vector<8x2xf32>
    %39 = arith.mulf %37, %38 : vector<8x2xf32>
    %40 = arith.addf %34, %39 : vector<8x2xf32>
    %41 = vector.extract_strided_slice %23 {offsets = [0, 3], sizes = [8, 1], strides = [1, 1]} : vector<8x4xf32> to vector<8x1xf32>
    %42 = vector.extract_strided_slice %4 {offsets = [3, 0], sizes = [1, 2], strides = [1, 1]} : vector<4x2xf32> to vector<1x2xf32>
    %43 = vector.broadcast %41 : vector<8x1xf32> to vector<8x2xf32>
    %44 = vector.broadcast %42 : vector<1x2xf32> to vector<8x2xf32>
    %45 = arith.mulf %43, %44 : vector<8x2xf32>
    %46 = arith.addf %40, %45 : vector<8x2xf32>
    %47 = vector.broadcast %5 : vector<1x2xf32> to vector<8x2xf32>
    %48 = arith.addf %46, %47 : vector<8x2xf32>
    %49 = arith.negf %48 : vector<8x2xf32>
    %50 = math.exp %49 : vector<8x2xf32>
    %cst_1 = arith.constant 1.000000e+00 : f32
    %51 = vector.broadcast %cst_1 : f32 to vector<8x2xf32>
    %52 = arith.addf %51, %50 : vector<8x2xf32>
    %53 = arith.divf %51, %52 : vector<8x2xf32>
    %54 = tpu.transpose %53, [1, 0] : vector<8x2xf32> -> vector<2x8xf32>
    %55 = vector.extract_strided_slice %53 {offsets = [0, 0], sizes = [8, 1], strides = [1, 1]} : vector<8x2xf32> to vector<8x1xf32>
    %56 = vector.extract_strided_slice %54 {offsets = [0, 0], sizes = [1, 8], strides = [1, 1]} : vector<2x8xf32> to vector<1x8xf32>
    %57 = vector.broadcast %55 : vector<8x1xf32> to vector<8x8xf32>
    %58 = vector.broadcast %56 : vector<1x8xf32> to vector<8x8xf32>
    %59 = arith.subf %57, %58 : vector<8x8xf32>
    %60 = arith.mulf %59, %59 : vector<8x8xf32>
    %61 = vector.extract_strided_slice %53 {offsets = [0, 1], sizes = [8, 1], strides = [1, 1]} : vector<8x2xf32> to vector<8x1xf32>
    %62 = vector.extract_strided_slice %54 {offsets = [1, 0], sizes = [1, 8], strides = [1, 1]} : vector<2x8xf32> to vector<1x8xf32>
    %63 = vector.broadcast %61 : vector<8x1xf32> to vector<8x8xf32>
    %64 = vector.broadcast %62 : vector<1x8xf32> to vector<8x8xf32>
    %65 = arith.subf %63, %64 : vector<8x8xf32>
    %66 = arith.mulf %65, %65 : vector<8x8xf32>
    %67 = arith.addf %60, %66 : vector<8x8xf32>
    %cst_2 = arith.constant -1.000000e+01 : f32
    %68 = vector.broadcast %cst_2 : f32 to vector<8x8xf32>
    %69 = arith.mulf %68, %67 : vector<8x8xf32>
    %70 = math.exp %69 : vector<8x8xf32>
    %cst_3 = arith.constant dense<0.000000e+00> : vector<8xf32>
    %71 = vector.multi_reduction <add>, %70, %cst_3 [1] : vector<8x8xf32> to vector<8xf32>
    %72 = vector.shape_cast %71 : vector<8xf32> to vector<8x1xf32>
    %73 = tpu.iota {dimensions = array<i32: 0>} : vector<8x8xi32>
    %74 = tpu.iota {dimensions = array<i32: 1>} : vector<8x8xi32>
    %75 = arith.cmpi eq, %73, %74 : vector<8x8xi32>
    %76 = vector.broadcast %72 : vector<8x1xf32> to vector<8x8xf32>
    %77 = arith.subf %76, %70 : vector<8x8xf32>
    %cst_4 = arith.constant 0.000000e+00 : f32
    %78 = vector.broadcast %cst_4 : f32 to vector<8x8xf32>
    %79 = arith.subf %78, %70 : vector<8x8xf32>
    %80 = arith.select %75, %77, %79 : vector<8x8xi1>, vector<8x8xf32>
    %c0_5 = arith.constant 0 : index
    %c0_6 = arith.constant 0 : index
    %81 = vector.load %arg2[%c0_5, %c0_6] : memref<8x8xf32, #tpu.memory_space<vmem>>, vector<8x8xf32>
    tpu.vector_store %arg2[%c0_5, %c0_6], %80 {strides = array<i32>} : memref<8x8xf32, #tpu.memory_space<vmem>>, vector<8x8xf32>,
    %c0_i32 = arith.constant 0 : i32
    %c10_i32 = arith.constant 10 : i32
    %82 = arith.addi %c0_i32, %c10_i32 : i32
    %c1_i32 = arith.constant 1 : i32
    %83 = scf.for %arg3 = %c0_i32 to %82 step %c1_i32 iter_args(%arg4 = %80) -> (vector<8x8xf32>)  : i32 {
      %113 = vector.extract_strided_slice %arg4 {offsets = [0, 0], sizes = [1, 1], strides = [1, 1]} : vector<8x8xf32> to vector<1x1xf32>
      %114 = vector.extract_strided_slice %arg4 {offsets = [1, 1], sizes = [1, 1], strides = [1, 1]} : vector<8x8xf32> to vector<1x1xf32>
      %115 = vector.extract_strided_slice %arg4 {offsets = [0, 1], sizes = [1, 1], strides = [1, 1]} : vector<8x8xf32> to vector<1x1xf32>
      %116 = math.absf %115 : vector<1x1xf32>
      %cst_15 = arith.constant 9.99999996E-13 : f32
      %117 = vector.broadcast %cst_15 : f32 to vector<1x1xf32>
      %118 = arith.cmpf ogt, %116, %117 : vector<1x1xf32>
      %cst_16 = arith.constant 1.000000e+00 : f32
      %119 = vector.broadcast %cst_16 : f32 to vector<1x1xf32>
      %120 = arith.select %118, %115, %119 : vector<1x1xi1>, vector<1x1xf32>
      %121 = arith.subf %114, %113 : vector<1x1xf32>
      %cst_17 = arith.constant 2.000000e+00 : f32
      %122 = vector.broadcast %cst_17 : f32 to vector<1x1xf32>
      %123 = arith.mulf %122, %120 : vector<1x1xf32>
      %124 = arith.divf %121, %123 : vector<1x1xf32>
      %cst_18 = arith.constant 0.000000e+00 : f32
      %125 = vector.broadcast %cst_18 : f32 to vector<1x1xf32>
      %126 = arith.cmpf oge, %124, %125 : vector<1x1xf32>
      %cst_19 = arith.constant 1.000000e+00 : f32
      %cst_20 = arith.constant -1.000000e+00 : f32
      %127 = vector.broadcast %cst_19 : f32 to vector<1x1xf32>
      %128 = vector.broadcast %cst_20 : f32 to vector<1x1xf32>
      %129 = arith.select %126, %127, %128 : vector<1x1xi1>, vector<1x1xf32>
      %130 = math.absf %124 : vector<1x1xf32>
      %131 = arith.mulf %124, %124 : vector<1x1xf32>
      %cst_21 = arith.constant 1.000000e+00 : f32
      %132 = vector.broadcast %cst_21 : f32 to vector<1x1xf32>
      %133 = arith.addf %132, %131 : vector<1x1xf32>
      %134 = math.sqrt %133 : vector<1x1xf32>
      %135 = arith.addf %130, %134 : vector<1x1xf32>
      %136 = arith.divf %129, %135 : vector<1x1xf32>
      %137 = arith.mulf %136, %136 : vector<1x1xf32>
      %cst_22 = arith.constant 1.000000e+00 : f32
      %138 = vector.broadcast %cst_22 : f32 to vector<1x1xf32>
      %139 = arith.addf %138, %137 : vector<1x1xf32>
      %140 = math.rsqrt %139 : vector<1x1xf32>
      %141 = arith.mulf %136, %140 : vector<1x1xf32>
      %cst_23 = arith.constant 1.000000e+00 : f32
      %142 = vector.broadcast %cst_23 : f32 to vector<1x1xf32>
      %143 = arith.select %118, %140, %142 : vector<1x1xi1>, vector<1x1xf32>
      %cst_24 = arith.constant 0.000000e+00 : f32
      %144 = vector.broadcast %cst_24 : f32 to vector<1x1xf32>
      %145 = arith.select %118, %141, %144 : vector<1x1xi1>, vector<1x1xf32>
      %146 = tpu.iota {dimensions = array<i32: 0>} : vector<8x8xi32>
      %147 = tpu.iota {dimensions = array<i32: 1>} : vector<8x8xi32>
      %148 = vector.extract_strided_slice %arg4 {offsets = [0, 0], sizes = [1, 8], strides = [1, 1]} : vector<8x8xf32> to vector<1x8xf32>
      %149 = vector.extract_strided_slice %arg4 {offsets = [1, 0], sizes = [1, 8], strides = [1, 1]} : vector<8x8xf32> to vector<1x8xf32>
      %c0_i32_25 = arith.constant 0 : i32
      %150 = vector.broadcast %c0_i32_25 : i32 to vector<8x8xi32>
      %151 = arith.cmpi eq, %146, %150 : vector<8x8xi32>
      %152 = vector.broadcast %143 : vector<1x1xf32> to vector<1x8xf32>
      %153 = arith.mulf %152, %148 : vector<1x8xf32>
      %154 = vector.broadcast %145 : vector<1x1xf32> to vector<1x8xf32>
      %155 = arith.mulf %154, %149 : vector<1x8xf32>
      %156 = arith.subf %153, %155 : vector<1x8xf32>
      %c1_i32_26 = arith.constant 1 : i32
      %157 = vector.broadcast %c1_i32_26 : i32 to vector<8x8xi32>
      %158 = arith.cmpi eq, %146, %157 : vector<8x8xi32>
      %159 = vector.broadcast %145 : vector<1x1xf32> to vector<1x8xf32>
      %160 = arith.mulf %159, %148 : vector<1x8xf32>
      %161 = vector.broadcast %143 : vector<1x1xf32> to vector<1x8xf32>
      %162 = arith.mulf %161, %149 : vector<1x8xf32>
      %163 = arith.addf %160, %162 : vector<1x8xf32>
      %164 = vector.shape_cast %163 : vector<1x8xf32> to vector<1x8xf32>
      %165 = vector.broadcast %164 : vector<1x8xf32> to vector<8x8xf32>
      %166 = arith.select %158, %165, %arg4 : vector<8x8xi1>, vector<8x8xf32>
      %167 = vector.shape_cast %156 : vector<1x8xf32> to vector<1x8xf32>
      %168 = vector.broadcast %167 : vector<1x8xf32> to vector<8x8xf32>
      %169 = arith.select %151, %168, %166 : vector<8x8xi1>, vector<8x8xf32>
      %170 = vector.extract_strided_slice %169 {offsets = [0, 0], sizes = [8, 1], strides = [1, 1]} : vector<8x8xf32> to vector<8x1xf32>
      %171 = vector.extract_strided_slice %169 {offsets = [0, 1], sizes = [8, 1], strides = [1, 1]} : vector<8x8xf32> to vector<8x1xf32>
      %c0_i32_27 = arith.constant 0 : i32
      %172 = vector.broadcast %c0_i32_27 : i32 to vector<8x8xi32>
      %173 = arith.cmpi eq, %147, %172 : vector<8x8xi32>
      %174 = vector.broadcast %143 : vector<1x1xf32> to vector<8x1xf32>
      %175 = arith.mulf %174, %170 : vector<8x1xf32>
      %176 = vector.broadcast %145 : vector<1x1xf32> to vector<8x1xf32>
      %177 = arith.mulf %176, %171 : vector<8x1xf32>
      %178 = arith.subf %175, %177 : vector<8x1xf32>
      %c1_i32_28 = arith.constant 1 : i32
      %179 = vector.broadcast %c1_i32_28 : i32 to vector<8x8xi32>
      %180 = arith.cmpi eq, %147, %179 : vector<8x8xi32>
      %181 = vector.broadcast %145 : vector<1x1xf32> to vector<8x1xf32>
      %182 = arith.mulf %181, %170 : vector<8x1xf32>
      %183 = vector.broadcast %143 : vector<1x1xf32> to vector<8x1xf32>
      %184 = arith.mulf %183, %171 : vector<8x1xf32>
      %185 = arith.addf %182, %184 : vector<8x1xf32>
      %186 = vector.shape_cast %185 : vector<8x1xf32> to vector<8x1xf32>
      %187 = vector.broadcast %186 : vector<8x1xf32> to vector<8x8xf32>
      %188 = arith.select %180, %187, %169 : vector<8x8xi1>, vector<8x8xf32>
      %189 = vector.shape_cast %178 : vector<8x1xf32> to vector<8x1xf32>
      %190 = vector.broadcast %189 : vector<8x1xf32> to vector<8x8xf32>
      %191 = arith.select %173, %190, %188 : vector<8x8xi1>, vector<8x8xf32>
      %192 = vector.extract_strided_slice %191 {offsets = [0, 0], sizes = [1, 1], strides = [1, 1]} : vector<8x8xf32> to vector<1x1xf32>
      %193 = vector.extract_strided_slice %191 {offsets = [2, 2], sizes = [1, 1], strides = [1, 1]} : vector<8x8xf32> to vector<1x1xf32>
      %194 = vector.extract_strided_slice %191 {offsets = [0, 2], sizes = [1, 1], strides = [1, 1]} : vector<8x8xf32> to vector<1x1xf32>
      %195 = math.absf %194 : vector<1x1xf32>
      %cst_29 = arith.constant 9.99999996E-13 : f32
      %196 = vector.broadcast %cst_29 : f32 to vector<1x1xf32>
      %197 = arith.cmpf ogt, %195, %196 : vector<1x1xf32>
      %cst_30 = arith.constant 1.000000e+00 : f32
      %198 = vector.broadcast %cst_30 : f32 to vector<1x1xf32>
      %199 = arith.select %197, %194, %198 : vector<1x1xi1>, vector<1x1xf32>
      %200 = arith.subf %193, %192 : vector<1x1xf32>
      %cst_31 = arith.constant 2.000000e+00 : f32
      %201 = vector.broadcast %cst_31 : f32 to vector<1x1xf32>
      %202 = arith.mulf %201, %199 : vector<1x1xf32>
      %203 = arith.divf %200, %202 : vector<1x1xf32>
      %cst_32 = arith.constant 0.000000e+00 : f32
      %204 = vector.broadcast %cst_32 : f32 to vector<1x1xf32>
      %205 = arith.cmpf oge, %203, %204 : vector<1x1xf32>
      %cst_33 = arith.constant 1.000000e+00 : f32
      %cst_34 = arith.constant -1.000000e+00 : f32
      %206 = vector.broadcast %cst_33 : f32 to vector<1x1xf32>
      %207 = vector.broadcast %cst_34 : f32 to vector<1x1xf32>
      %208 = arith.select %205, %206, %207 : vector<1x1xi1>, vector<1x1xf32>
      %209 = math.absf %203 : vector<1x1xf32>
      %210 = arith.mulf %203, %203 : vector<1x1xf32>
      %cst_35 = arith.constant 1.000000e+00 : f32
      %211 = vector.broadcast %cst_35 : f32 to vector<1x1xf32>
      %212 = arith.addf %211, %210 : vector<1x1xf32>
      %213 = math.sqrt %212 : vector<1x1xf32>
      %214 = arith.addf %209, %213 : vector<1x1xf32>
      %215 = arith.divf %208, %214 : vector<1x1xf32>
      %216 = arith.mulf %215, %215 : vector<1x1xf32>
      %cst_36 = arith.constant 1.000000e+00 : f32
      %217 = vector.broadcast %cst_36 : f32 to vector<1x1xf32>
      %218 = arith.addf %217, %216 : vector<1x1xf32>
      %219 = math.rsqrt %218 : vector<1x1xf32>
      %220 = arith.mulf %215, %219 : vector<1x1xf32>
      %cst_37 = arith.constant 1.000000e+00 : f32
      %221 = vector.broadcast %cst_37 : f32 to vector<1x1xf32>
      %222 = arith.select %197, %219, %221 : vector<1x1xi1>, vector<1x1xf32>
      %cst_38 = arith.constant 0.000000e+00 : f32
      %223 = vector.broadcast %cst_38 : f32 to vector<1x1xf32>
      %224 = arith.select %197, %220, %223 : vector<1x1xi1>, vector<1x1xf32>
      %225 = tpu.iota {dimensions = array<i32: 0>} : vector<8x8xi32>
      %226 = tpu.iota {dimensions = array<i32: 1>} : vector<8x8xi32>
      %227 = vector.extract_strided_slice %191 {offsets = [0, 0], sizes = [1, 8], strides = [1, 1]} : vector<8x8xf32> to vector<1x8xf32>
      %228 = vector.extract_strided_slice %191 {offsets = [2, 0], sizes = [1, 8], strides = [1, 1]} : vector<8x8xf32> to vector<1x8xf32>
      %c0_i32_39 = arith.constant 0 : i32
      %229 = vector.broadcast %c0_i32_39 : i32 to vector<8x8xi32>
      %230 = arith.cmpi eq, %225, %229 : vector<8x8xi32>
      %231 = vector.broadcast %222 : vector<1x1xf32> to vector<1x8xf32>
      %232 = arith.mulf %231, %227 : vector<1x8xf32>
      %233 = vector.broadcast %224 : vector<1x1xf32> to vector<1x8xf32>
      %234 = arith.mulf %233, %228 : vector<1x8xf32>
      %235 = arith.subf %232, %234 : vector<1x8xf32>
      %c2_i32 = arith.constant 2 : i32
      %236 = vector.broadcast %c2_i32 : i32 to vector<8x8xi32>
      %237 = arith.cmpi eq, %225, %236 : vector<8x8xi32>
      %238 = vector.broadcast %224 : vector<1x1xf32> to vector<1x8xf32>
      %239 = arith.mulf %238, %227 : vector<1x8xf32>
      %240 = vector.broadcast %222 : vector<1x1xf32> to vector<1x8xf32>
      %241 = arith.mulf %240, %228 : vector<1x8xf32>
      %242 = arith.addf %239, %241 : vector<1x8xf32>
      %243 = vector.shape_cast %242 : vector<1x8xf32> to vector<1x8xf32>
      %244 = vector.broadcast %243 : vector<1x8xf32> to vector<8x8xf32>
      %245 = arith.select %237, %244, %191 : vector<8x8xi1>, vector<8x8xf32>
      %246 = vector.shape_cast %235 : vector<1x8xf32> to vector<1x8xf32>
      %247 = vector.broadcast %246 : vector<1x8xf32> to vector<8x8xf32>
      %248 = arith.select %230, %247, %245 : vector<8x8xi1>, vector<8x8xf32>
      %249 = vector.extract_strided_slice %248 {offsets = [0, 0], sizes = [8, 1], strides = [1, 1]} : vector<8x8xf32> to vector<8x1xf32>
      %250 = vector.extract_strided_slice %248 {offsets = [0, 2], sizes = [8, 1], strides = [1, 1]} : vector<8x8xf32> to vector<8x1xf32>
      %c0_i32_40 = arith.constant 0 : i32
      %251 = vector.broadcast %c0_i32_40 : i32 to vector<8x8xi32>
      %252 = arith.cmpi eq, %226, %251 : vector<8x8xi32>
      %253 = vector.broadcast %222 : vector<1x1xf32> to vector<8x1xf32>
      %254 = arith.mulf %253, %249 : vector<8x1xf32>
      %255 = vector.broadcast %224 : vector<1x1xf32> to vector<8x1xf32>
      %256 = arith.mulf %255, %250 : vector<8x1xf32>
      %257 = arith.subf %254, %256 : vector<8x1xf32>
      %c2_i32_41 = arith.constant 2 : i32
      %258 = vector.broadcast %c2_i32_41 : i32 to vector<8x8xi32>
      %259 = arith.cmpi eq, %226, %258 : vector<8x8xi32>
      %260 = vector.broadcast %224 : vector<1x1xf32> to vector<8x1xf32>
      %261 = arith.mulf %260, %249 : vector<8x1xf32>
      %262 = vector.broadcast %222 : vector<1x1xf32> to vector<8x1xf32>
      %263 = arith.mulf %262, %250 : vector<8x1xf32>
      %264 = arith.addf %261, %263 : vector<8x1xf32>
      %265 = vector.shape_cast %264 : vector<8x1xf32> to vector<8x1xf32>
      %266 = vector.broadcast %265 : vector<8x1xf32> to vector<8x8xf32>
      %267 = arith.select %259, %266, %248 : vector<8x8xi1>, vector<8x8xf32>
      %268 = vector.shape_cast %257 : vector<8x1xf32> to vector<8x1xf32>
      %269 = vector.broadcast %268 : vector<8x1xf32> to vector<8x8xf32>
      %270 = arith.select %252, %269, %267 : vector<8x8xi1>, vector<8x8xf32>
      %271 = vector.extract_strided_slice %270 {offsets = [0, 0], sizes = [1, 1], strides = [1, 1]} : vector<8x8xf32> to vector<1x1xf32>
      %272 = vector.extract_strided_slice %270 {offsets = [3, 3], sizes = [1, 1], strides = [1, 1]} : vector<8x8xf32> to vector<1x1xf32>
      %273 = vector.extract_strided_slice %270 {offsets = [0, 3], sizes = [1, 1], strides = [1, 1]} : vector<8x8xf32> to vector<1x1xf32>
      %274 = math.absf %273 : vector<1x1xf32>
      %cst_42 = arith.constant 9.99999996E-13 : f32
      %275 = vector.broadcast %cst_42 : f32 to vector<1x1xf32>
      %276 = arith.cmpf ogt, %274, %275 : vector<1x1xf32>
      %cst_43 = arith.constant 1.000000e+00 : f32
      %277 = vector.broadcast %cst_43 : f32 to vector<1x1xf32>
      %278 = arith.select %276, %273, %277 : vector<1x1xi1>, vector<1x1xf32>
      %279 = arith.subf %272, %271 : vector<1x1xf32>
      %cst_44 = arith.constant 2.000000e+00 : f32
      %280 = vector.broadcast %cst_44 : f32 to vector<1x1xf32>
      %281 = arith.mulf %280, %278 : vector<1x1xf32>
      %282 = arith.divf %279, %281 : vector<1x1xf32>
      %cst_45 = arith.constant 0.000000e+00 : f32
      %283 = vector.broadcast %cst_45 : f32 to vector<1x1xf32>
      %284 = arith.cmpf oge, %282, %283 : vector<1x1xf32>
      %cst_46 = arith.constant 1.000000e+00 : f32
      %cst_47 = arith.constant -1.000000e+00 : f32
      %285 = vector.broadcast %cst_46 : f32 to vector<1x1xf32>
      %286 = vector.broadcast %cst_47 : f32 to vector<1x1xf32>
      %287 = arith.select %284, %285, %286 : vector<1x1xi1>, vector<1x1xf32>
      %288 = math.absf %282 : vector<1x1xf32>
      %289 = arith.mulf %282, %282 : vector<1x1xf32>
      %cst_48 = arith.constant 1.000000e+00 : f32
      %290 = vector.broadcast %cst_48 : f32 to vector<1x1xf32>
      %291 = arith.addf %290, %289 : vector<1x1xf32>
      %292 = math.sqrt %291 : vector<1x1xf32>
      %293 = arith.addf %288, %292 : vector<1x1xf32>
      %294 = arith.divf %287, %293 : vector<1x1xf32>
      %295 = arith.mulf %294, %294 : vector<1x1xf32>
      %cst_49 = arith.constant 1.000000e+00 : f32
      %296 = vector.broadcast %cst_49 : f32 to vector<1x1xf32>
      %297 = arith.addf %296, %295 : vector<1x1xf32>
      %298 = math.rsqrt %297 : vector<1x1xf32>
      %299 = arith.mulf %294, %298 : vector<1x1xf32>
      %cst_50 = arith.constant 1.000000e+00 : f32
      %300 = vector.broadcast %cst_50 : f32 to vector<1x1xf32>
      %301 = arith.select %276, %298, %300 : vector<1x1xi1>, vector<1x1xf32>
      %cst_51 = arith.constant 0.000000e+00 : f32
      %302 = vector.broadcast %cst_51 : f32 to vector<1x1xf32>
      %303 = arith.select %276, %299, %302 : vector<1x1xi1>, vector<1x1xf32>
      %304 = tpu.iota {dimensions = array<i32: 0>} : vector<8x8xi32>
      %305 = tpu.iota {dimensions = array<i32: 1>} : vector<8x8xi32>
      %306 = vector.extract_strided_slice %270 {offsets = [0, 0], sizes = [1, 8], strides = [1, 1]} : vector<8x8xf32> to vector<1x8xf32>
      %307 = vector.extract_strided_slice %270 {offsets = [3, 0], sizes = [1, 8], strides = [1, 1]} : vector<8x8xf32> to vector<1x8xf32>
      %c0_i32_52 = arith.constant 0 : i32
      %308 = vector.broadcast %c0_i32_52 : i32 to vector<8x8xi32>
      %309 = arith.cmpi eq, %304, %308 : vector<8x8xi32>
      %310 = vector.broadcast %301 : vector<1x1xf32> to vector<1x8xf32>
      %311 = arith.mulf %310, %306 : vector<1x8xf32>
      %312 = vector.broadcast %303 : vector<1x1xf32> to vector<1x8xf32>
      %313 = arith.mulf %312, %307 : vector<1x8xf32>
      %314 = arith.subf %311, %313 : vector<1x8xf32>
      %c3_i32 = arith.constant 3 : i32
      %315 = vector.broadcast %c3_i32 : i32 to vector<8x8xi32>
      %316 = arith.cmpi eq, %304, %315 : vector<8x8xi32>
      %317 = vector.broadcast %303 : vector<1x1xf32> to vector<1x8xf32>
      %318 = arith.mulf %317, %306 : vector<1x8xf32>
      %319 = vector.broadcast %301 : vector<1x1xf32> to vector<1x8xf32>
      %320 = arith.mulf %319, %307 : vector<1x8xf32>
      %321 = arith.addf %318, %320 : vector<1x8xf32>
      %322 = vector.shape_cast %321 : vector<1x8xf32> to vector<1x8xf32>
      %323 = vector.broadcast %322 : vector<1x8xf32> to vector<8x8xf32>
      %324 = arith.select %316, %323, %270 : vector<8x8xi1>, vector<8x8xf32>
      %325 = vector.shape_cast %314 : vector<1x8xf32> to vector<1x8xf32>
      %326 = vector.broadcast %325 : vector<1x8xf32> to vector<8x8xf32>
      %327 = arith.select %309, %326, %324 : vector<8x8xi1>, vector<8x8xf32>
      %328 = vector.extract_strided_slice %327 {offsets = [0, 0], sizes = [8, 1], strides = [1, 1]} : vector<8x8xf32> to vector<8x1xf32>
      %329 = vector.extract_strided_slice %327 {offsets = [0, 3], sizes = [8, 1], strides = [1, 1]} : vector<8x8xf32> to vector<8x1xf32>
      %c0_i32_53 = arith.constant 0 : i32
      %330 = vector.broadcast %c0_i32_53 : i32 to vector<8x8xi32>
      %331 = arith.cmpi eq, %305, %330 : vector<8x8xi32>
      %332 = vector.broadcast %301 : vector<1x1xf32> to vector<8x1xf32>
      %333 = arith.mulf %332, %328 : vector<8x1xf32>
      %334 = vector.broadcast %303 : vector<1x1xf32> to vector<8x1xf32>
      %335 = arith.mulf %334, %329 : vector<8x1xf32>
      %336 = arith.subf %333, %335 : vector<8x1xf32>
      %c3_i32_54 = arith.constant 3 : i32
      %337 = vector.broadcast %c3_i32_54 : i32 to vector<8x8xi32>
      %338 = arith.cmpi eq, %305, %337 : vector<8x8xi32>
      %339 = vector.broadcast %303 : vector<1x1xf32> to vector<8x1xf32>
      %340 = arith.mulf %339, %328 : vector<8x1xf32>
      %341 = vector.broadcast %301 : vector<1x1xf32> to vector<8x1xf32>
      %342 = arith.mulf %341, %329 : vector<8x1xf32>
      %343 = arith.addf %340, %342 : vector<8x1xf32>
      %344 = vector.shape_cast %343 : vector<8x1xf32> to vector<8x1xf32>
      %345 = vector.broadcast %344 : vector<8x1xf32> to vector<8x8xf32>
      %346 = arith.select %338, %345, %327 : vector<8x8xi1>, vector<8x8xf32>
      %347 = vector.shape_cast %336 : vector<8x1xf32> to vector<8x1xf32>
      %348 = vector.broadcast %347 : vector<8x1xf32> to vector<8x8xf32>
      %349 = arith.select %331, %348, %346 : vector<8x8xi1>, vector<8x8xf32>
      %350 = vector.extract_strided_slice %349 {offsets = [0, 0], sizes = [1, 1], strides = [1, 1]} : vector<8x8xf32> to vector<1x1xf32>
      %351 = vector.extract_strided_slice %349 {offsets = [4, 4], sizes = [1, 1], strides = [1, 1]} : vector<8x8xf32> to vector<1x1xf32>
      %352 = vector.extract_strided_slice %349 {offsets = [0, 4], sizes = [1, 1], strides = [1, 1]} : vector<8x8xf32> to vector<1x1xf32>
      %353 = math.absf %352 : vector<1x1xf32>
      %cst_55 = arith.constant 9.99999996E-13 : f32
      %354 = vector.broadcast %cst_55 : f32 to vector<1x1xf32>
      %355 = arith.cmpf ogt, %353, %354 : vector<1x1xf32>
      %cst_56 = arith.constant 1.000000e+00 : f32
      %356 = vector.broadcast %cst_56 : f32 to vector<1x1xf32>
      %357 = arith.select %355, %352, %356 : vector<1x1xi1>, vector<1x1xf32>
      %358 = arith.subf %351, %350 : vector<1x1xf32>
      %cst_57 = arith.constant 2.000000e+00 : f32
      %359 = vector.broadcast %cst_57 : f32 to vector<1x1xf32>
      %360 = arith.mulf %359, %357 : vector<1x1xf32>
      %361 = arith.divf %358, %360 : vector<1x1xf32>
      %cst_58 = arith.constant 0.000000e+00 : f32
      %362 = vector.broadcast %cst_58 : f32 to vector<1x1xf32>
      %363 = arith.cmpf oge, %361, %362 : vector<1x1xf32>
      %cst_59 = arith.constant 1.000000e+00 : f32
      %cst_60 = arith.constant -1.000000e+00 : f32
      %364 = vector.broadcast %cst_59 : f32 to vector<1x1xf32>
      %365 = vector.broadcast %cst_60 : f32 to vector<1x1xf32>
      %366 = arith.select %363, %364, %365 : vector<1x1xi1>, vector<1x1xf32>
      %367 = math.absf %361 : vector<1x1xf32>
      %368 = arith.mulf %361, %361 : vector<1x1xf32>
      %cst_61 = arith.constant 1.000000e+00 : f32
      %369 = vector.broadcast %cst_61 : f32 to vector<1x1xf32>
      %370 = arith.addf %369, %368 : vector<1x1xf32>
      %371 = math.sqrt %370 : vector<1x1xf32>
      %372 = arith.addf %367, %371 : vector<1x1xf32>
      %373 = arith.divf %366, %372 : vector<1x1xf32>
      %374 = arith.mulf %373, %373 : vector<1x1xf32>
      %cst_62 = arith.constant 1.000000e+00 : f32
      %375 = vector.broadcast %cst_62 : f32 to vector<1x1xf32>
      %376 = arith.addf %375, %374 : vector<1x1xf32>
      %377 = math.rsqrt %376 : vector<1x1xf32>
      %378 = arith.mulf %373, %377 : vector<1x1xf32>
      %cst_63 = arith.constant 1.000000e+00 : f32
      %379 = vector.broadcast %cst_63 : f32 to vector<1x1xf32>
      %380 = arith.select %355, %377, %379 : vector<1x1xi1>, vector<1x1xf32>
      %cst_64 = arith.constant 0.000000e+00 : f32
      %381 = vector.broadcast %cst_64 : f32 to vector<1x1xf32>
      %382 = arith.select %355, %378, %381 : vector<1x1xi1>, vector<1x1xf32>
      %383 = tpu.iota {dimensions = array<i32: 0>} : vector<8x8xi32>
      %384 = tpu.iota {dimensions = array<i32: 1>} : vector<8x8xi32>
      %385 = vector.extract_strided_slice %349 {offsets = [0, 0], sizes = [1, 8], strides = [1, 1]} : vector<8x8xf32> to vector<1x8xf32>
      %386 = vector.extract_strided_slice %349 {offsets = [4, 0], sizes = [1, 8], strides = [1, 1]} : vector<8x8xf32> to vector<1x8xf32>
      %c0_i32_65 = arith.constant 0 : i32
      %387 = vector.broadcast %c0_i32_65 : i32 to vector<8x8xi32>
      %388 = arith.cmpi eq, %383, %387 : vector<8x8xi32>
      %389 = vector.broadcast %380 : vector<1x1xf32> to vector<1x8xf32>
      %390 = arith.mulf %389, %385 : vector<1x8xf32>
      %391 = vector.broadcast %382 : vector<1x1xf32> to vector<1x8xf32>
      %392 = arith.mulf %391, %386 : vector<1x8xf32>
      %393 = arith.subf %390, %392 : vector<1x8xf32>
      %c4_i32 = arith.constant 4 : i32
      %394 = vector.broadcast %c4_i32 : i32 to vector<8x8xi32>
      %395 = arith.cmpi eq, %383, %394 : vector<8x8xi32>
      %396 = vector.broadcast %382 : vector<1x1xf32> to vector<1x8xf32>
      %397 = arith.mulf %396, %385 : vector<1x8xf32>
      %398 = vector.broadcast %380 : vector<1x1xf32> to vector<1x8xf32>
      %399 = arith.mulf %398, %386 : vector<1x8xf32>
      %400 = arith.addf %397, %399 : vector<1x8xf32>
      %401 = vector.shape_cast %400 : vector<1x8xf32> to vector<1x8xf32>
      %402 = vector.broadcast %401 : vector<1x8xf32> to vector<8x8xf32>
      %403 = arith.select %395, %402, %349 : vector<8x8xi1>, vector<8x8xf32>
      %404 = vector.shape_cast %393 : vector<1x8xf32> to vector<1x8xf32>
      %405 = vector.broadcast %404 : vector<1x8xf32> to vector<8x8xf32>
      %406 = arith.select %388, %405, %403 : vector<8x8xi1>, vector<8x8xf32>
      %407 = vector.extract_strided_slice %406 {offsets = [0, 0], sizes = [8, 1], strides = [1, 1]} : vector<8x8xf32> to vector<8x1xf32>
      %408 = vector.extract_strided_slice %406 {offsets = [0, 4], sizes = [8, 1], strides = [1, 1]} : vector<8x8xf32> to vector<8x1xf32>
      %c0_i32_66 = arith.constant 0 : i32
      %409 = vector.broadcast %c0_i32_66 : i32 to vector<8x8xi32>
      %410 = arith.cmpi eq, %384, %409 : vector<8x8xi32>
      %411 = vector.broadcast %380 : vector<1x1xf32> to vector<8x1xf32>
      %412 = arith.mulf %411, %407 : vector<8x1xf32>
      %413 = vector.broadcast %382 : vector<1x1xf32> to vector<8x1xf32>
      %414 = arith.mulf %413, %408 : vector<8x1xf32>
      %415 = arith.subf %412, %414 : vector<8x1xf32>
      %c4_i32_67 = arith.constant 4 : i32
      %416 = vector.broadcast %c4_i32_67 : i32 to vector<8x8xi32>
      %417 = arith.cmpi eq, %384, %416 : vector<8x8xi32>
      %418 = vector.broadcast %382 : vector<1x1xf32> to vector<8x1xf32>
      %419 = arith.mulf %418, %407 : vector<8x1xf32>
      %420 = vector.broadcast %380 : vector<1x1xf32> to vector<8x1xf32>
      %421 = arith.mulf %420, %408 : vector<8x1xf32>
      %422 = arith.addf %419, %421 : vector<8x1xf32>
      %423 = vector.shape_cast %422 : vector<8x1xf32> to vector<8x1xf32>
      %424 = vector.broadcast %423 : vector<8x1xf32> to vector<8x8xf32>
      %425 = arith.select %417, %424, %406 : vector<8x8xi1>, vector<8x8xf32>
      %426 = vector.shape_cast %415 : vector<8x1xf32> to vector<8x1xf32>
      %427 = vector.broadcast %426 : vector<8x1xf32> to vector<8x8xf32>
      %428 = arith.select %410, %427, %425 : vector<8x8xi1>, vector<8x8xf32>
      %429 = vector.extract_strided_slice %428 {offsets = [0, 0], sizes = [1, 1], strides = [1, 1]} : vector<8x8xf32> to vector<1x1xf32>
      %430 = vector.extract_strided_slice %428 {offsets = [5, 5], sizes = [1, 1], strides = [1, 1]} : vector<8x8xf32> to vector<1x1xf32>
      %431 = vector.extract_strided_slice %428 {offsets = [0, 5], sizes = [1, 1], strides = [1, 1]} : vector<8x8xf32> to vector<1x1xf32>
      %432 = math.absf %431 : vector<1x1xf32>
      %cst_68 = arith.constant 9.99999996E-13 : f32
      %433 = vector.broadcast %cst_68 : f32 to vector<1x1xf32>
      %434 = arith.cmpf ogt, %432, %433 : vector<1x1xf32>
      %cst_69 = arith.constant 1.000000e+00 : f32
      %435 = vector.broadcast %cst_69 : f32 to vector<1x1xf32>
      %436 = arith.select %434, %431, %435 : vector<1x1xi1>, vector<1x1xf32>
      %437 = arith.subf %430, %429 : vector<1x1xf32>
      %cst_70 = arith.constant 2.000000e+00 : f32
      %438 = vector.broadcast %cst_70 : f32 to vector<1x1xf32>
      %439 = arith.mulf %438, %436 : vector<1x1xf32>
      %440 = arith.divf %437, %439 : vector<1x1xf32>
      %cst_71 = arith.constant 0.000000e+00 : f32
      %441 = vector.broadcast %cst_71 : f32 to vector<1x1xf32>
      %442 = arith.cmpf oge, %440, %441 : vector<1x1xf32>
      %cst_72 = arith.constant 1.000000e+00 : f32
      %cst_73 = arith.constant -1.000000e+00 : f32
      %443 = vector.broadcast %cst_72 : f32 to vector<1x1xf32>
      %444 = vector.broadcast %cst_73 : f32 to vector<1x1xf32>
      %445 = arith.select %442, %443, %444 : vector<1x1xi1>, vector<1x1xf32>
      %446 = math.absf %440 : vector<1x1xf32>
      %447 = arith.mulf %440, %440 : vector<1x1xf32>
      %cst_74 = arith.constant 1.000000e+00 : f32
      %448 = vector.broadcast %cst_74 : f32 to vector<1x1xf32>
      %449 = arith.addf %448, %447 : vector<1x1xf32>
      %450 = math.sqrt %449 : vector<1x1xf32>
      %451 = arith.addf %446, %450 : vector<1x1xf32>
      %452 = arith.divf %445, %451 : vector<1x1xf32>
      %453 = arith.mulf %452, %452 : vector<1x1xf32>
      %cst_75 = arith.constant 1.000000e+00 : f32
      %454 = vector.broadcast %cst_75 : f32 to vector<1x1xf32>
      %455 = arith.addf %454, %453 : vector<1x1xf32>
      %456 = math.rsqrt %455 : vector<1x1xf32>
      %457 = arith.mulf %452, %456 : vector<1x1xf32>
      %cst_76 = arith.constant 1.000000e+00 : f32
      %458 = vector.broadcast %cst_76 : f32 to vector<1x1xf32>
      %459 = arith.select %434, %456, %458 : vector<1x1xi1>, vector<1x1xf32>
      %cst_77 = arith.constant 0.000000e+00 : f32
      %460 = vector.broadcast %cst_77 : f32 to vector<1x1xf32>
      %461 = arith.select %434, %457, %460 : vector<1x1xi1>, vector<1x1xf32>
      %462 = tpu.iota {dimensions = array<i32: 0>} : vector<8x8xi32>
      %463 = tpu.iota {dimensions = array<i32: 1>} : vector<8x8xi32>
      %464 = vector.extract_strided_slice %428 {offsets = [0, 0], sizes = [1, 8], strides = [1, 1]} : vector<8x8xf32> to vector<1x8xf32>
      %465 = vector.extract_strided_slice %428 {offsets = [5, 0], sizes = [1, 8], strides = [1, 1]} : vector<8x8xf32> to vector<1x8xf32>
      %c0_i32_78 = arith.constant 0 : i32
      %466 = vector.broadcast %c0_i32_78 : i32 to vector<8x8xi32>
      %467 = arith.cmpi eq, %462, %466 : vector<8x8xi32>
      %468 = vector.broadcast %459 : vector<1x1xf32> to vector<1x8xf32>
      %469 = arith.mulf %468, %464 : vector<1x8xf32>
      %470 = vector.broadcast %461 : vector<1x1xf32> to vector<1x8xf32>
      %471 = arith.mulf %470, %465 : vector<1x8xf32>
      %472 = arith.subf %469, %471 : vector<1x8xf32>
      %c5_i32 = arith.constant 5 : i32
      %473 = vector.broadcast %c5_i32 : i32 to vector<8x8xi32>
      %474 = arith.cmpi eq, %462, %473 : vector<8x8xi32>
      %475 = vector.broadcast %461 : vector<1x1xf32> to vector<1x8xf32>
      %476 = arith.mulf %475, %464 : vector<1x8xf32>
      %477 = vector.broadcast %459 : vector<1x1xf32> to vector<1x8xf32>
      %478 = arith.mulf %477, %465 : vector<1x8xf32>
      %479 = arith.addf %476, %478 : vector<1x8xf32>
      %480 = vector.shape_cast %479 : vector<1x8xf32> to vector<1x8xf32>
      %481 = vector.broadcast %480 : vector<1x8xf32> to vector<8x8xf32>
      %482 = arith.select %474, %481, %428 : vector<8x8xi1>, vector<8x8xf32>
      %483 = vector.shape_cast %472 : vector<1x8xf32> to vector<1x8xf32>
      %484 = vector.broadcast %483 : vector<1x8xf32> to vector<8x8xf32>
      %485 = arith.select %467, %484, %482 : vector<8x8xi1>, vector<8x8xf32>
      %486 = vector.extract_strided_slice %485 {offsets = [0, 0], sizes = [8, 1], strides = [1, 1]} : vector<8x8xf32> to vector<8x1xf32>
      %487 = vector.extract_strided_slice %485 {offsets = [0, 5], sizes = [8, 1], strides = [1, 1]} : vector<8x8xf32> to vector<8x1xf32>
      %c0_i32_79 = arith.constant 0 : i32
      %488 = vector.broadcast %c0_i32_79 : i32 to vector<8x8xi32>
      %489 = arith.cmpi eq, %463, %488 : vector<8x8xi32>
      %490 = vector.broadcast %459 : vector<1x1xf32> to vector<8x1xf32>
      %491 = arith.mulf %490, %486 : vector<8x1xf32>
      %492 = vector.broadcast %461 : vector<1x1xf32> to vector<8x1xf32>
      %493 = arith.mulf %492, %487 : vector<8x1xf32>
      %494 = arith.subf %491, %493 : vector<8x1xf32>
      %c5_i32_80 = arith.constant 5 : i32
      %495 = vector.broadcast %c5_i32_80 : i32 to vector<8x8xi32>
      %496 = arith.cmpi eq, %463, %495 : vector<8x8xi32>
      %497 = vector.broadcast %461 : vector<1x1xf32> to vector<8x1xf32>
      %498 = arith.mulf %497, %486 : vector<8x1xf32>
      %499 = vector.broadcast %459 : vector<1x1xf32> to vector<8x1xf32>
      %500 = arith.mulf %499, %487 : vector<8x1xf32>
      %501 = arith.addf %498, %500 : vector<8x1xf32>
      %502 = vector.shape_cast %501 : vector<8x1xf32> to vector<8x1xf32>
      %503 = vector.broadcast %502 : vector<8x1xf32> to vector<8x8xf32>
      %504 = arith.select %496, %503, %485 : vector<8x8xi1>, vector<8x8xf32>
      %505 = vector.shape_cast %494 : vector<8x1xf32> to vector<8x1xf32>
      %506 = vector.broadcast %505 : vector<8x1xf32> to vector<8x8xf32>
      %507 = arith.select %489, %506, %504 : vector<8x8xi1>, vector<8x8xf32>
      %508 = vector.extract_strided_slice %507 {offsets = [0, 0], sizes = [1, 1], strides = [1, 1]} : vector<8x8xf32> to vector<1x1xf32>
      %509 = vector.extract_strided_slice %507 {offsets = [6, 6], sizes = [1, 1], strides = [1, 1]} : vector<8x8xf32> to vector<1x1xf32>
      %510 = vector.extract_strided_slice %507 {offsets = [0, 6], sizes = [1, 1], strides = [1, 1]} : vector<8x8xf32> to vector<1x1xf32>
      %511 = math.absf %510 : vector<1x1xf32>
      %cst_81 = arith.constant 9.99999996E-13 : f32
      %512 = vector.broadcast %cst_81 : f32 to vector<1x1xf32>
      %513 = arith.cmpf ogt, %511, %512 : vector<1x1xf32>
      %cst_82 = arith.constant 1.000000e+00 : f32
      %514 = vector.broadcast %cst_82 : f32 to vector<1x1xf32>
      %515 = arith.select %513, %510, %514 : vector<1x1xi1>, vector<1x1xf32>
      %516 = arith.subf %509, %508 : vector<1x1xf32>
      %cst_83 = arith.constant 2.000000e+00 : f32
      %517 = vector.broadcast %cst_83 : f32 to vector<1x1xf32>
      %518 = arith.mulf %517, %515 : vector<1x1xf32>
      %519 = arith.divf %516, %518 : vector<1x1xf32>
      %cst_84 = arith.constant 0.000000e+00 : f32
      %520 = vector.broadcast %cst_84 : f32 to vector<1x1xf32>
      %521 = arith.cmpf oge, %519, %520 : vector<1x1xf32>
      %cst_85 = arith.constant 1.000000e+00 : f32
      %cst_86 = arith.constant -1.000000e+00 : f32
      %522 = vector.broadcast %cst_85 : f32 to vector<1x1xf32>
      %523 = vector.broadcast %cst_86 : f32 to vector<1x1xf32>
      %524 = arith.select %521, %522, %523 : vector<1x1xi1>, vector<1x1xf32>
      %525 = math.absf %519 : vector<1x1xf32>
      %526 = arith.mulf %519, %519 : vector<1x1xf32>
      %cst_87 = arith.constant 1.000000e+00 : f32
      %527 = vector.broadcast %cst_87 : f32 to vector<1x1xf32>
      %528 = arith.addf %527, %526 : vector<1x1xf32>
      %529 = math.sqrt %528 : vector<1x1xf32>
      %530 = arith.addf %525, %529 : vector<1x1xf32>
      %531 = arith.divf %524, %530 : vector<1x1xf32>
      %532 = arith.mulf %531, %531 : vector<1x1xf32>
      %cst_88 = arith.constant 1.000000e+00 : f32
      %533 = vector.broadcast %cst_88 : f32 to vector<1x1xf32>
      %534 = arith.addf %533, %532 : vector<1x1xf32>
      %535 = math.rsqrt %534 : vector<1x1xf32>
      %536 = arith.mulf %531, %535 : vector<1x1xf32>
      %cst_89 = arith.constant 1.000000e+00 : f32
      %537 = vector.broadcast %cst_89 : f32 to vector<1x1xf32>
      %538 = arith.select %513, %535, %537 : vector<1x1xi1>, vector<1x1xf32>
      %cst_90 = arith.constant 0.000000e+00 : f32
      %539 = vector.broadcast %cst_90 : f32 to vector<1x1xf32>
      %540 = arith.select %513, %536, %539 : vector<1x1xi1>, vector<1x1xf32>
      %541 = tpu.iota {dimensions = array<i32: 0>} : vector<8x8xi32>
      %542 = tpu.iota {dimensions = array<i32: 1>} : vector<8x8xi32>
      %543 = vector.extract_strided_slice %507 {offsets = [0, 0], sizes = [1, 8], strides = [1, 1]} : vector<8x8xf32> to vector<1x8xf32>
      %544 = vector.extract_strided_slice %507 {offsets = [6, 0], sizes = [1, 8], strides = [1, 1]} : vector<8x8xf32> to vector<1x8xf32>
      %c0_i32_91 = arith.constant 0 : i32
      %545 = vector.broadcast %c0_i32_91 : i32 to vector<8x8xi32>
      %546 = arith.cmpi eq, %541, %545 : vector<8x8xi32>
      %547 = vector.broadcast %538 : vector<1x1xf32> to vector<1x8xf32>
      %548 = arith.mulf %547, %543 : vector<1x8xf32>
      %549 = vector.broadcast %540 : vector<1x1xf32> to vector<1x8xf32>
      %550 = arith.mulf %549, %544 : vector<1x8xf32>
      %551 = arith.subf %548, %550 : vector<1x8xf32>
      %c6_i32 = arith.constant 6 : i32
      %552 = vector.broadcast %c6_i32 : i32 to vector<8x8xi32>
      %553 = arith.cmpi eq, %541, %552 : vector<8x8xi32>
      %554 = vector.broadcast %540 : vector<1x1xf32> to vector<1x8xf32>
      %555 = arith.mulf %554, %543 : vector<1x8xf32>
      %556 = vector.broadcast %538 : vector<1x1xf32> to vector<1x8xf32>
      %557 = arith.mulf %556, %544 : vector<1x8xf32>
      %558 = arith.addf %555, %557 : vector<1x8xf32>
      %559 = vector.shape_cast %558 : vector<1x8xf32> to vector<1x8xf32>
      %560 = vector.broadcast %559 : vector<1x8xf32> to vector<8x8xf32>
      %561 = arith.select %553, %560, %507 : vector<8x8xi1>, vector<8x8xf32>
      %562 = vector.shape_cast %551 : vector<1x8xf32> to vector<1x8xf32>
      %563 = vector.broadcast %562 : vector<1x8xf32> to vector<8x8xf32>
      %564 = arith.select %546, %563, %561 : vector<8x8xi1>, vector<8x8xf32>
      %565 = vector.extract_strided_slice %564 {offsets = [0, 0], sizes = [8, 1], strides = [1, 1]} : vector<8x8xf32> to vector<8x1xf32>
      %566 = vector.extract_strided_slice %564 {offsets = [0, 6], sizes = [8, 1], strides = [1, 1]} : vector<8x8xf32> to vector<8x1xf32>
      %c0_i32_92 = arith.constant 0 : i32
      %567 = vector.broadcast %c0_i32_92 : i32 to vector<8x8xi32>
      %568 = arith.cmpi eq, %542, %567 : vector<8x8xi32>
      %569 = vector.broadcast %538 : vector<1x1xf32> to vector<8x1xf32>
      %570 = arith.mulf %569, %565 : vector<8x1xf32>
      %571 = vector.broadcast %540 : vector<1x1xf32> to vector<8x1xf32>
      %572 = arith.mulf %571, %566 : vector<8x1xf32>
      %573 = arith.subf %570, %572 : vector<8x1xf32>
      %c6_i32_93 = arith.constant 6 : i32
      %574 = vector.broadcast %c6_i32_93 : i32 to vector<8x8xi32>
      %575 = arith.cmpi eq, %542, %574 : vector<8x8xi32>
      %576 = vector.broadcast %540 : vector<1x1xf32> to vector<8x1xf32>
      %577 = arith.mulf %576, %565 : vector<8x1xf32>
      %578 = vector.broadcast %538 : vector<1x1xf32> to vector<8x1xf32>
      %579 = arith.mulf %578, %566 : vector<8x1xf32>
      %580 = arith.addf %577, %579 : vector<8x1xf32>
      %581 = vector.shape_cast %580 : vector<8x1xf32> to vector<8x1xf32>
      %582 = vector.broadcast %581 : vector<8x1xf32> to vector<8x8xf32>
      %583 = arith.select %575, %582, %564 : vector<8x8xi1>, vector<8x8xf32>
      %584 = vector.shape_cast %573 : vector<8x1xf32> to vector<8x1xf32>
      %585 = vector.broadcast %584 : vector<8x1xf32> to vector<8x8xf32>
      %586 = arith.select %568, %585, %583 : vector<8x8xi1>, vector<8x8xf32>
      %587 = vector.extract_strided_slice %586 {offsets = [0, 0], sizes = [1, 1], strides = [1, 1]} : vector<8x8xf32> to vector<1x1xf32>
      %588 = vector.extract_strided_slice %586 {offsets = [7, 7], sizes = [1, 1], strides = [1, 1]} : vector<8x8xf32> to vector<1x1xf32>
      %589 = vector.extract_strided_slice %586 {offsets = [0, 7], sizes = [1, 1], strides = [1, 1]} : vector<8x8xf32> to vector<1x1xf32>
      %590 = math.absf %589 : vector<1x1xf32>
      %cst_94 = arith.constant 9.99999996E-13 : f32
      %591 = vector.broadcast %cst_94 : f32 to vector<1x1xf32>
      %592 = arith.cmpf ogt, %590, %591 : vector<1x1xf32>
      %cst_95 = arith.constant 1.000000e+00 : f32
      %593 = vector.broadcast %cst_95 : f32 to vector<1x1xf32>
      %594 = arith.select %592, %589, %593 : vector<1x1xi1>, vector<1x1xf32>
      %595 = arith.subf %588, %587 : vector<1x1xf32>
      %cst_96 = arith.constant 2.000000e+00 : f32
      %596 = vector.broadcast %cst_96 : f32 to vector<1x1xf32>
      %597 = arith.mulf %596, %594 : vector<1x1xf32>
      %598 = arith.divf %595, %597 : vector<1x1xf32>
      %cst_97 = arith.constant 0.000000e+00 : f32
      %599 = vector.broadcast %cst_97 : f32 to vector<1x1xf32>
      %600 = arith.cmpf oge, %598, %599 : vector<1x1xf32>
      %cst_98 = arith.constant 1.000000e+00 : f32
      %cst_99 = arith.constant -1.000000e+00 : f32
      %601 = vector.broadcast %cst_98 : f32 to vector<1x1xf32>
      %602 = vector.broadcast %cst_99 : f32 to vector<1x1xf32>
      %603 = arith.select %600, %601, %602 : vector<1x1xi1>, vector<1x1xf32>
      %604 = math.absf %598 : vector<1x1xf32>
      %605 = arith.mulf %598, %598 : vector<1x1xf32>
      %cst_100 = arith.constant 1.000000e+00 : f32
      %606 = vector.broadcast %cst_100 : f32 to vector<1x1xf32>
      %607 = arith.addf %606, %605 : vector<1x1xf32>
      %608 = math.sqrt %607 : vector<1x1xf32>
      %609 = arith.addf %604, %608 : vector<1x1xf32>
      %610 = arith.divf %603, %609 : vector<1x1xf32>
      %611 = arith.mulf %610, %610 : vector<1x1xf32>
      %cst_101 = arith.constant 1.000000e+00 : f32
      %612 = vector.broadcast %cst_101 : f32 to vector<1x1xf32>
      %613 = arith.addf %612, %611 : vector<1x1xf32>
      %614 = math.rsqrt %613 : vector<1x1xf32>
      %615 = arith.mulf %610, %614 : vector<1x1xf32>
      %cst_102 = arith.constant 1.000000e+00 : f32
      %616 = vector.broadcast %cst_102 : f32 to vector<1x1xf32>
      %617 = arith.select %592, %614, %616 : vector<1x1xi1>, vector<1x1xf32>
      %cst_103 = arith.constant 0.000000e+00 : f32
      %618 = vector.broadcast %cst_103 : f32 to vector<1x1xf32>
      %619 = arith.select %592, %615, %618 : vector<1x1xi1>, vector<1x1xf32>
      %620 = tpu.iota {dimensions = array<i32: 0>} : vector<8x8xi32>
      %621 = tpu.iota {dimensions = array<i32: 1>} : vector<8x8xi32>
      %622 = vector.extract_strided_slice %586 {offsets = [0, 0], sizes = [1, 8], strides = [1, 1]} : vector<8x8xf32> to vector<1x8xf32>
      %623 = vector.extract_strided_slice %586 {offsets = [7, 0], sizes = [1, 8], strides = [1, 1]} : vector<8x8xf32> to vector<1x8xf32>
      %c0_i32_104 = arith.constant 0 : i32
      %624 = vector.broadcast %c0_i32_104 : i32 to vector<8x8xi32>
      %625 = arith.cmpi eq, %620, %624 : vector<8x8xi32>
      %626 = vector.broadcast %617 : vector<1x1xf32> to vector<1x8xf32>
      %627 = arith.mulf %626, %622 : vector<1x8xf32>
      %628 = vector.broadcast %619 : vector<1x1xf32> to vector<1x8xf32>
      %629 = arith.mulf %628, %623 : vector<1x8xf32>
      %630 = arith.subf %627, %629 : vector<1x8xf32>
      %c7_i32 = arith.constant 7 : i32
      %631 = vector.broadcast %c7_i32 : i32 to vector<8x8xi32>
      %632 = arith.cmpi eq, %620, %631 : vector<8x8xi32>
      %633 = vector.broadcast %619 : vector<1x1xf32> to vector<1x8xf32>
      %634 = arith.mulf %633, %622 : vector<1x8xf32>
      %635 = vector.broadcast %617 : vector<1x1xf32> to vector<1x8xf32>
      %636 = arith.mulf %635, %623 : vector<1x8xf32>
      %637 = arith.addf %634, %636 : vector<1x8xf32>
      %638 = vector.shape_cast %637 : vector<1x8xf32> to vector<1x8xf32>
      %639 = vector.broadcast %638 : vector<1x8xf32> to vector<8x8xf32>
      %640 = arith.select %632, %639, %586 : vector<8x8xi1>, vector<8x8xf32>
      %641 = vector.shape_cast %630 : vector<1x8xf32> to vector<1x8xf32>
      %642 = vector.broadcast %641 : vector<1x8xf32> to vector<8x8xf32>
      %643 = arith.select %625, %642, %640 : vector<8x8xi1>, vector<8x8xf32>
      %644 = vector.extract_strided_slice %643 {offsets = [0, 0], sizes = [8, 1], strides = [1, 1]} : vector<8x8xf32> to vector<8x1xf32>
      %645 = vector.extract_strided_slice %643 {offsets = [0, 7], sizes = [8, 1], strides = [1, 1]} : vector<8x8xf32> to vector<8x1xf32>
      %c0_i32_105 = arith.constant 0 : i32
      %646 = vector.broadcast %c0_i32_105 : i32 to vector<8x8xi32>
      %647 = arith.cmpi eq, %621, %646 : vector<8x8xi32>
      %648 = vector.broadcast %617 : vector<1x1xf32> to vector<8x1xf32>
      %649 = arith.mulf %648, %644 : vector<8x1xf32>
      %650 = vector.broadcast %619 : vector<1x1xf32> to vector<8x1xf32>
      %651 = arith.mulf %650, %645 : vector<8x1xf32>
      %652 = arith.subf %649, %651 : vector<8x1xf32>
      %c7_i32_106 = arith.constant 7 : i32
      %653 = vector.broadcast %c7_i32_106 : i32 to vector<8x8xi32>
      %654 = arith.cmpi eq, %621, %653 : vector<8x8xi32>
      %655 = vector.broadcast %619 : vector<1x1xf32> to vector<8x1xf32>
      %656 = arith.mulf %655, %644 : vector<8x1xf32>
      %657 = vector.broadcast %617 : vector<1x1xf32> to vector<8x1xf32>
      %658 = arith.mulf %657, %645 : vector<8x1xf32>
      %659 = arith.addf %656, %658 : vector<8x1xf32>
      %660 = vector.shape_cast %659 : vector<8x1xf32> to vector<8x1xf32>
      %661 = vector.broadcast %660 : vector<8x1xf32> to vector<8x8xf32>
      %662 = arith.select %654, %661, %643 : vector<8x8xi1>, vector<8x8xf32>
      %663 = vector.shape_cast %652 : vector<8x1xf32> to vector<8x1xf32>
      %664 = vector.broadcast %663 : vector<8x1xf32> to vector<8x8xf32>
      %665 = arith.select %647, %664, %662 : vector<8x8xi1>, vector<8x8xf32>
      %666 = vector.extract_strided_slice %665 {offsets = [1, 1], sizes = [1, 1], strides = [1, 1]} : vector<8x8xf32> to vector<1x1xf32>
      %667 = vector.extract_strided_slice %665 {offsets = [2, 2], sizes = [1, 1], strides = [1, 1]} : vector<8x8xf32> to vector<1x1xf32>
      %668 = vector.extract_strided_slice %665 {offsets = [1, 2], sizes = [1, 1], strides = [1, 1]} : vector<8x8xf32> to vector<1x1xf32>
      %669 = math.absf %668 : vector<1x1xf32>
      %cst_107 = arith.constant 9.99999996E-13 : f32
      %670 = vector.broadcast %cst_107 : f32 to vector<1x1xf32>
      %671 = arith.cmpf ogt, %669, %670 : vector<1x1xf32>
      %cst_108 = arith.constant 1.000000e+00 : f32
      %672 = vector.broadcast %cst_108 : f32 to vector<1x1xf32>
      %673 = arith.select %671, %668, %672 : vector<1x1xi1>, vector<1x1xf32>
      %674 = arith.subf %667, %666 : vector<1x1xf32>
      %cst_109 = arith.constant 2.000000e+00 : f32
      %675 = vector.broadcast %cst_109 : f32 to vector<1x1xf32>
      %676 = arith.mulf %675, %673 : vector<1x1xf32>
      %677 = arith.divf %674, %676 : vector<1x1xf32>
      %cst_110 = arith.constant 0.000000e+00 : f32
      %678 = vector.broadcast %cst_110 : f32 to vector<1x1xf32>
      %679 = arith.cmpf oge, %677, %678 : vector<1x1xf32>
      %cst_111 = arith.constant 1.000000e+00 : f32
      %cst_112 = arith.constant -1.000000e+00 : f32
      %680 = vector.broadcast %cst_111 : f32 to vector<1x1xf32>
      %681 = vector.broadcast %cst_112 : f32 to vector<1x1xf32>
      %682 = arith.select %679, %680, %681 : vector<1x1xi1>, vector<1x1xf32>
      %683 = math.absf %677 : vector<1x1xf32>
      %684 = arith.mulf %677, %677 : vector<1x1xf32>
      %cst_113 = arith.constant 1.000000e+00 : f32
      %685 = vector.broadcast %cst_113 : f32 to vector<1x1xf32>
      %686 = arith.addf %685, %684 : vector<1x1xf32>
      %687 = math.sqrt %686 : vector<1x1xf32>
      %688 = arith.addf %683, %687 : vector<1x1xf32>
      %689 = arith.divf %682, %688 : vector<1x1xf32>
      %690 = arith.mulf %689, %689 : vector<1x1xf32>
      %cst_114 = arith.constant 1.000000e+00 : f32
      %691 = vector.broadcast %cst_114 : f32 to vector<1x1xf32>
      %692 = arith.addf %691, %690 : vector<1x1xf32>
      %693 = math.rsqrt %692 : vector<1x1xf32>
      %694 = arith.mulf %689, %693 : vector<1x1xf32>
      %cst_115 = arith.constant 1.000000e+00 : f32
      %695 = vector.broadcast %cst_115 : f32 to vector<1x1xf32>
      %696 = arith.select %671, %693, %695 : vector<1x1xi1>, vector<1x1xf32>
      %cst_116 = arith.constant 0.000000e+00 : f32
      %697 = vector.broadcast %cst_116 : f32 to vector<1x1xf32>
      %698 = arith.select %671, %694, %697 : vector<1x1xi1>, vector<1x1xf32>
      %699 = tpu.iota {dimensions = array<i32: 0>} : vector<8x8xi32>
      %700 = tpu.iota {dimensions = array<i32: 1>} : vector<8x8xi32>
      %701 = vector.extract_strided_slice %665 {offsets = [1, 0], sizes = [1, 8], strides = [1, 1]} : vector<8x8xf32> to vector<1x8xf32>
      %702 = vector.extract_strided_slice %665 {offsets = [2, 0], sizes = [1, 8], strides = [1, 1]} : vector<8x8xf32> to vector<1x8xf32>
      %c1_i32_117 = arith.constant 1 : i32
      %703 = vector.broadcast %c1_i32_117 : i32 to vector<8x8xi32>
      %704 = arith.cmpi eq, %699, %703 : vector<8x8xi32>
      %705 = vector.broadcast %696 : vector<1x1xf32> to vector<1x8xf32>
      %706 = arith.mulf %705, %701 : vector<1x8xf32>
      %707 = vector.broadcast %698 : vector<1x1xf32> to vector<1x8xf32>
      %708 = arith.mulf %707, %702 : vector<1x8xf32>
      %709 = arith.subf %706, %708 : vector<1x8xf32>
      %c2_i32_118 = arith.constant 2 : i32
      %710 = vector.broadcast %c2_i32_118 : i32 to vector<8x8xi32>
      %711 = arith.cmpi eq, %699, %710 : vector<8x8xi32>
      %712 = vector.broadcast %698 : vector<1x1xf32> to vector<1x8xf32>
      %713 = arith.mulf %712, %701 : vector<1x8xf32>
      %714 = vector.broadcast %696 : vector<1x1xf32> to vector<1x8xf32>
      %715 = arith.mulf %714, %702 : vector<1x8xf32>
      %716 = arith.addf %713, %715 : vector<1x8xf32>
      %717 = vector.shape_cast %716 : vector<1x8xf32> to vector<1x8xf32>
      %718 = vector.broadcast %717 : vector<1x8xf32> to vector<8x8xf32>
      %719 = arith.select %711, %718, %665 : vector<8x8xi1>, vector<8x8xf32>
      %720 = vector.shape_cast %709 : vector<1x8xf32> to vector<1x8xf32>
      %721 = vector.broadcast %720 : vector<1x8xf32> to vector<8x8xf32>
      %722 = arith.select %704, %721, %719 : vector<8x8xi1>, vector<8x8xf32>
      %723 = vector.extract_strided_slice %722 {offsets = [0, 1], sizes = [8, 1], strides = [1, 1]} : vector<8x8xf32> to vector<8x1xf32>
      %724 = vector.extract_strided_slice %722 {offsets = [0, 2], sizes = [8, 1], strides = [1, 1]} : vector<8x8xf32> to vector<8x1xf32>
      %c1_i32_119 = arith.constant 1 : i32
      %725 = vector.broadcast %c1_i32_119 : i32 to vector<8x8xi32>
      %726 = arith.cmpi eq, %700, %725 : vector<8x8xi32>
      %727 = vector.broadcast %696 : vector<1x1xf32> to vector<8x1xf32>
      %728 = arith.mulf %727, %723 : vector<8x1xf32>
      %729 = vector.broadcast %698 : vector<1x1xf32> to vector<8x1xf32>
      %730 = arith.mulf %729, %724 : vector<8x1xf32>
      %731 = arith.subf %728, %730 : vector<8x1xf32>
      %c2_i32_120 = arith.constant 2 : i32
      %732 = vector.broadcast %c2_i32_120 : i32 to vector<8x8xi32>
      %733 = arith.cmpi eq, %700, %732 : vector<8x8xi32>
      %734 = vector.broadcast %698 : vector<1x1xf32> to vector<8x1xf32>
      %735 = arith.mulf %734, %723 : vector<8x1xf32>
      %736 = vector.broadcast %696 : vector<1x1xf32> to vector<8x1xf32>
      %737 = arith.mulf %736, %724 : vector<8x1xf32>
      %738 = arith.addf %735, %737 : vector<8x1xf32>
      %739 = vector.shape_cast %738 : vector<8x1xf32> to vector<8x1xf32>
      %740 = vector.broadcast %739 : vector<8x1xf32> to vector<8x8xf32>
      %741 = arith.select %733, %740, %722 : vector<8x8xi1>, vector<8x8xf32>
      %742 = vector.shape_cast %731 : vector<8x1xf32> to vector<8x1xf32>
      %743 = vector.broadcast %742 : vector<8x1xf32> to vector<8x8xf32>
      %744 = arith.select %726, %743, %741 : vector<8x8xi1>, vector<8x8xf32>
      %745 = vector.extract_strided_slice %744 {offsets = [1, 1], sizes = [1, 1], strides = [1, 1]} : vector<8x8xf32> to vector<1x1xf32>
      %746 = vector.extract_strided_slice %744 {offsets = [3, 3], sizes = [1, 1], strides = [1, 1]} : vector<8x8xf32> to vector<1x1xf32>
      %747 = vector.extract_strided_slice %744 {offsets = [1, 3], sizes = [1, 1], strides = [1, 1]} : vector<8x8xf32> to vector<1x1xf32>
      %748 = math.absf %747 : vector<1x1xf32>
      %cst_121 = arith.constant 9.99999996E-13 : f32
      %749 = vector.broadcast %cst_121 : f32 to vector<1x1xf32>
      %750 = arith.cmpf ogt, %748, %749 : vector<1x1xf32>
      %cst_122 = arith.constant 1.000000e+00 : f32
      %751 = vector.broadcast %cst_122 : f32 to vector<1x1xf32>
      %752 = arith.select %750, %747, %751 : vector<1x1xi1>, vector<1x1xf32>
      %753 = arith.subf %746, %745 : vector<1x1xf32>
      %cst_123 = arith.constant 2.000000e+00 : f32
      %754 = vector.broadcast %cst_123 : f32 to vector<1x1xf32>
      %755 = arith.mulf %754, %752 : vector<1x1xf32>
      %756 = arith.divf %753, %755 : vector<1x1xf32>
      %cst_124 = arith.constant 0.000000e+00 : f32
      %757 = vector.broadcast %cst_124 : f32 to vector<1x1xf32>
      %758 = arith.cmpf oge, %756, %757 : vector<1x1xf32>
      %cst_125 = arith.constant 1.000000e+00 : f32
      %cst_126 = arith.constant -1.000000e+00 : f32
      %759 = vector.broadcast %cst_125 : f32 to vector<1x1xf32>
      %760 = vector.broadcast %cst_126 : f32 to vector<1x1xf32>
      %761 = arith.select %758, %759, %760 : vector<1x1xi1>, vector<1x1xf32>
      %762 = math.absf %756 : vector<1x1xf32>
      %763 = arith.mulf %756, %756 : vector<1x1xf32>
      %cst_127 = arith.constant 1.000000e+00 : f32
      %764 = vector.broadcast %cst_127 : f32 to vector<1x1xf32>
      %765 = arith.addf %764, %763 : vector<1x1xf32>
      %766 = math.sqrt %765 : vector<1x1xf32>
      %767 = arith.addf %762, %766 : vector<1x1xf32>
      %768 = arith.divf %761, %767 : vector<1x1xf32>
      %769 = arith.mulf %768, %768 : vector<1x1xf32>
      %cst_128 = arith.constant 1.000000e+00 : f32
      %770 = vector.broadcast %cst_128 : f32 to vector<1x1xf32>
      %771 = arith.addf %770, %769 : vector<1x1xf32>
      %772 = math.rsqrt %771 : vector<1x1xf32>
      %773 = arith.mulf %768, %772 : vector<1x1xf32>
      %cst_129 = arith.constant 1.000000e+00 : f32
      %774 = vector.broadcast %cst_129 : f32 to vector<1x1xf32>
      %775 = arith.select %750, %772, %774 : vector<1x1xi1>, vector<1x1xf32>
      %cst_130 = arith.constant 0.000000e+00 : f32
      %776 = vector.broadcast %cst_130 : f32 to vector<1x1xf32>
      %777 = arith.select %750, %773, %776 : vector<1x1xi1>, vector<1x1xf32>
      %778 = tpu.iota {dimensions = array<i32: 0>} : vector<8x8xi32>
      %779 = tpu.iota {dimensions = array<i32: 1>} : vector<8x8xi32>
      %780 = vector.extract_strided_slice %744 {offsets = [1, 0], sizes = [1, 8], strides = [1, 1]} : vector<8x8xf32> to vector<1x8xf32>
      %781 = vector.extract_strided_slice %744 {offsets = [3, 0], sizes = [1, 8], strides = [1, 1]} : vector<8x8xf32> to vector<1x8xf32>
      %c1_i32_131 = arith.constant 1 : i32
      %782 = vector.broadcast %c1_i32_131 : i32 to vector<8x8xi32>
      %783 = arith.cmpi eq, %778, %782 : vector<8x8xi32>
      %784 = vector.broadcast %775 : vector<1x1xf32> to vector<1x8xf32>
      %785 = arith.mulf %784, %780 : vector<1x8xf32>
      %786 = vector.broadcast %777 : vector<1x1xf32> to vector<1x8xf32>
      %787 = arith.mulf %786, %781 : vector<1x8xf32>
      %788 = arith.subf %785, %787 : vector<1x8xf32>
      %c3_i32_132 = arith.constant 3 : i32
      %789 = vector.broadcast %c3_i32_132 : i32 to vector<8x8xi32>
      %790 = arith.cmpi eq, %778, %789 : vector<8x8xi32>
      %791 = vector.broadcast %777 : vector<1x1xf32> to vector<1x8xf32>
      %792 = arith.mulf %791, %780 : vector<1x8xf32>
      %793 = vector.broadcast %775 : vector<1x1xf32> to vector<1x8xf32>
      %794 = arith.mulf %793, %781 : vector<1x8xf32>
      %795 = arith.addf %792, %794 : vector<1x8xf32>
      %796 = vector.shape_cast %795 : vector<1x8xf32> to vector<1x8xf32>
      %797 = vector.broadcast %796 : vector<1x8xf32> to vector<8x8xf32>
      %798 = arith.select %790, %797, %744 : vector<8x8xi1>, vector<8x8xf32>
      %799 = vector.shape_cast %788 : vector<1x8xf32> to vector<1x8xf32>
      %800 = vector.broadcast %799 : vector<1x8xf32> to vector<8x8xf32>
      %801 = arith.select %783, %800, %798 : vector<8x8xi1>, vector<8x8xf32>
      %802 = vector.extract_strided_slice %801 {offsets = [0, 1], sizes = [8, 1], strides = [1, 1]} : vector<8x8xf32> to vector<8x1xf32>
      %803 = vector.extract_strided_slice %801 {offsets = [0, 3], sizes = [8, 1], strides = [1, 1]} : vector<8x8xf32> to vector<8x1xf32>
      %c1_i32_133 = arith.constant 1 : i32
      %804 = vector.broadcast %c1_i32_133 : i32 to vector<8x8xi32>
      %805 = arith.cmpi eq, %779, %804 : vector<8x8xi32>
      %806 = vector.broadcast %775 : vector<1x1xf32> to vector<8x1xf32>
      %807 = arith.mulf %806, %802 : vector<8x1xf32>
      %808 = vector.broadcast %777 : vector<1x1xf32> to vector<8x1xf32>
      %809 = arith.mulf %808, %803 : vector<8x1xf32>
      %810 = arith.subf %807, %809 : vector<8x1xf32>
      %c3_i32_134 = arith.constant 3 : i32
      %811 = vector.broadcast %c3_i32_134 : i32 to vector<8x8xi32>
      %812 = arith.cmpi eq, %779, %811 : vector<8x8xi32>
      %813 = vector.broadcast %777 : vector<1x1xf32> to vector<8x1xf32>
      %814 = arith.mulf %813, %802 : vector<8x1xf32>
      %815 = vector.broadcast %775 : vector<1x1xf32> to vector<8x1xf32>
      %816 = arith.mulf %815, %803 : vector<8x1xf32>
      %817 = arith.addf %814, %816 : vector<8x1xf32>
      %818 = vector.shape_cast %817 : vector<8x1xf32> to vector<8x1xf32>
      %819 = vector.broadcast %818 : vector<8x1xf32> to vector<8x8xf32>
      %820 = arith.select %812, %819, %801 : vector<8x8xi1>, vector<8x8xf32>
      %821 = vector.shape_cast %810 : vector<8x1xf32> to vector<8x1xf32>
      %822 = vector.broadcast %821 : vector<8x1xf32> to vector<8x8xf32>
      %823 = arith.select %805, %822, %820 : vector<8x8xi1>, vector<8x8xf32>
      %824 = vector.extract_strided_slice %823 {offsets = [1, 1], sizes = [1, 1], strides = [1, 1]} : vector<8x8xf32> to vector<1x1xf32>
      %825 = vector.extract_strided_slice %823 {offsets = [4, 4], sizes = [1, 1], strides = [1, 1]} : vector<8x8xf32> to vector<1x1xf32>
      %826 = vector.extract_strided_slice %823 {offsets = [1, 4], sizes = [1, 1], strides = [1, 1]} : vector<8x8xf32> to vector<1x1xf32>
      %827 = math.absf %826 : vector<1x1xf32>
      %cst_135 = arith.constant 9.99999996E-13 : f32
      %828 = vector.broadcast %cst_135 : f32 to vector<1x1xf32>
      %829 = arith.cmpf ogt, %827, %828 : vector<1x1xf32>
      %cst_136 = arith.constant 1.000000e+00 : f32
      %830 = vector.broadcast %cst_136 : f32 to vector<1x1xf32>
      %831 = arith.select %829, %826, %830 : vector<1x1xi1>, vector<1x1xf32>
      %832 = arith.subf %825, %824 : vector<1x1xf32>
      %cst_137 = arith.constant 2.000000e+00 : f32
      %833 = vector.broadcast %cst_137 : f32 to vector<1x1xf32>
      %834 = arith.mulf %833, %831 : vector<1x1xf32>
      %835 = arith.divf %832, %834 : vector<1x1xf32>
      %cst_138 = arith.constant 0.000000e+00 : f32
      %836 = vector.broadcast %cst_138 : f32 to vector<1x1xf32>
      %837 = arith.cmpf oge, %835, %836 : vector<1x1xf32>
      %cst_139 = arith.constant 1.000000e+00 : f32
      %cst_140 = arith.constant -1.000000e+00 : f32
      %838 = vector.broadcast %cst_139 : f32 to vector<1x1xf32>
      %839 = vector.broadcast %cst_140 : f32 to vector<1x1xf32>
      %840 = arith.select %837, %838, %839 : vector<1x1xi1>, vector<1x1xf32>
      %841 = math.absf %835 : vector<1x1xf32>
      %842 = arith.mulf %835, %835 : vector<1x1xf32>
      %cst_141 = arith.constant 1.000000e+00 : f32
      %843 = vector.broadcast %cst_141 : f32 to vector<1x1xf32>
      %844 = arith.addf %843, %842 : vector<1x1xf32>
      %845 = math.sqrt %844 : vector<1x1xf32>
      %846 = arith.addf %841, %845 : vector<1x1xf32>
      %847 = arith.divf %840, %846 : vector<1x1xf32>
      %848 = arith.mulf %847, %847 : vector<1x1xf32>
      %cst_142 = arith.constant 1.000000e+00 : f32
      %849 = vector.broadcast %cst_142 : f32 to vector<1x1xf32>
      %850 = arith.addf %849, %848 : vector<1x1xf32>
      %851 = math.rsqrt %850 : vector<1x1xf32>
      %852 = arith.mulf %847, %851 : vector<1x1xf32>
      %cst_143 = arith.constant 1.000000e+00 : f32
      %853 = vector.broadcast %cst_143 : f32 to vector<1x1xf32>
      %854 = arith.select %829, %851, %853 : vector<1x1xi1>, vector<1x1xf32>
      %cst_144 = arith.constant 0.000000e+00 : f32
      %855 = vector.broadcast %cst_144 : f32 to vector<1x1xf32>
      %856 = arith.select %829, %852, %855 : vector<1x1xi1>, vector<1x1xf32>
      %857 = tpu.iota {dimensions = array<i32: 0>} : vector<8x8xi32>
      %858 = tpu.iota {dimensions = array<i32: 1>} : vector<8x8xi32>
      %859 = vector.extract_strided_slice %823 {offsets = [1, 0], sizes = [1, 8], strides = [1, 1]} : vector<8x8xf32> to vector<1x8xf32>
      %860 = vector.extract_strided_slice %823 {offsets = [4, 0], sizes = [1, 8], strides = [1, 1]} : vector<8x8xf32> to vector<1x8xf32>
      %c1_i32_145 = arith.constant 1 : i32
      %861 = vector.broadcast %c1_i32_145 : i32 to vector<8x8xi32>
      %862 = arith.cmpi eq, %857, %861 : vector<8x8xi32>
      %863 = vector.broadcast %854 : vector<1x1xf32> to vector<1x8xf32>
      %864 = arith.mulf %863, %859 : vector<1x8xf32>
      %865 = vector.broadcast %856 : vector<1x1xf32> to vector<1x8xf32>
      %866 = arith.mulf %865, %860 : vector<1x8xf32>
      %867 = arith.subf %864, %866 : vector<1x8xf32>
      %c4_i32_146 = arith.constant 4 : i32
      %868 = vector.broadcast %c4_i32_146 : i32 to vector<8x8xi32>
      %869 = arith.cmpi eq, %857, %868 : vector<8x8xi32>
      %870 = vector.broadcast %856 : vector<1x1xf32> to vector<1x8xf32>
      %871 = arith.mulf %870, %859 : vector<1x8xf32>
      %872 = vector.broadcast %854 : vector<1x1xf32> to vector<1x8xf32>
      %873 = arith.mulf %872, %860 : vector<1x8xf32>
      %874 = arith.addf %871, %873 : vector<1x8xf32>
      %875 = vector.shape_cast %874 : vector<1x8xf32> to vector<1x8xf32>
      %876 = vector.broadcast %875 : vector<1x8xf32> to vector<8x8xf32>
      %877 = arith.select %869, %876, %823 : vector<8x8xi1>, vector<8x8xf32>
      %878 = vector.shape_cast %867 : vector<1x8xf32> to vector<1x8xf32>
      %879 = vector.broadcast %878 : vector<1x8xf32> to vector<8x8xf32>
      %880 = arith.select %862, %879, %877 : vector<8x8xi1>, vector<8x8xf32>
      %881 = vector.extract_strided_slice %880 {offsets = [0, 1], sizes = [8, 1], strides = [1, 1]} : vector<8x8xf32> to vector<8x1xf32>
      %882 = vector.extract_strided_slice %880 {offsets = [0, 4], sizes = [8, 1], strides = [1, 1]} : vector<8x8xf32> to vector<8x1xf32>
      %c1_i32_147 = arith.constant 1 : i32
      %883 = vector.broadcast %c1_i32_147 : i32 to vector<8x8xi32>
      %884 = arith.cmpi eq, %858, %883 : vector<8x8xi32>
      %885 = vector.broadcast %854 : vector<1x1xf32> to vector<8x1xf32>
      %886 = arith.mulf %885, %881 : vector<8x1xf32>
      %887 = vector.broadcast %856 : vector<1x1xf32> to vector<8x1xf32>
      %888 = arith.mulf %887, %882 : vector<8x1xf32>
      %889 = arith.subf %886, %888 : vector<8x1xf32>
      %c4_i32_148 = arith.constant 4 : i32
      %890 = vector.broadcast %c4_i32_148 : i32 to vector<8x8xi32>
      %891 = arith.cmpi eq, %858, %890 : vector<8x8xi32>
      %892 = vector.broadcast %856 : vector<1x1xf32> to vector<8x1xf32>
      %893 = arith.mulf %892, %881 : vector<8x1xf32>
      %894 = vector.broadcast %854 : vector<1x1xf32> to vector<8x1xf32>
      %895 = arith.mulf %894, %882 : vector<8x1xf32>
      %896 = arith.addf %893, %895 : vector<8x1xf32>
      %897 = vector.shape_cast %896 : vector<8x1xf32> to vector<8x1xf32>
      %898 = vector.broadcast %897 : vector<8x1xf32> to vector<8x8xf32>
      %899 = arith.select %891, %898, %880 : vector<8x8xi1>, vector<8x8xf32>
      %900 = vector.shape_cast %889 : vector<8x1xf32> to vector<8x1xf32>
      %901 = vector.broadcast %900 : vector<8x1xf32> to vector<8x8xf32>
      %902 = arith.select %884, %901, %899 : vector<8x8xi1>, vector<8x8xf32>
      %903 = vector.extract_strided_slice %902 {offsets = [1, 1], sizes = [1, 1], strides = [1, 1]} : vector<8x8xf32> to vector<1x1xf32>
      %904 = vector.extract_strided_slice %902 {offsets = [5, 5], sizes = [1, 1], strides = [1, 1]} : vector<8x8xf32> to vector<1x1xf32>
      %905 = vector.extract_strided_slice %902 {offsets = [1, 5], sizes = [1, 1], strides = [1, 1]} : vector<8x8xf32> to vector<1x1xf32>
      %906 = math.absf %905 : vector<1x1xf32>
      %cst_149 = arith.constant 9.99999996E-13 : f32
      %907 = vector.broadcast %cst_149 : f32 to vector<1x1xf32>
      %908 = arith.cmpf ogt, %906, %907 : vector<1x1xf32>
      %cst_150 = arith.constant 1.000000e+00 : f32
      %909 = vector.broadcast %cst_150 : f32 to vector<1x1xf32>
      %910 = arith.select %908, %905, %909 : vector<1x1xi1>, vector<1x1xf32>
      %911 = arith.subf %904, %903 : vector<1x1xf32>
      %cst_151 = arith.constant 2.000000e+00 : f32
      %912 = vector.broadcast %cst_151 : f32 to vector<1x1xf32>
      %913 = arith.mulf %912, %910 : vector<1x1xf32>
      %914 = arith.divf %911, %913 : vector<1x1xf32>
      %cst_152 = arith.constant 0.000000e+00 : f32
      %915 = vector.broadcast %cst_152 : f32 to vector<1x1xf32>
      %916 = arith.cmpf oge, %914, %915 : vector<1x1xf32>
      %cst_153 = arith.constant 1.000000e+00 : f32
      %cst_154 = arith.constant -1.000000e+00 : f32
      %917 = vector.broadcast %cst_153 : f32 to vector<1x1xf32>
      %918 = vector.broadcast %cst_154 : f32 to vector<1x1xf32>
      %919 = arith.select %916, %917, %918 : vector<1x1xi1>, vector<1x1xf32>
      %920 = math.absf %914 : vector<1x1xf32>
      %921 = arith.mulf %914, %914 : vector<1x1xf32>
      %cst_155 = arith.constant 1.000000e+00 : f32
      %922 = vector.broadcast %cst_155 : f32 to vector<1x1xf32>
      %923 = arith.addf %922, %921 : vector<1x1xf32>
      %924 = math.sqrt %923 : vector<1x1xf32>
      %925 = arith.addf %920, %924 : vector<1x1xf32>
      %926 = arith.divf %919, %925 : vector<1x1xf32>
      %927 = arith.mulf %926, %926 : vector<1x1xf32>
      %cst_156 = arith.constant 1.000000e+00 : f32
      %928 = vector.broadcast %cst_156 : f32 to vector<1x1xf32>
      %929 = arith.addf %928, %927 : vector<1x1xf32>
      %930 = math.rsqrt %929 : vector<1x1xf32>
      %931 = arith.mulf %926, %930 : vector<1x1xf32>
      %cst_157 = arith.constant 1.000000e+00 : f32
      %932 = vector.broadcast %cst_157 : f32 to vector<1x1xf32>
      %933 = arith.select %908, %930, %932 : vector<1x1xi1>, vector<1x1xf32>
      %cst_158 = arith.constant 0.000000e+00 : f32
      %934 = vector.broadcast %cst_158 : f32 to vector<1x1xf32>
      %935 = arith.select %908, %931, %934 : vector<1x1xi1>, vector<1x1xf32>
      %936 = tpu.iota {dimensions = array<i32: 0>} : vector<8x8xi32>
      %937 = tpu.iota {dimensions = array<i32: 1>} : vector<8x8xi32>
      %938 = vector.extract_strided_slice %902 {offsets = [1, 0], sizes = [1, 8], strides = [1, 1]} : vector<8x8xf32> to vector<1x8xf32>
      %939 = vector.extract_strided_slice %902 {offsets = [5, 0], sizes = [1, 8], strides = [1, 1]} : vector<8x8xf32> to vector<1x8xf32>
      %c1_i32_159 = arith.constant 1 : i32
      %940 = vector.broadcast %c1_i32_159 : i32 to vector<8x8xi32>
      %941 = arith.cmpi eq, %936, %940 : vector<8x8xi32>
      %942 = vector.broadcast %933 : vector<1x1xf32> to vector<1x8xf32>
      %943 = arith.mulf %942, %938 : vector<1x8xf32>
      %944 = vector.broadcast %935 : vector<1x1xf32> to vector<1x8xf32>
      %945 = arith.mulf %944, %939 : vector<1x8xf32>
      %946 = arith.subf %943, %945 : vector<1x8xf32>
      %c5_i32_160 = arith.constant 5 : i32
      %947 = vector.broadcast %c5_i32_160 : i32 to vector<8x8xi32>
      %948 = arith.cmpi eq, %936, %947 : vector<8x8xi32>
      %949 = vector.broadcast %935 : vector<1x1xf32> to vector<1x8xf32>
      %950 = arith.mulf %949, %938 : vector<1x8xf32>
      %951 = vector.broadcast %933 : vector<1x1xf32> to vector<1x8xf32>
      %952 = arith.mulf %951, %939 : vector<1x8xf32>
      %953 = arith.addf %950, %952 : vector<1x8xf32>
      %954 = vector.shape_cast %953 : vector<1x8xf32> to vector<1x8xf32>
      %955 = vector.broadcast %954 : vector<1x8xf32> to vector<8x8xf32>
      %956 = arith.select %948, %955, %902 : vector<8x8xi1>, vector<8x8xf32>
      %957 = vector.shape_cast %946 : vector<1x8xf32> to vector<1x8xf32>
      %958 = vector.broadcast %957 : vector<1x8xf32> to vector<8x8xf32>
      %959 = arith.select %941, %958, %956 : vector<8x8xi1>, vector<8x8xf32>
      %960 = vector.extract_strided_slice %959 {offsets = [0, 1], sizes = [8, 1], strides = [1, 1]} : vector<8x8xf32> to vector<8x1xf32>
      %961 = vector.extract_strided_slice %959 {offsets = [0, 5], sizes = [8, 1], strides = [1, 1]} : vector<8x8xf32> to vector<8x1xf32>
      %c1_i32_161 = arith.constant 1 : i32
      %962 = vector.broadcast %c1_i32_161 : i32 to vector<8x8xi32>
      %963 = arith.cmpi eq, %937, %962 : vector<8x8xi32>
      %964 = vector.broadcast %933 : vector<1x1xf32> to vector<8x1xf32>
      %965 = arith.mulf %964, %960 : vector<8x1xf32>
      %966 = vector.broadcast %935 : vector<1x1xf32> to vector<8x1xf32>
      %967 = arith.mulf %966, %961 : vector<8x1xf32>
      %968 = arith.subf %965, %967 : vector<8x1xf32>
      %c5_i32_162 = arith.constant 5 : i32
      %969 = vector.broadcast %c5_i32_162 : i32 to vector<8x8xi32>
      %970 = arith.cmpi eq, %937, %969 : vector<8x8xi32>
      %971 = vector.broadcast %935 : vector<1x1xf32> to vector<8x1xf32>
      %972 = arith.mulf %971, %960 : vector<8x1xf32>
      %973 = vector.broadcast %933 : vector<1x1xf32> to vector<8x1xf32>
      %974 = arith.mulf %973, %961 : vector<8x1xf32>
      %975 = arith.addf %972, %974 : vector<8x1xf32>
      %976 = vector.shape_cast %975 : vector<8x1xf32> to vector<8x1xf32>
      %977 = vector.broadcast %976 : vector<8x1xf32> to vector<8x8xf32>
      %978 = arith.select %970, %977, %959 : vector<8x8xi1>, vector<8x8xf32>
      %979 = vector.shape_cast %968 : vector<8x1xf32> to vector<8x1xf32>
      %980 = vector.broadcast %979 : vector<8x1xf32> to vector<8x8xf32>
      %981 = arith.select %963, %980, %978 : vector<8x8xi1>, vector<8x8xf32>
      %982 = vector.extract_strided_slice %981 {offsets = [1, 1], sizes = [1, 1], strides = [1, 1]} : vector<8x8xf32> to vector<1x1xf32>
      %983 = vector.extract_strided_slice %981 {offsets = [6, 6], sizes = [1, 1], strides = [1, 1]} : vector<8x8xf32> to vector<1x1xf32>
      %984 = vector.extract_strided_slice %981 {offsets = [1, 6], sizes = [1, 1], strides = [1, 1]} : vector<8x8xf32> to vector<1x1xf32>
      %985 = math.absf %984 : vector<1x1xf32>
      %cst_163 = arith.constant 9.99999996E-13 : f32
      %986 = vector.broadcast %cst_163 : f32 to vector<1x1xf32>
      %987 = arith.cmpf ogt, %985, %986 : vector<1x1xf32>
      %cst_164 = arith.constant 1.000000e+00 : f32
      %988 = vector.broadcast %cst_164 : f32 to vector<1x1xf32>
      %989 = arith.select %987, %984, %988 : vector<1x1xi1>, vector<1x1xf32>
      %990 = arith.subf %983, %982 : vector<1x1xf32>
      %cst_165 = arith.constant 2.000000e+00 : f32
      %991 = vector.broadcast %cst_165 : f32 to vector<1x1xf32>
      %992 = arith.mulf %991, %989 : vector<1x1xf32>
      %993 = arith.divf %990, %992 : vector<1x1xf32>
      %cst_166 = arith.constant 0.000000e+00 : f32
      %994 = vector.broadcast %cst_166 : f32 to vector<1x1xf32>
      %995 = arith.cmpf oge, %993, %994 : vector<1x1xf32>
      %cst_167 = arith.constant 1.000000e+00 : f32
      %cst_168 = arith.constant -1.000000e+00 : f32
      %996 = vector.broadcast %cst_167 : f32 to vector<1x1xf32>
      %997 = vector.broadcast %cst_168 : f32 to vector<1x1xf32>
      %998 = arith.select %995, %996, %997 : vector<1x1xi1>, vector<1x1xf32>
      %999 = math.absf %993 : vector<1x1xf32>
      %1000 = arith.mulf %993, %993 : vector<1x1xf32>
      %cst_169 = arith.constant 1.000000e+00 : f32
      %1001 = vector.broadcast %cst_169 : f32 to vector<1x1xf32>
      %1002 = arith.addf %1001, %1000 : vector<1x1xf32>
      %1003 = math.sqrt %1002 : vector<1x1xf32>
      %1004 = arith.addf %999, %1003 : vector<1x1xf32>
      %1005 = arith.divf %998, %1004 : vector<1x1xf32>
      %1006 = arith.mulf %1005, %1005 : vector<1x1xf32>
      %cst_170 = arith.constant 1.000000e+00 : f32
      %1007 = vector.broadcast %cst_170 : f32 to vector<1x1xf32>
      %1008 = arith.addf %1007, %1006 : vector<1x1xf32>
      %1009 = math.rsqrt %1008 : vector<1x1xf32>
      %1010 = arith.mulf %1005, %1009 : vector<1x1xf32>
      %cst_171 = arith.constant 1.000000e+00 : f32
      %1011 = vector.broadcast %cst_171 : f32 to vector<1x1xf32>
      %1012 = arith.select %987, %1009, %1011 : vector<1x1xi1>, vector<1x1xf32>
      %cst_172 = arith.constant 0.000000e+00 : f32
      %1013 = vector.broadcast %cst_172 : f32 to vector<1x1xf32>
      %1014 = arith.select %987, %1010, %1013 : vector<1x1xi1>, vector<1x1xf32>
      %1015 = tpu.iota {dimensions = array<i32: 0>} : vector<8x8xi32>
      %1016 = tpu.iota {dimensions = array<i32: 1>} : vector<8x8xi32>
      %1017 = vector.extract_strided_slice %981 {offsets = [1, 0], sizes = [1, 8], strides = [1, 1]} : vector<8x8xf32> to vector<1x8xf32>
      %1018 = vector.extract_strided_slice %981 {offsets = [6, 0], sizes = [1, 8], strides = [1, 1]} : vector<8x8xf32> to vector<1x8xf32>
      %c1_i32_173 = arith.constant 1 : i32
      %1019 = vector.broadcast %c1_i32_173 : i32 to vector<8x8xi32>
      %1020 = arith.cmpi eq, %1015, %1019 : vector<8x8xi32>
      %1021 = vector.broadcast %1012 : vector<1x1xf32> to vector<1x8xf32>
      %1022 = arith.mulf %1021, %1017 : vector<1x8xf32>
      %1023 = vector.broadcast %1014 : vector<1x1xf32> to vector<1x8xf32>
      %1024 = arith.mulf %1023, %1018 : vector<1x8xf32>
      %1025 = arith.subf %1022, %1024 : vector<1x8xf32>
      %c6_i32_174 = arith.constant 6 : i32
      %1026 = vector.broadcast %c6_i32_174 : i32 to vector<8x8xi32>
      %1027 = arith.cmpi eq, %1015, %1026 : vector<8x8xi32>
      %1028 = vector.broadcast %1014 : vector<1x1xf32> to vector<1x8xf32>
      %1029 = arith.mulf %1028, %1017 : vector<1x8xf32>
      %1030 = vector.broadcast %1012 : vector<1x1xf32> to vector<1x8xf32>
      %1031 = arith.mulf %1030, %1018 : vector<1x8xf32>
      %1032 = arith.addf %1029, %1031 : vector<1x8xf32>
      %1033 = vector.shape_cast %1032 : vector<1x8xf32> to vector<1x8xf32>
      %1034 = vector.broadcast %1033 : vector<1x8xf32> to vector<8x8xf32>
      %1035 = arith.select %1027, %1034, %981 : vector<8x8xi1>, vector<8x8xf32>
      %1036 = vector.shape_cast %1025 : vector<1x8xf32> to vector<1x8xf32>
      %1037 = vector.broadcast %1036 : vector<1x8xf32> to vector<8x8xf32>
      %1038 = arith.select %1020, %1037, %1035 : vector<8x8xi1>, vector<8x8xf32>
      %1039 = vector.extract_strided_slice %1038 {offsets = [0, 1], sizes = [8, 1], strides = [1, 1]} : vector<8x8xf32> to vector<8x1xf32>
      %1040 = vector.extract_strided_slice %1038 {offsets = [0, 6], sizes = [8, 1], strides = [1, 1]} : vector<8x8xf32> to vector<8x1xf32>
      %c1_i32_175 = arith.constant 1 : i32
      %1041 = vector.broadcast %c1_i32_175 : i32 to vector<8x8xi32>
      %1042 = arith.cmpi eq, %1016, %1041 : vector<8x8xi32>
      %1043 = vector.broadcast %1012 : vector<1x1xf32> to vector<8x1xf32>
      %1044 = arith.mulf %1043, %1039 : vector<8x1xf32>
      %1045 = vector.broadcast %1014 : vector<1x1xf32> to vector<8x1xf32>
      %1046 = arith.mulf %1045, %1040 : vector<8x1xf32>
      %1047 = arith.subf %1044, %1046 : vector<8x1xf32>
      %c6_i32_176 = arith.constant 6 : i32
      %1048 = vector.broadcast %c6_i32_176 : i32 to vector<8x8xi32>
      %1049 = arith.cmpi eq, %1016, %1048 : vector<8x8xi32>
      %1050 = vector.broadcast %1014 : vector<1x1xf32> to vector<8x1xf32>
      %1051 = arith.mulf %1050, %1039 : vector<8x1xf32>
      %1052 = vector.broadcast %1012 : vector<1x1xf32> to vector<8x1xf32>
      %1053 = arith.mulf %1052, %1040 : vector<8x1xf32>
      %1054 = arith.addf %1051, %1053 : vector<8x1xf32>
      %1055 = vector.shape_cast %1054 : vector<8x1xf32> to vector<8x1xf32>
      %1056 = vector.broadcast %1055 : vector<8x1xf32> to vector<8x8xf32>
      %1057 = arith.select %1049, %1056, %1038 : vector<8x8xi1>, vector<8x8xf32>
      %1058 = vector.shape_cast %1047 : vector<8x1xf32> to vector<8x1xf32>
      %1059 = vector.broadcast %1058 : vector<8x1xf32> to vector<8x8xf32>
      %1060 = arith.select %1042, %1059, %1057 : vector<8x8xi1>, vector<8x8xf32>
      %1061 = vector.extract_strided_slice %1060 {offsets = [1, 1], sizes = [1, 1], strides = [1, 1]} : vector<8x8xf32> to vector<1x1xf32>
      %1062 = vector.extract_strided_slice %1060 {offsets = [7, 7], sizes = [1, 1], strides = [1, 1]} : vector<8x8xf32> to vector<1x1xf32>
      %1063 = vector.extract_strided_slice %1060 {offsets = [1, 7], sizes = [1, 1], strides = [1, 1]} : vector<8x8xf32> to vector<1x1xf32>
      %1064 = math.absf %1063 : vector<1x1xf32>
      %cst_177 = arith.constant 9.99999996E-13 : f32
      %1065 = vector.broadcast %cst_177 : f32 to vector<1x1xf32>
      %1066 = arith.cmpf ogt, %1064, %1065 : vector<1x1xf32>
      %cst_178 = arith.constant 1.000000e+00 : f32
      %1067 = vector.broadcast %cst_178 : f32 to vector<1x1xf32>
      %1068 = arith.select %1066, %1063, %1067 : vector<1x1xi1>, vector<1x1xf32>
      %1069 = arith.subf %1062, %1061 : vector<1x1xf32>
      %cst_179 = arith.constant 2.000000e+00 : f32
      %1070 = vector.broadcast %cst_179 : f32 to vector<1x1xf32>
      %1071 = arith.mulf %1070, %1068 : vector<1x1xf32>
      %1072 = arith.divf %1069, %1071 : vector<1x1xf32>
      %cst_180 = arith.constant 0.000000e+00 : f32
      %1073 = vector.broadcast %cst_180 : f32 to vector<1x1xf32>
      %1074 = arith.cmpf oge, %1072, %1073 : vector<1x1xf32>
      %cst_181 = arith.constant 1.000000e+00 : f32
      %cst_182 = arith.constant -1.000000e+00 : f32
      %1075 = vector.broadcast %cst_181 : f32 to vector<1x1xf32>
      %1076 = vector.broadcast %cst_182 : f32 to vector<1x1xf32>
      %1077 = arith.select %1074, %1075, %1076 : vector<1x1xi1>, vector<1x1xf32>
      %1078 = math.absf %1072 : vector<1x1xf32>
      %1079 = arith.mulf %1072, %1072 : vector<1x1xf32>
      %cst_183 = arith.constant 1.000000e+00 : f32
      %1080 = vector.broadcast %cst_183 : f32 to vector<1x1xf32>
      %1081 = arith.addf %1080, %1079 : vector<1x1xf32>
      %1082 = math.sqrt %1081 : vector<1x1xf32>
      %1083 = arith.addf %1078, %1082 : vector<1x1xf32>
      %1084 = arith.divf %1077, %1083 : vector<1x1xf32>
      %1085 = arith.mulf %1084, %1084 : vector<1x1xf32>
      %cst_184 = arith.constant 1.000000e+00 : f32
      %1086 = vector.broadcast %cst_184 : f32 to vector<1x1xf32>
      %1087 = arith.addf %1086, %1085 : vector<1x1xf32>
      %1088 = math.rsqrt %1087 : vector<1x1xf32>
      %1089 = arith.mulf %1084, %1088 : vector<1x1xf32>
      %cst_185 = arith.constant 1.000000e+00 : f32
      %1090 = vector.broadcast %cst_185 : f32 to vector<1x1xf32>
      %1091 = arith.select %1066, %1088, %1090 : vector<1x1xi1>, vector<1x1xf32>
      %cst_186 = arith.constant 0.000000e+00 : f32
      %1092 = vector.broadcast %cst_186 : f32 to vector<1x1xf32>
      %1093 = arith.select %1066, %1089, %1092 : vector<1x1xi1>, vector<1x1xf32>
      %1094 = tpu.iota {dimensions = array<i32: 0>} : vector<8x8xi32>
      %1095 = tpu.iota {dimensions = array<i32: 1>} : vector<8x8xi32>
      %1096 = vector.extract_strided_slice %1060 {offsets = [1, 0], sizes = [1, 8], strides = [1, 1]} : vector<8x8xf32> to vector<1x8xf32>
      %1097 = vector.extract_strided_slice %1060 {offsets = [7, 0], sizes = [1, 8], strides = [1, 1]} : vector<8x8xf32> to vector<1x8xf32>
      %c1_i32_187 = arith.constant 1 : i32
      %1098 = vector.broadcast %c1_i32_187 : i32 to vector<8x8xi32>
      %1099 = arith.cmpi eq, %1094, %1098 : vector<8x8xi32>
      %1100 = vector.broadcast %1091 : vector<1x1xf32> to vector<1x8xf32>
      %1101 = arith.mulf %1100, %1096 : vector<1x8xf32>
      %1102 = vector.broadcast %1093 : vector<1x1xf32> to vector<1x8xf32>
      %1103 = arith.mulf %1102, %1097 : vector<1x8xf32>
      %1104 = arith.subf %1101, %1103 : vector<1x8xf32>
      %c7_i32_188 = arith.constant 7 : i32
      %1105 = vector.broadcast %c7_i32_188 : i32 to vector<8x8xi32>
      %1106 = arith.cmpi eq, %1094, %1105 : vector<8x8xi32>
      %1107 = vector.broadcast %1093 : vector<1x1xf32> to vector<1x8xf32>
      %1108 = arith.mulf %1107, %1096 : vector<1x8xf32>
      %1109 = vector.broadcast %1091 : vector<1x1xf32> to vector<1x8xf32>
      %1110 = arith.mulf %1109, %1097 : vector<1x8xf32>
      %1111 = arith.addf %1108, %1110 : vector<1x8xf32>
      %1112 = vector.shape_cast %1111 : vector<1x8xf32> to vector<1x8xf32>
      %1113 = vector.broadcast %1112 : vector<1x8xf32> to vector<8x8xf32>
      %1114 = arith.select %1106, %1113, %1060 : vector<8x8xi1>, vector<8x8xf32>
      %1115 = vector.shape_cast %1104 : vector<1x8xf32> to vector<1x8xf32>
      %1116 = vector.broadcast %1115 : vector<1x8xf32> to vector<8x8xf32>
      %1117 = arith.select %1099, %1116, %1114 : vector<8x8xi1>, vector<8x8xf32>
      %1118 = vector.extract_strided_slice %1117 {offsets = [0, 1], sizes = [8, 1], strides = [1, 1]} : vector<8x8xf32> to vector<8x1xf32>
      %1119 = vector.extract_strided_slice %1117 {offsets = [0, 7], sizes = [8, 1], strides = [1, 1]} : vector<8x8xf32> to vector<8x1xf32>
      %c1_i32_189 = arith.constant 1 : i32
      %1120 = vector.broadcast %c1_i32_189 : i32 to vector<8x8xi32>
      %1121 = arith.cmpi eq, %1095, %1120 : vector<8x8xi32>
      %1122 = vector.broadcast %1091 : vector<1x1xf32> to vector<8x1xf32>
      %1123 = arith.mulf %1122, %1118 : vector<8x1xf32>
      %1124 = vector.broadcast %1093 : vector<1x1xf32> to vector<8x1xf32>
      %1125 = arith.mulf %1124, %1119 : vector<8x1xf32>
      %1126 = arith.subf %1123, %1125 : vector<8x1xf32>
      %c7_i32_190 = arith.constant 7 : i32
      %1127 = vector.broadcast %c7_i32_190 : i32 to vector<8x8xi32>
      %1128 = arith.cmpi eq, %1095, %1127 : vector<8x8xi32>
      %1129 = vector.broadcast %1093 : vector<1x1xf32> to vector<8x1xf32>
      %1130 = arith.mulf %1129, %1118 : vector<8x1xf32>
      %1131 = vector.broadcast %1091 : vector<1x1xf32> to vector<8x1xf32>
      %1132 = arith.mulf %1131, %1119 : vector<8x1xf32>
      %1133 = arith.addf %1130, %1132 : vector<8x1xf32>
      %1134 = vector.shape_cast %1133 : vector<8x1xf32> to vector<8x1xf32>
      %1135 = vector.broadcast %1134 : vector<8x1xf32> to vector<8x8xf32>
      %1136 = arith.select %1128, %1135, %1117 : vector<8x8xi1>, vector<8x8xf32>
      %1137 = vector.shape_cast %1126 : vector<8x1xf32> to vector<8x1xf32>
      %1138 = vector.broadcast %1137 : vector<8x1xf32> to vector<8x8xf32>
      %1139 = arith.select %1121, %1138, %1136 : vector<8x8xi1>, vector<8x8xf32>
      %1140 = vector.extract_strided_slice %1139 {offsets = [2, 2], sizes = [1, 1], strides = [1, 1]} : vector<8x8xf32> to vector<1x1xf32>
      %1141 = vector.extract_strided_slice %1139 {offsets = [3, 3], sizes = [1, 1], strides = [1, 1]} : vector<8x8xf32> to vector<1x1xf32>
      %1142 = vector.extract_strided_slice %1139 {offsets = [2, 3], sizes = [1, 1], strides = [1, 1]} : vector<8x8xf32> to vector<1x1xf32>
      %1143 = math.absf %1142 : vector<1x1xf32>
      %cst_191 = arith.constant 9.99999996E-13 : f32
      %1144 = vector.broadcast %cst_191 : f32 to vector<1x1xf32>
      %1145 = arith.cmpf ogt, %1143, %1144 : vector<1x1xf32>
      %cst_192 = arith.constant 1.000000e+00 : f32
      %1146 = vector.broadcast %cst_192 : f32 to vector<1x1xf32>
      %1147 = arith.select %1145, %1142, %1146 : vector<1x1xi1>, vector<1x1xf32>
      %1148 = arith.subf %1141, %1140 : vector<1x1xf32>
      %cst_193 = arith.constant 2.000000e+00 : f32
      %1149 = vector.broadcast %cst_193 : f32 to vector<1x1xf32>
      %1150 = arith.mulf %1149, %1147 : vector<1x1xf32>
      %1151 = arith.divf %1148, %1150 : vector<1x1xf32>
      %cst_194 = arith.constant 0.000000e+00 : f32
      %1152 = vector.broadcast %cst_194 : f32 to vector<1x1xf32>
      %1153 = arith.cmpf oge, %1151, %1152 : vector<1x1xf32>
      %cst_195 = arith.constant 1.000000e+00 : f32
      %cst_196 = arith.constant -1.000000e+00 : f32
      %1154 = vector.broadcast %cst_195 : f32 to vector<1x1xf32>
      %1155 = vector.broadcast %cst_196 : f32 to vector<1x1xf32>
      %1156 = arith.select %1153, %1154, %1155 : vector<1x1xi1>, vector<1x1xf32>
      %1157 = math.absf %1151 : vector<1x1xf32>
      %1158 = arith.mulf %1151, %1151 : vector<1x1xf32>
      %cst_197 = arith.constant 1.000000e+00 : f32
      %1159 = vector.broadcast %cst_197 : f32 to vector<1x1xf32>
      %1160 = arith.addf %1159, %1158 : vector<1x1xf32>
      %1161 = math.sqrt %1160 : vector<1x1xf32>
      %1162 = arith.addf %1157, %1161 : vector<1x1xf32>
      %1163 = arith.divf %1156, %1162 : vector<1x1xf32>
      %1164 = arith.mulf %1163, %1163 : vector<1x1xf32>
      %cst_198 = arith.constant 1.000000e+00 : f32
      %1165 = vector.broadcast %cst_198 : f32 to vector<1x1xf32>
      %1166 = arith.addf %1165, %1164 : vector<1x1xf32>
      %1167 = math.rsqrt %1166 : vector<1x1xf32>
      %1168 = arith.mulf %1163, %1167 : vector<1x1xf32>
      %cst_199 = arith.constant 1.000000e+00 : f32
      %1169 = vector.broadcast %cst_199 : f32 to vector<1x1xf32>
      %1170 = arith.select %1145, %1167, %1169 : vector<1x1xi1>, vector<1x1xf32>
      %cst_200 = arith.constant 0.000000e+00 : f32
      %1171 = vector.broadcast %cst_200 : f32 to vector<1x1xf32>
      %1172 = arith.select %1145, %1168, %1171 : vector<1x1xi1>, vector<1x1xf32>
      %1173 = tpu.iota {dimensions = array<i32: 0>} : vector<8x8xi32>
      %1174 = tpu.iota {dimensions = array<i32: 1>} : vector<8x8xi32>
      %1175 = vector.extract_strided_slice %1139 {offsets = [2, 0], sizes = [1, 8], strides = [1, 1]} : vector<8x8xf32> to vector<1x8xf32>
      %1176 = vector.extract_strided_slice %1139 {offsets = [3, 0], sizes = [1, 8], strides = [1, 1]} : vector<8x8xf32> to vector<1x8xf32>
      %c2_i32_201 = arith.constant 2 : i32
      %1177 = vector.broadcast %c2_i32_201 : i32 to vector<8x8xi32>
      %1178 = arith.cmpi eq, %1173, %1177 : vector<8x8xi32>
      %1179 = vector.broadcast %1170 : vector<1x1xf32> to vector<1x8xf32>
      %1180 = arith.mulf %1179, %1175 : vector<1x8xf32>
      %1181 = vector.broadcast %1172 : vector<1x1xf32> to vector<1x8xf32>
      %1182 = arith.mulf %1181, %1176 : vector<1x8xf32>
      %1183 = arith.subf %1180, %1182 : vector<1x8xf32>
      %c3_i32_202 = arith.constant 3 : i32
      %1184 = vector.broadcast %c3_i32_202 : i32 to vector<8x8xi32>
      %1185 = arith.cmpi eq, %1173, %1184 : vector<8x8xi32>
      %1186 = vector.broadcast %1172 : vector<1x1xf32> to vector<1x8xf32>
      %1187 = arith.mulf %1186, %1175 : vector<1x8xf32>
      %1188 = vector.broadcast %1170 : vector<1x1xf32> to vector<1x8xf32>
      %1189 = arith.mulf %1188, %1176 : vector<1x8xf32>
      %1190 = arith.addf %1187, %1189 : vector<1x8xf32>
      %1191 = vector.shape_cast %1190 : vector<1x8xf32> to vector<1x8xf32>
      %1192 = vector.broadcast %1191 : vector<1x8xf32> to vector<8x8xf32>
      %1193 = arith.select %1185, %1192, %1139 : vector<8x8xi1>, vector<8x8xf32>
      %1194 = vector.shape_cast %1183 : vector<1x8xf32> to vector<1x8xf32>
      %1195 = vector.broadcast %1194 : vector<1x8xf32> to vector<8x8xf32>
      %1196 = arith.select %1178, %1195, %1193 : vector<8x8xi1>, vector<8x8xf32>
      %1197 = vector.extract_strided_slice %1196 {offsets = [0, 2], sizes = [8, 1], strides = [1, 1]} : vector<8x8xf32> to vector<8x1xf32>
      %1198 = vector.extract_strided_slice %1196 {offsets = [0, 3], sizes = [8, 1], strides = [1, 1]} : vector<8x8xf32> to vector<8x1xf32>
      %c2_i32_203 = arith.constant 2 : i32
      %1199 = vector.broadcast %c2_i32_203 : i32 to vector<8x8xi32>
      %1200 = arith.cmpi eq, %1174, %1199 : vector<8x8xi32>
      %1201 = vector.broadcast %1170 : vector<1x1xf32> to vector<8x1xf32>
      %1202 = arith.mulf %1201, %1197 : vector<8x1xf32>
      %1203 = vector.broadcast %1172 : vector<1x1xf32> to vector<8x1xf32>
      %1204 = arith.mulf %1203, %1198 : vector<8x1xf32>
      %1205 = arith.subf %1202, %1204 : vector<8x1xf32>
      %c3_i32_204 = arith.constant 3 : i32
      %1206 = vector.broadcast %c3_i32_204 : i32 to vector<8x8xi32>
      %1207 = arith.cmpi eq, %1174, %1206 : vector<8x8xi32>
      %1208 = vector.broadcast %1172 : vector<1x1xf32> to vector<8x1xf32>
      %1209 = arith.mulf %1208, %1197 : vector<8x1xf32>
      %1210 = vector.broadcast %1170 : vector<1x1xf32> to vector<8x1xf32>
      %1211 = arith.mulf %1210, %1198 : vector<8x1xf32>
      %1212 = arith.addf %1209, %1211 : vector<8x1xf32>
      %1213 = vector.shape_cast %1212 : vector<8x1xf32> to vector<8x1xf32>
      %1214 = vector.broadcast %1213 : vector<8x1xf32> to vector<8x8xf32>
      %1215 = arith.select %1207, %1214, %1196 : vector<8x8xi1>, vector<8x8xf32>
      %1216 = vector.shape_cast %1205 : vector<8x1xf32> to vector<8x1xf32>
      %1217 = vector.broadcast %1216 : vector<8x1xf32> to vector<8x8xf32>
      %1218 = arith.select %1200, %1217, %1215 : vector<8x8xi1>, vector<8x8xf32>
      %1219 = vector.extract_strided_slice %1218 {offsets = [2, 2], sizes = [1, 1], strides = [1, 1]} : vector<8x8xf32> to vector<1x1xf32>
      %1220 = vector.extract_strided_slice %1218 {offsets = [4, 4], sizes = [1, 1], strides = [1, 1]} : vector<8x8xf32> to vector<1x1xf32>
      %1221 = vector.extract_strided_slice %1218 {offsets = [2, 4], sizes = [1, 1], strides = [1, 1]} : vector<8x8xf32> to vector<1x1xf32>
      %1222 = math.absf %1221 : vector<1x1xf32>
      %cst_205 = arith.constant 9.99999996E-13 : f32
      %1223 = vector.broadcast %cst_205 : f32 to vector<1x1xf32>
      %1224 = arith.cmpf ogt, %1222, %1223 : vector<1x1xf32>
      %cst_206 = arith.constant 1.000000e+00 : f32
      %1225 = vector.broadcast %cst_206 : f32 to vector<1x1xf32>
      %1226 = arith.select %1224, %1221, %1225 : vector<1x1xi1>, vector<1x1xf32>
      %1227 = arith.subf %1220, %1219 : vector<1x1xf32>
      %cst_207 = arith.constant 2.000000e+00 : f32
      %1228 = vector.broadcast %cst_207 : f32 to vector<1x1xf32>
      %1229 = arith.mulf %1228, %1226 : vector<1x1xf32>
      %1230 = arith.divf %1227, %1229 : vector<1x1xf32>
      %cst_208 = arith.constant 0.000000e+00 : f32
      %1231 = vector.broadcast %cst_208 : f32 to vector<1x1xf32>
      %1232 = arith.cmpf oge, %1230, %1231 : vector<1x1xf32>
      %cst_209 = arith.constant 1.000000e+00 : f32
      %cst_210 = arith.constant -1.000000e+00 : f32
      %1233 = vector.broadcast %cst_209 : f32 to vector<1x1xf32>
      %1234 = vector.broadcast %cst_210 : f32 to vector<1x1xf32>
      %1235 = arith.select %1232, %1233, %1234 : vector<1x1xi1>, vector<1x1xf32>
      %1236 = math.absf %1230 : vector<1x1xf32>
      %1237 = arith.mulf %1230, %1230 : vector<1x1xf32>
      %cst_211 = arith.constant 1.000000e+00 : f32
      %1238 = vector.broadcast %cst_211 : f32 to vector<1x1xf32>
      %1239 = arith.addf %1238, %1237 : vector<1x1xf32>
      %1240 = math.sqrt %1239 : vector<1x1xf32>
      %1241 = arith.addf %1236, %1240 : vector<1x1xf32>
      %1242 = arith.divf %1235, %1241 : vector<1x1xf32>
      %1243 = arith.mulf %1242, %1242 : vector<1x1xf32>
      %cst_212 = arith.constant 1.000000e+00 : f32
      %1244 = vector.broadcast %cst_212 : f32 to vector<1x1xf32>
      %1245 = arith.addf %1244, %1243 : vector<1x1xf32>
      %1246 = math.rsqrt %1245 : vector<1x1xf32>
      %1247 = arith.mulf %1242, %1246 : vector<1x1xf32>
      %cst_213 = arith.constant 1.000000e+00 : f32
      %1248 = vector.broadcast %cst_213 : f32 to vector<1x1xf32>
      %1249 = arith.select %1224, %1246, %1248 : vector<1x1xi1>, vector<1x1xf32>
      %cst_214 = arith.constant 0.000000e+00 : f32
      %1250 = vector.broadcast %cst_214 : f32 to vector<1x1xf32>
      %1251 = arith.select %1224, %1247, %1250 : vector<1x1xi1>, vector<1x1xf32>
      %1252 = tpu.iota {dimensions = array<i32: 0>} : vector<8x8xi32>
      %1253 = tpu.iota {dimensions = array<i32: 1>} : vector<8x8xi32>
      %1254 = vector.extract_strided_slice %1218 {offsets = [2, 0], sizes = [1, 8], strides = [1, 1]} : vector<8x8xf32> to vector<1x8xf32>
      %1255 = vector.extract_strided_slice %1218 {offsets = [4, 0], sizes = [1, 8], strides = [1, 1]} : vector<8x8xf32> to vector<1x8xf32>
      %c2_i32_215 = arith.constant 2 : i32
      %1256 = vector.broadcast %c2_i32_215 : i32 to vector<8x8xi32>
      %1257 = arith.cmpi eq, %1252, %1256 : vector<8x8xi32>
      %1258 = vector.broadcast %1249 : vector<1x1xf32> to vector<1x8xf32>
      %1259 = arith.mulf %1258, %1254 : vector<1x8xf32>
      %1260 = vector.broadcast %1251 : vector<1x1xf32> to vector<1x8xf32>
      %1261 = arith.mulf %1260, %1255 : vector<1x8xf32>
      %1262 = arith.subf %1259, %1261 : vector<1x8xf32>
      %c4_i32_216 = arith.constant 4 : i32
      %1263 = vector.broadcast %c4_i32_216 : i32 to vector<8x8xi32>
      %1264 = arith.cmpi eq, %1252, %1263 : vector<8x8xi32>
      %1265 = vector.broadcast %1251 : vector<1x1xf32> to vector<1x8xf32>
      %1266 = arith.mulf %1265, %1254 : vector<1x8xf32>
      %1267 = vector.broadcast %1249 : vector<1x1xf32> to vector<1x8xf32>
      %1268 = arith.mulf %1267, %1255 : vector<1x8xf32>
      %1269 = arith.addf %1266, %1268 : vector<1x8xf32>
      %1270 = vector.shape_cast %1269 : vector<1x8xf32> to vector<1x8xf32>
      %1271 = vector.broadcast %1270 : vector<1x8xf32> to vector<8x8xf32>
      %1272 = arith.select %1264, %1271, %1218 : vector<8x8xi1>, vector<8x8xf32>
      %1273 = vector.shape_cast %1262 : vector<1x8xf32> to vector<1x8xf32>
      %1274 = vector.broadcast %1273 : vector<1x8xf32> to vector<8x8xf32>
      %1275 = arith.select %1257, %1274, %1272 : vector<8x8xi1>, vector<8x8xf32>
      %1276 = vector.extract_strided_slice %1275 {offsets = [0, 2], sizes = [8, 1], strides = [1, 1]} : vector<8x8xf32> to vector<8x1xf32>
      %1277 = vector.extract_strided_slice %1275 {offsets = [0, 4], sizes = [8, 1], strides = [1, 1]} : vector<8x8xf32> to vector<8x1xf32>
      %c2_i32_217 = arith.constant 2 : i32
      %1278 = vector.broadcast %c2_i32_217 : i32 to vector<8x8xi32>
      %1279 = arith.cmpi eq, %1253, %1278 : vector<8x8xi32>
      %1280 = vector.broadcast %1249 : vector<1x1xf32> to vector<8x1xf32>
      %1281 = arith.mulf %1280, %1276 : vector<8x1xf32>
      %1282 = vector.broadcast %1251 : vector<1x1xf32> to vector<8x1xf32>
      %1283 = arith.mulf %1282, %1277 : vector<8x1xf32>
      %1284 = arith.subf %1281, %1283 : vector<8x1xf32>
      %c4_i32_218 = arith.constant 4 : i32
      %1285 = vector.broadcast %c4_i32_218 : i32 to vector<8x8xi32>
      %1286 = arith.cmpi eq, %1253, %1285 : vector<8x8xi32>
      %1287 = vector.broadcast %1251 : vector<1x1xf32> to vector<8x1xf32>
      %1288 = arith.mulf %1287, %1276 : vector<8x1xf32>
      %1289 = vector.broadcast %1249 : vector<1x1xf32> to vector<8x1xf32>
      %1290 = arith.mulf %1289, %1277 : vector<8x1xf32>
      %1291 = arith.addf %1288, %1290 : vector<8x1xf32>
      %1292 = vector.shape_cast %1291 : vector<8x1xf32> to vector<8x1xf32>
      %1293 = vector.broadcast %1292 : vector<8x1xf32> to vector<8x8xf32>
      %1294 = arith.select %1286, %1293, %1275 : vector<8x8xi1>, vector<8x8xf32>
      %1295 = vector.shape_cast %1284 : vector<8x1xf32> to vector<8x1xf32>
      %1296 = vector.broadcast %1295 : vector<8x1xf32> to vector<8x8xf32>
      %1297 = arith.select %1279, %1296, %1294 : vector<8x8xi1>, vector<8x8xf32>
      %1298 = vector.extract_strided_slice %1297 {offsets = [2, 2], sizes = [1, 1], strides = [1, 1]} : vector<8x8xf32> to vector<1x1xf32>
      %1299 = vector.extract_strided_slice %1297 {offsets = [5, 5], sizes = [1, 1], strides = [1, 1]} : vector<8x8xf32> to vector<1x1xf32>
      %1300 = vector.extract_strided_slice %1297 {offsets = [2, 5], sizes = [1, 1], strides = [1, 1]} : vector<8x8xf32> to vector<1x1xf32>
      %1301 = math.absf %1300 : vector<1x1xf32>
      %cst_219 = arith.constant 9.99999996E-13 : f32
      %1302 = vector.broadcast %cst_219 : f32 to vector<1x1xf32>
      %1303 = arith.cmpf ogt, %1301, %1302 : vector<1x1xf32>
      %cst_220 = arith.constant 1.000000e+00 : f32
      %1304 = vector.broadcast %cst_220 : f32 to vector<1x1xf32>
      %1305 = arith.select %1303, %1300, %1304 : vector<1x1xi1>, vector<1x1xf32>
      %1306 = arith.subf %1299, %1298 : vector<1x1xf32>
      %cst_221 = arith.constant 2.000000e+00 : f32
      %1307 = vector.broadcast %cst_221 : f32 to vector<1x1xf32>
      %1308 = arith.mulf %1307, %1305 : vector<1x1xf32>
      %1309 = arith.divf %1306, %1308 : vector<1x1xf32>
      %cst_222 = arith.constant 0.000000e+00 : f32
      %1310 = vector.broadcast %cst_222 : f32 to vector<1x1xf32>
      %1311 = arith.cmpf oge, %1309, %1310 : vector<1x1xf32>
      %cst_223 = arith.constant 1.000000e+00 : f32
      %cst_224 = arith.constant -1.000000e+00 : f32
      %1312 = vector.broadcast %cst_223 : f32 to vector<1x1xf32>
      %1313 = vector.broadcast %cst_224 : f32 to vector<1x1xf32>
      %1314 = arith.select %1311, %1312, %1313 : vector<1x1xi1>, vector<1x1xf32>
      %1315 = math.absf %1309 : vector<1x1xf32>
      %1316 = arith.mulf %1309, %1309 : vector<1x1xf32>
      %cst_225 = arith.constant 1.000000e+00 : f32
      %1317 = vector.broadcast %cst_225 : f32 to vector<1x1xf32>
      %1318 = arith.addf %1317, %1316 : vector<1x1xf32>
      %1319 = math.sqrt %1318 : vector<1x1xf32>
      %1320 = arith.addf %1315, %1319 : vector<1x1xf32>
      %1321 = arith.divf %1314, %1320 : vector<1x1xf32>
      %1322 = arith.mulf %1321, %1321 : vector<1x1xf32>
      %cst_226 = arith.constant 1.000000e+00 : f32
      %1323 = vector.broadcast %cst_226 : f32 to vector<1x1xf32>
      %1324 = arith.addf %1323, %1322 : vector<1x1xf32>
      %1325 = math.rsqrt %1324 : vector<1x1xf32>
      %1326 = arith.mulf %1321, %1325 : vector<1x1xf32>
      %cst_227 = arith.constant 1.000000e+00 : f32
      %1327 = vector.broadcast %cst_227 : f32 to vector<1x1xf32>
      %1328 = arith.select %1303, %1325, %1327 : vector<1x1xi1>, vector<1x1xf32>
      %cst_228 = arith.constant 0.000000e+00 : f32
      %1329 = vector.broadcast %cst_228 : f32 to vector<1x1xf32>
      %1330 = arith.select %1303, %1326, %1329 : vector<1x1xi1>, vector<1x1xf32>
      %1331 = tpu.iota {dimensions = array<i32: 0>} : vector<8x8xi32>
      %1332 = tpu.iota {dimensions = array<i32: 1>} : vector<8x8xi32>
      %1333 = vector.extract_strided_slice %1297 {offsets = [2, 0], sizes = [1, 8], strides = [1, 1]} : vector<8x8xf32> to vector<1x8xf32>
      %1334 = vector.extract_strided_slice %1297 {offsets = [5, 0], sizes = [1, 8], strides = [1, 1]} : vector<8x8xf32> to vector<1x8xf32>
      %c2_i32_229 = arith.constant 2 : i32
      %1335 = vector.broadcast %c2_i32_229 : i32 to vector<8x8xi32>
      %1336 = arith.cmpi eq, %1331, %1335 : vector<8x8xi32>
      %1337 = vector.broadcast %1328 : vector<1x1xf32> to vector<1x8xf32>
      %1338 = arith.mulf %1337, %1333 : vector<1x8xf32>
      %1339 = vector.broadcast %1330 : vector<1x1xf32> to vector<1x8xf32>
      %1340 = arith.mulf %1339, %1334 : vector<1x8xf32>
      %1341 = arith.subf %1338, %1340 : vector<1x8xf32>
      %c5_i32_230 = arith.constant 5 : i32
      %1342 = vector.broadcast %c5_i32_230 : i32 to vector<8x8xi32>
      %1343 = arith.cmpi eq, %1331, %1342 : vector<8x8xi32>
      %1344 = vector.broadcast %1330 : vector<1x1xf32> to vector<1x8xf32>
      %1345 = arith.mulf %1344, %1333 : vector<1x8xf32>
      %1346 = vector.broadcast %1328 : vector<1x1xf32> to vector<1x8xf32>
      %1347 = arith.mulf %1346, %1334 : vector<1x8xf32>
      %1348 = arith.addf %1345, %1347 : vector<1x8xf32>
      %1349 = vector.shape_cast %1348 : vector<1x8xf32> to vector<1x8xf32>
      %1350 = vector.broadcast %1349 : vector<1x8xf32> to vector<8x8xf32>
      %1351 = arith.select %1343, %1350, %1297 : vector<8x8xi1>, vector<8x8xf32>
      %1352 = vector.shape_cast %1341 : vector<1x8xf32> to vector<1x8xf32>
      %1353 = vector.broadcast %1352 : vector<1x8xf32> to vector<8x8xf32>
      %1354 = arith.select %1336, %1353, %1351 : vector<8x8xi1>, vector<8x8xf32>
      %1355 = vector.extract_strided_slice %1354 {offsets = [0, 2], sizes = [8, 1], strides = [1, 1]} : vector<8x8xf32> to vector<8x1xf32>
      %1356 = vector.extract_strided_slice %1354 {offsets = [0, 5], sizes = [8, 1], strides = [1, 1]} : vector<8x8xf32> to vector<8x1xf32>
      %c2_i32_231 = arith.constant 2 : i32
      %1357 = vector.broadcast %c2_i32_231 : i32 to vector<8x8xi32>
      %1358 = arith.cmpi eq, %1332, %1357 : vector<8x8xi32>
      %1359 = vector.broadcast %1328 : vector<1x1xf32> to vector<8x1xf32>
      %1360 = arith.mulf %1359, %1355 : vector<8x1xf32>
      %1361 = vector.broadcast %1330 : vector<1x1xf32> to vector<8x1xf32>
      %1362 = arith.mulf %1361, %1356 : vector<8x1xf32>
      %1363 = arith.subf %1360, %1362 : vector<8x1xf32>
      %c5_i32_232 = arith.constant 5 : i32
      %1364 = vector.broadcast %c5_i32_232 : i32 to vector<8x8xi32>
      %1365 = arith.cmpi eq, %1332, %1364 : vector<8x8xi32>
      %1366 = vector.broadcast %1330 : vector<1x1xf32> to vector<8x1xf32>
      %1367 = arith.mulf %1366, %1355 : vector<8x1xf32>
      %1368 = vector.broadcast %1328 : vector<1x1xf32> to vector<8x1xf32>
      %1369 = arith.mulf %1368, %1356 : vector<8x1xf32>
      %1370 = arith.addf %1367, %1369 : vector<8x1xf32>
      %1371 = vector.shape_cast %1370 : vector<8x1xf32> to vector<8x1xf32>
      %1372 = vector.broadcast %1371 : vector<8x1xf32> to vector<8x8xf32>
      %1373 = arith.select %1365, %1372, %1354 : vector<8x8xi1>, vector<8x8xf32>
      %1374 = vector.shape_cast %1363 : vector<8x1xf32> to vector<8x1xf32>
      %1375 = vector.broadcast %1374 : vector<8x1xf32> to vector<8x8xf32>
      %1376 = arith.select %1358, %1375, %1373 : vector<8x8xi1>, vector<8x8xf32>
      %1377 = vector.extract_strided_slice %1376 {offsets = [2, 2], sizes = [1, 1], strides = [1, 1]} : vector<8x8xf32> to vector<1x1xf32>
      %1378 = vector.extract_strided_slice %1376 {offsets = [6, 6], sizes = [1, 1], strides = [1, 1]} : vector<8x8xf32> to vector<1x1xf32>
      %1379 = vector.extract_strided_slice %1376 {offsets = [2, 6], sizes = [1, 1], strides = [1, 1]} : vector<8x8xf32> to vector<1x1xf32>
      %1380 = math.absf %1379 : vector<1x1xf32>
      %cst_233 = arith.constant 9.99999996E-13 : f32
      %1381 = vector.broadcast %cst_233 : f32 to vector<1x1xf32>
      %1382 = arith.cmpf ogt, %1380, %1381 : vector<1x1xf32>
      %cst_234 = arith.constant 1.000000e+00 : f32
      %1383 = vector.broadcast %cst_234 : f32 to vector<1x1xf32>
      %1384 = arith.select %1382, %1379, %1383 : vector<1x1xi1>, vector<1x1xf32>
      %1385 = arith.subf %1378, %1377 : vector<1x1xf32>
      %cst_235 = arith.constant 2.000000e+00 : f32
      %1386 = vector.broadcast %cst_235 : f32 to vector<1x1xf32>
      %1387 = arith.mulf %1386, %1384 : vector<1x1xf32>
      %1388 = arith.divf %1385, %1387 : vector<1x1xf32>
      %cst_236 = arith.constant 0.000000e+00 : f32
      %1389 = vector.broadcast %cst_236 : f32 to vector<1x1xf32>
      %1390 = arith.cmpf oge, %1388, %1389 : vector<1x1xf32>
      %cst_237 = arith.constant 1.000000e+00 : f32
      %cst_238 = arith.constant -1.000000e+00 : f32
      %1391 = vector.broadcast %cst_237 : f32 to vector<1x1xf32>
      %1392 = vector.broadcast %cst_238 : f32 to vector<1x1xf32>
      %1393 = arith.select %1390, %1391, %1392 : vector<1x1xi1>, vector<1x1xf32>
      %1394 = math.absf %1388 : vector<1x1xf32>
      %1395 = arith.mulf %1388, %1388 : vector<1x1xf32>
      %cst_239 = arith.constant 1.000000e+00 : f32
      %1396 = vector.broadcast %cst_239 : f32 to vector<1x1xf32>
      %1397 = arith.addf %1396, %1395 : vector<1x1xf32>
      %1398 = math.sqrt %1397 : vector<1x1xf32>
      %1399 = arith.addf %1394, %1398 : vector<1x1xf32>
      %1400 = arith.divf %1393, %1399 : vector<1x1xf32>
      %1401 = arith.mulf %1400, %1400 : vector<1x1xf32>
      %cst_240 = arith.constant 1.000000e+00 : f32
      %1402 = vector.broadcast %cst_240 : f32 to vector<1x1xf32>
      %1403 = arith.addf %1402, %1401 : vector<1x1xf32>
      %1404 = math.rsqrt %1403 : vector<1x1xf32>
      %1405 = arith.mulf %1400, %1404 : vector<1x1xf32>
      %cst_241 = arith.constant 1.000000e+00 : f32
      %1406 = vector.broadcast %cst_241 : f32 to vector<1x1xf32>
      %1407 = arith.select %1382, %1404, %1406 : vector<1x1xi1>, vector<1x1xf32>
      %cst_242 = arith.constant 0.000000e+00 : f32
      %1408 = vector.broadcast %cst_242 : f32 to vector<1x1xf32>
      %1409 = arith.select %1382, %1405, %1408 : vector<1x1xi1>, vector<1x1xf32>
      %1410 = tpu.iota {dimensions = array<i32: 0>} : vector<8x8xi32>
      %1411 = tpu.iota {dimensions = array<i32: 1>} : vector<8x8xi32>
      %1412 = vector.extract_strided_slice %1376 {offsets = [2, 0], sizes = [1, 8], strides = [1, 1]} : vector<8x8xf32> to vector<1x8xf32>
      %1413 = vector.extract_strided_slice %1376 {offsets = [6, 0], sizes = [1, 8], strides = [1, 1]} : vector<8x8xf32> to vector<1x8xf32>
      %c2_i32_243 = arith.constant 2 : i32
      %1414 = vector.broadcast %c2_i32_243 : i32 to vector<8x8xi32>
      %1415 = arith.cmpi eq, %1410, %1414 : vector<8x8xi32>
      %1416 = vector.broadcast %1407 : vector<1x1xf32> to vector<1x8xf32>
      %1417 = arith.mulf %1416, %1412 : vector<1x8xf32>
      %1418 = vector.broadcast %1409 : vector<1x1xf32> to vector<1x8xf32>
      %1419 = arith.mulf %1418, %1413 : vector<1x8xf32>
      %1420 = arith.subf %1417, %1419 : vector<1x8xf32>
      %c6_i32_244 = arith.constant 6 : i32
      %1421 = vector.broadcast %c6_i32_244 : i32 to vector<8x8xi32>
      %1422 = arith.cmpi eq, %1410, %1421 : vector<8x8xi32>
      %1423 = vector.broadcast %1409 : vector<1x1xf32> to vector<1x8xf32>
      %1424 = arith.mulf %1423, %1412 : vector<1x8xf32>
      %1425 = vector.broadcast %1407 : vector<1x1xf32> to vector<1x8xf32>
      %1426 = arith.mulf %1425, %1413 : vector<1x8xf32>
      %1427 = arith.addf %1424, %1426 : vector<1x8xf32>
      %1428 = vector.shape_cast %1427 : vector<1x8xf32> to vector<1x8xf32>
      %1429 = vector.broadcast %1428 : vector<1x8xf32> to vector<8x8xf32>
      %1430 = arith.select %1422, %1429, %1376 : vector<8x8xi1>, vector<8x8xf32>
      %1431 = vector.shape_cast %1420 : vector<1x8xf32> to vector<1x8xf32>
      %1432 = vector.broadcast %1431 : vector<1x8xf32> to vector<8x8xf32>
      %1433 = arith.select %1415, %1432, %1430 : vector<8x8xi1>, vector<8x8xf32>
      %1434 = vector.extract_strided_slice %1433 {offsets = [0, 2], sizes = [8, 1], strides = [1, 1]} : vector<8x8xf32> to vector<8x1xf32>
      %1435 = vector.extract_strided_slice %1433 {offsets = [0, 6], sizes = [8, 1], strides = [1, 1]} : vector<8x8xf32> to vector<8x1xf32>
      %c2_i32_245 = arith.constant 2 : i32
      %1436 = vector.broadcast %c2_i32_245 : i32 to vector<8x8xi32>
      %1437 = arith.cmpi eq, %1411, %1436 : vector<8x8xi32>
      %1438 = vector.broadcast %1407 : vector<1x1xf32> to vector<8x1xf32>
      %1439 = arith.mulf %1438, %1434 : vector<8x1xf32>
      %1440 = vector.broadcast %1409 : vector<1x1xf32> to vector<8x1xf32>
      %1441 = arith.mulf %1440, %1435 : vector<8x1xf32>
      %1442 = arith.subf %1439, %1441 : vector<8x1xf32>
      %c6_i32_246 = arith.constant 6 : i32
      %1443 = vector.broadcast %c6_i32_246 : i32 to vector<8x8xi32>
      %1444 = arith.cmpi eq, %1411, %1443 : vector<8x8xi32>
      %1445 = vector.broadcast %1409 : vector<1x1xf32> to vector<8x1xf32>
      %1446 = arith.mulf %1445, %1434 : vector<8x1xf32>
      %1447 = vector.broadcast %1407 : vector<1x1xf32> to vector<8x1xf32>
      %1448 = arith.mulf %1447, %1435 : vector<8x1xf32>
      %1449 = arith.addf %1446, %1448 : vector<8x1xf32>
      %1450 = vector.shape_cast %1449 : vector<8x1xf32> to vector<8x1xf32>
      %1451 = vector.broadcast %1450 : vector<8x1xf32> to vector<8x8xf32>
      %1452 = arith.select %1444, %1451, %1433 : vector<8x8xi1>, vector<8x8xf32>
      %1453 = vector.shape_cast %1442 : vector<8x1xf32> to vector<8x1xf32>
      %1454 = vector.broadcast %1453 : vector<8x1xf32> to vector<8x8xf32>
      %1455 = arith.select %1437, %1454, %1452 : vector<8x8xi1>, vector<8x8xf32>
      %1456 = vector.extract_strided_slice %1455 {offsets = [2, 2], sizes = [1, 1], strides = [1, 1]} : vector<8x8xf32> to vector<1x1xf32>
      %1457 = vector.extract_strided_slice %1455 {offsets = [7, 7], sizes = [1, 1], strides = [1, 1]} : vector<8x8xf32> to vector<1x1xf32>
      %1458 = vector.extract_strided_slice %1455 {offsets = [2, 7], sizes = [1, 1], strides = [1, 1]} : vector<8x8xf32> to vector<1x1xf32>
      %1459 = math.absf %1458 : vector<1x1xf32>
      %cst_247 = arith.constant 9.99999996E-13 : f32
      %1460 = vector.broadcast %cst_247 : f32 to vector<1x1xf32>
      %1461 = arith.cmpf ogt, %1459, %1460 : vector<1x1xf32>
      %cst_248 = arith.constant 1.000000e+00 : f32
      %1462 = vector.broadcast %cst_248 : f32 to vector<1x1xf32>
      %1463 = arith.select %1461, %1458, %1462 : vector<1x1xi1>, vector<1x1xf32>
      %1464 = arith.subf %1457, %1456 : vector<1x1xf32>
      %cst_249 = arith.constant 2.000000e+00 : f32
      %1465 = vector.broadcast %cst_249 : f32 to vector<1x1xf32>
      %1466 = arith.mulf %1465, %1463 : vector<1x1xf32>
      %1467 = arith.divf %1464, %1466 : vector<1x1xf32>
      %cst_250 = arith.constant 0.000000e+00 : f32
      %1468 = vector.broadcast %cst_250 : f32 to vector<1x1xf32>
      %1469 = arith.cmpf oge, %1467, %1468 : vector<1x1xf32>
      %cst_251 = arith.constant 1.000000e+00 : f32
      %cst_252 = arith.constant -1.000000e+00 : f32
      %1470 = vector.broadcast %cst_251 : f32 to vector<1x1xf32>
      %1471 = vector.broadcast %cst_252 : f32 to vector<1x1xf32>
      %1472 = arith.select %1469, %1470, %1471 : vector<1x1xi1>, vector<1x1xf32>
      %1473 = math.absf %1467 : vector<1x1xf32>
      %1474 = arith.mulf %1467, %1467 : vector<1x1xf32>
      %cst_253 = arith.constant 1.000000e+00 : f32
      %1475 = vector.broadcast %cst_253 : f32 to vector<1x1xf32>
      %1476 = arith.addf %1475, %1474 : vector<1x1xf32>
      %1477 = math.sqrt %1476 : vector<1x1xf32>
      %1478 = arith.addf %1473, %1477 : vector<1x1xf32>
      %1479 = arith.divf %1472, %1478 : vector<1x1xf32>
      %1480 = arith.mulf %1479, %1479 : vector<1x1xf32>
      %cst_254 = arith.constant 1.000000e+00 : f32
      %1481 = vector.broadcast %cst_254 : f32 to vector<1x1xf32>
      %1482 = arith.addf %1481, %1480 : vector<1x1xf32>
      %1483 = math.rsqrt %1482 : vector<1x1xf32>
      %1484 = arith.mulf %1479, %1483 : vector<1x1xf32>
      %cst_255 = arith.constant 1.000000e+00 : f32
      %1485 = vector.broadcast %cst_255 : f32 to vector<1x1xf32>
      %1486 = arith.select %1461, %1483, %1485 : vector<1x1xi1>, vector<1x1xf32>
      %cst_256 = arith.constant 0.000000e+00 : f32
      %1487 = vector.broadcast %cst_256 : f32 to vector<1x1xf32>
      %1488 = arith.select %1461, %1484, %1487 : vector<1x1xi1>, vector<1x1xf32>
      %1489 = tpu.iota {dimensions = array<i32: 0>} : vector<8x8xi32>
      %1490 = tpu.iota {dimensions = array<i32: 1>} : vector<8x8xi32>
      %1491 = vector.extract_strided_slice %1455 {offsets = [2, 0], sizes = [1, 8], strides = [1, 1]} : vector<8x8xf32> to vector<1x8xf32>
      %1492 = vector.extract_strided_slice %1455 {offsets = [7, 0], sizes = [1, 8], strides = [1, 1]} : vector<8x8xf32> to vector<1x8xf32>
      %c2_i32_257 = arith.constant 2 : i32
      %1493 = vector.broadcast %c2_i32_257 : i32 to vector<8x8xi32>
      %1494 = arith.cmpi eq, %1489, %1493 : vector<8x8xi32>
      %1495 = vector.broadcast %1486 : vector<1x1xf32> to vector<1x8xf32>
      %1496 = arith.mulf %1495, %1491 : vector<1x8xf32>
      %1497 = vector.broadcast %1488 : vector<1x1xf32> to vector<1x8xf32>
      %1498 = arith.mulf %1497, %1492 : vector<1x8xf32>
      %1499 = arith.subf %1496, %1498 : vector<1x8xf32>
      %c7_i32_258 = arith.constant 7 : i32
      %1500 = vector.broadcast %c7_i32_258 : i32 to vector<8x8xi32>
      %1501 = arith.cmpi eq, %1489, %1500 : vector<8x8xi32>
      %1502 = vector.broadcast %1488 : vector<1x1xf32> to vector<1x8xf32>
      %1503 = arith.mulf %1502, %1491 : vector<1x8xf32>
      %1504 = vector.broadcast %1486 : vector<1x1xf32> to vector<1x8xf32>
      %1505 = arith.mulf %1504, %1492 : vector<1x8xf32>
      %1506 = arith.addf %1503, %1505 : vector<1x8xf32>
      %1507 = vector.shape_cast %1506 : vector<1x8xf32> to vector<1x8xf32>
      %1508 = vector.broadcast %1507 : vector<1x8xf32> to vector<8x8xf32>
      %1509 = arith.select %1501, %1508, %1455 : vector<8x8xi1>, vector<8x8xf32>
      %1510 = vector.shape_cast %1499 : vector<1x8xf32> to vector<1x8xf32>
      %1511 = vector.broadcast %1510 : vector<1x8xf32> to vector<8x8xf32>
      %1512 = arith.select %1494, %1511, %1509 : vector<8x8xi1>, vector<8x8xf32>
      %1513 = vector.extract_strided_slice %1512 {offsets = [0, 2], sizes = [8, 1], strides = [1, 1]} : vector<8x8xf32> to vector<8x1xf32>
      %1514 = vector.extract_strided_slice %1512 {offsets = [0, 7], sizes = [8, 1], strides = [1, 1]} : vector<8x8xf32> to vector<8x1xf32>
      %c2_i32_259 = arith.constant 2 : i32
      %1515 = vector.broadcast %c2_i32_259 : i32 to vector<8x8xi32>
      %1516 = arith.cmpi eq, %1490, %1515 : vector<8x8xi32>
      %1517 = vector.broadcast %1486 : vector<1x1xf32> to vector<8x1xf32>
      %1518 = arith.mulf %1517, %1513 : vector<8x1xf32>
      %1519 = vector.broadcast %1488 : vector<1x1xf32> to vector<8x1xf32>
      %1520 = arith.mulf %1519, %1514 : vector<8x1xf32>
      %1521 = arith.subf %1518, %1520 : vector<8x1xf32>
      %c7_i32_260 = arith.constant 7 : i32
      %1522 = vector.broadcast %c7_i32_260 : i32 to vector<8x8xi32>
      %1523 = arith.cmpi eq, %1490, %1522 : vector<8x8xi32>
      %1524 = vector.broadcast %1488 : vector<1x1xf32> to vector<8x1xf32>
      %1525 = arith.mulf %1524, %1513 : vector<8x1xf32>
      %1526 = vector.broadcast %1486 : vector<1x1xf32> to vector<8x1xf32>
      %1527 = arith.mulf %1526, %1514 : vector<8x1xf32>
      %1528 = arith.addf %1525, %1527 : vector<8x1xf32>
      %1529 = vector.shape_cast %1528 : vector<8x1xf32> to vector<8x1xf32>
      %1530 = vector.broadcast %1529 : vector<8x1xf32> to vector<8x8xf32>
      %1531 = arith.select %1523, %1530, %1512 : vector<8x8xi1>, vector<8x8xf32>
      %1532 = vector.shape_cast %1521 : vector<8x1xf32> to vector<8x1xf32>
      %1533 = vector.broadcast %1532 : vector<8x1xf32> to vector<8x8xf32>
      %1534 = arith.select %1516, %1533, %1531 : vector<8x8xi1>, vector<8x8xf32>
      %1535 = vector.extract_strided_slice %1534 {offsets = [3, 3], sizes = [1, 1], strides = [1, 1]} : vector<8x8xf32> to vector<1x1xf32>
      %1536 = vector.extract_strided_slice %1534 {offsets = [4, 4], sizes = [1, 1], strides = [1, 1]} : vector<8x8xf32> to vector<1x1xf32>
      %1537 = vector.extract_strided_slice %1534 {offsets = [3, 4], sizes = [1, 1], strides = [1, 1]} : vector<8x8xf32> to vector<1x1xf32>
      %1538 = math.absf %1537 : vector<1x1xf32>
      %cst_261 = arith.constant 9.99999996E-13 : f32
      %1539 = vector.broadcast %cst_261 : f32 to vector<1x1xf32>
      %1540 = arith.cmpf ogt, %1538, %1539 : vector<1x1xf32>
      %cst_262 = arith.constant 1.000000e+00 : f32
      %1541 = vector.broadcast %cst_262 : f32 to vector<1x1xf32>
      %1542 = arith.select %1540, %1537, %1541 : vector<1x1xi1>, vector<1x1xf32>
      %1543 = arith.subf %1536, %1535 : vector<1x1xf32>
      %cst_263 = arith.constant 2.000000e+00 : f32
      %1544 = vector.broadcast %cst_263 : f32 to vector<1x1xf32>
      %1545 = arith.mulf %1544, %1542 : vector<1x1xf32>
      %1546 = arith.divf %1543, %1545 : vector<1x1xf32>
      %cst_264 = arith.constant 0.000000e+00 : f32
      %1547 = vector.broadcast %cst_264 : f32 to vector<1x1xf32>
      %1548 = arith.cmpf oge, %1546, %1547 : vector<1x1xf32>
      %cst_265 = arith.constant 1.000000e+00 : f32
      %cst_266 = arith.constant -1.000000e+00 : f32
      %1549 = vector.broadcast %cst_265 : f32 to vector<1x1xf32>
      %1550 = vector.broadcast %cst_266 : f32 to vector<1x1xf32>
      %1551 = arith.select %1548, %1549, %1550 : vector<1x1xi1>, vector<1x1xf32>
      %1552 = math.absf %1546 : vector<1x1xf32>
      %1553 = arith.mulf %1546, %1546 : vector<1x1xf32>
      %cst_267 = arith.constant 1.000000e+00 : f32
      %1554 = vector.broadcast %cst_267 : f32 to vector<1x1xf32>
      %1555 = arith.addf %1554, %1553 : vector<1x1xf32>
      %1556 = math.sqrt %1555 : vector<1x1xf32>
      %1557 = arith.addf %1552, %1556 : vector<1x1xf32>
      %1558 = arith.divf %1551, %1557 : vector<1x1xf32>
      %1559 = arith.mulf %1558, %1558 : vector<1x1xf32>
      %cst_268 = arith.constant 1.000000e+00 : f32
      %1560 = vector.broadcast %cst_268 : f32 to vector<1x1xf32>
      %1561 = arith.addf %1560, %1559 : vector<1x1xf32>
      %1562 = math.rsqrt %1561 : vector<1x1xf32>
      %1563 = arith.mulf %1558, %1562 : vector<1x1xf32>
      %cst_269 = arith.constant 1.000000e+00 : f32
      %1564 = vector.broadcast %cst_269 : f32 to vector<1x1xf32>
      %1565 = arith.select %1540, %1562, %1564 : vector<1x1xi1>, vector<1x1xf32>
      %cst_270 = arith.constant 0.000000e+00 : f32
      %1566 = vector.broadcast %cst_270 : f32 to vector<1x1xf32>
      %1567 = arith.select %1540, %1563, %1566 : vector<1x1xi1>, vector<1x1xf32>
      %1568 = tpu.iota {dimensions = array<i32: 0>} : vector<8x8xi32>
      %1569 = tpu.iota {dimensions = array<i32: 1>} : vector<8x8xi32>
      %1570 = vector.extract_strided_slice %1534 {offsets = [3, 0], sizes = [1, 8], strides = [1, 1]} : vector<8x8xf32> to vector<1x8xf32>
      %1571 = vector.extract_strided_slice %1534 {offsets = [4, 0], sizes = [1, 8], strides = [1, 1]} : vector<8x8xf32> to vector<1x8xf32>
      %c3_i32_271 = arith.constant 3 : i32
      %1572 = vector.broadcast %c3_i32_271 : i32 to vector<8x8xi32>
      %1573 = arith.cmpi eq, %1568, %1572 : vector<8x8xi32>
      %1574 = vector.broadcast %1565 : vector<1x1xf32> to vector<1x8xf32>
      %1575 = arith.mulf %1574, %1570 : vector<1x8xf32>
      %1576 = vector.broadcast %1567 : vector<1x1xf32> to vector<1x8xf32>
      %1577 = arith.mulf %1576, %1571 : vector<1x8xf32>
      %1578 = arith.subf %1575, %1577 : vector<1x8xf32>
      %c4_i32_272 = arith.constant 4 : i32
      %1579 = vector.broadcast %c4_i32_272 : i32 to vector<8x8xi32>
      %1580 = arith.cmpi eq, %1568, %1579 : vector<8x8xi32>
      %1581 = vector.broadcast %1567 : vector<1x1xf32> to vector<1x8xf32>
      %1582 = arith.mulf %1581, %1570 : vector<1x8xf32>
      %1583 = vector.broadcast %1565 : vector<1x1xf32> to vector<1x8xf32>
      %1584 = arith.mulf %1583, %1571 : vector<1x8xf32>
      %1585 = arith.addf %1582, %1584 : vector<1x8xf32>
      %1586 = vector.shape_cast %1585 : vector<1x8xf32> to vector<1x8xf32>
      %1587 = vector.broadcast %1586 : vector<1x8xf32> to vector<8x8xf32>
      %1588 = arith.select %1580, %1587, %1534 : vector<8x8xi1>, vector<8x8xf32>
      %1589 = vector.shape_cast %1578 : vector<1x8xf32> to vector<1x8xf32>
      %1590 = vector.broadcast %1589 : vector<1x8xf32> to vector<8x8xf32>
      %1591 = arith.select %1573, %1590, %1588 : vector<8x8xi1>, vector<8x8xf32>
      %1592 = vector.extract_strided_slice %1591 {offsets = [0, 3], sizes = [8, 1], strides = [1, 1]} : vector<8x8xf32> to vector<8x1xf32>
      %1593 = vector.extract_strided_slice %1591 {offsets = [0, 4], sizes = [8, 1], strides = [1, 1]} : vector<8x8xf32> to vector<8x1xf32>
      %c3_i32_273 = arith.constant 3 : i32
      %1594 = vector.broadcast %c3_i32_273 : i32 to vector<8x8xi32>
      %1595 = arith.cmpi eq, %1569, %1594 : vector<8x8xi32>
      %1596 = vector.broadcast %1565 : vector<1x1xf32> to vector<8x1xf32>
      %1597 = arith.mulf %1596, %1592 : vector<8x1xf32>
      %1598 = vector.broadcast %1567 : vector<1x1xf32> to vector<8x1xf32>
      %1599 = arith.mulf %1598, %1593 : vector<8x1xf32>
      %1600 = arith.subf %1597, %1599 : vector<8x1xf32>
      %c4_i32_274 = arith.constant 4 : i32
      %1601 = vector.broadcast %c4_i32_274 : i32 to vector<8x8xi32>
      %1602 = arith.cmpi eq, %1569, %1601 : vector<8x8xi32>
      %1603 = vector.broadcast %1567 : vector<1x1xf32> to vector<8x1xf32>
      %1604 = arith.mulf %1603, %1592 : vector<8x1xf32>
      %1605 = vector.broadcast %1565 : vector<1x1xf32> to vector<8x1xf32>
      %1606 = arith.mulf %1605, %1593 : vector<8x1xf32>
      %1607 = arith.addf %1604, %1606 : vector<8x1xf32>
      %1608 = vector.shape_cast %1607 : vector<8x1xf32> to vector<8x1xf32>
      %1609 = vector.broadcast %1608 : vector<8x1xf32> to vector<8x8xf32>
      %1610 = arith.select %1602, %1609, %1591 : vector<8x8xi1>, vector<8x8xf32>
      %1611 = vector.shape_cast %1600 : vector<8x1xf32> to vector<8x1xf32>
      %1612 = vector.broadcast %1611 : vector<8x1xf32> to vector<8x8xf32>
      %1613 = arith.select %1595, %1612, %1610 : vector<8x8xi1>, vector<8x8xf32>
      %1614 = vector.extract_strided_slice %1613 {offsets = [3, 3], sizes = [1, 1], strides = [1, 1]} : vector<8x8xf32> to vector<1x1xf32>
      %1615 = vector.extract_strided_slice %1613 {offsets = [5, 5], sizes = [1, 1], strides = [1, 1]} : vector<8x8xf32> to vector<1x1xf32>
      %1616 = vector.extract_strided_slice %1613 {offsets = [3, 5], sizes = [1, 1], strides = [1, 1]} : vector<8x8xf32> to vector<1x1xf32>
      %1617 = math.absf %1616 : vector<1x1xf32>
      %cst_275 = arith.constant 9.99999996E-13 : f32
      %1618 = vector.broadcast %cst_275 : f32 to vector<1x1xf32>
      %1619 = arith.cmpf ogt, %1617, %1618 : vector<1x1xf32>
      %cst_276 = arith.constant 1.000000e+00 : f32
      %1620 = vector.broadcast %cst_276 : f32 to vector<1x1xf32>
      %1621 = arith.select %1619, %1616, %1620 : vector<1x1xi1>, vector<1x1xf32>
      %1622 = arith.subf %1615, %1614 : vector<1x1xf32>
      %cst_277 = arith.constant 2.000000e+00 : f32
      %1623 = vector.broadcast %cst_277 : f32 to vector<1x1xf32>
      %1624 = arith.mulf %1623, %1621 : vector<1x1xf32>
      %1625 = arith.divf %1622, %1624 : vector<1x1xf32>
      %cst_278 = arith.constant 0.000000e+00 : f32
      %1626 = vector.broadcast %cst_278 : f32 to vector<1x1xf32>
      %1627 = arith.cmpf oge, %1625, %1626 : vector<1x1xf32>
      %cst_279 = arith.constant 1.000000e+00 : f32
      %cst_280 = arith.constant -1.000000e+00 : f32
      %1628 = vector.broadcast %cst_279 : f32 to vector<1x1xf32>
      %1629 = vector.broadcast %cst_280 : f32 to vector<1x1xf32>
      %1630 = arith.select %1627, %1628, %1629 : vector<1x1xi1>, vector<1x1xf32>
      %1631 = math.absf %1625 : vector<1x1xf32>
      %1632 = arith.mulf %1625, %1625 : vector<1x1xf32>
      %cst_281 = arith.constant 1.000000e+00 : f32
      %1633 = vector.broadcast %cst_281 : f32 to vector<1x1xf32>
      %1634 = arith.addf %1633, %1632 : vector<1x1xf32>
      %1635 = math.sqrt %1634 : vector<1x1xf32>
      %1636 = arith.addf %1631, %1635 : vector<1x1xf32>
      %1637 = arith.divf %1630, %1636 : vector<1x1xf32>
      %1638 = arith.mulf %1637, %1637 : vector<1x1xf32>
      %cst_282 = arith.constant 1.000000e+00 : f32
      %1639 = vector.broadcast %cst_282 : f32 to vector<1x1xf32>
      %1640 = arith.addf %1639, %1638 : vector<1x1xf32>
      %1641 = math.rsqrt %1640 : vector<1x1xf32>
      %1642 = arith.mulf %1637, %1641 : vector<1x1xf32>
      %cst_283 = arith.constant 1.000000e+00 : f32
      %1643 = vector.broadcast %cst_283 : f32 to vector<1x1xf32>
      %1644 = arith.select %1619, %1641, %1643 : vector<1x1xi1>, vector<1x1xf32>
      %cst_284 = arith.constant 0.000000e+00 : f32
      %1645 = vector.broadcast %cst_284 : f32 to vector<1x1xf32>
      %1646 = arith.select %1619, %1642, %1645 : vector<1x1xi1>, vector<1x1xf32>
      %1647 = tpu.iota {dimensions = array<i32: 0>} : vector<8x8xi32>
      %1648 = tpu.iota {dimensions = array<i32: 1>} : vector<8x8xi32>
      %1649 = vector.extract_strided_slice %1613 {offsets = [3, 0], sizes = [1, 8], strides = [1, 1]} : vector<8x8xf32> to vector<1x8xf32>
      %1650 = vector.extract_strided_slice %1613 {offsets = [5, 0], sizes = [1, 8], strides = [1, 1]} : vector<8x8xf32> to vector<1x8xf32>
      %c3_i32_285 = arith.constant 3 : i32
      %1651 = vector.broadcast %c3_i32_285 : i32 to vector<8x8xi32>
      %1652 = arith.cmpi eq, %1647, %1651 : vector<8x8xi32>
      %1653 = vector.broadcast %1644 : vector<1x1xf32> to vector<1x8xf32>
      %1654 = arith.mulf %1653, %1649 : vector<1x8xf32>
      %1655 = vector.broadcast %1646 : vector<1x1xf32> to vector<1x8xf32>
      %1656 = arith.mulf %1655, %1650 : vector<1x8xf32>
      %1657 = arith.subf %1654, %1656 : vector<1x8xf32>
      %c5_i32_286 = arith.constant 5 : i32
      %1658 = vector.broadcast %c5_i32_286 : i32 to vector<8x8xi32>
      %1659 = arith.cmpi eq, %1647, %1658 : vector<8x8xi32>
      %1660 = vector.broadcast %1646 : vector<1x1xf32> to vector<1x8xf32>
      %1661 = arith.mulf %1660, %1649 : vector<1x8xf32>
      %1662 = vector.broadcast %1644 : vector<1x1xf32> to vector<1x8xf32>
      %1663 = arith.mulf %1662, %1650 : vector<1x8xf32>
      %1664 = arith.addf %1661, %1663 : vector<1x8xf32>
      %1665 = vector.shape_cast %1664 : vector<1x8xf32> to vector<1x8xf32>
      %1666 = vector.broadcast %1665 : vector<1x8xf32> to vector<8x8xf32>
      %1667 = arith.select %1659, %1666, %1613 : vector<8x8xi1>, vector<8x8xf32>
      %1668 = vector.shape_cast %1657 : vector<1x8xf32> to vector<1x8xf32>
      %1669 = vector.broadcast %1668 : vector<1x8xf32> to vector<8x8xf32>
      %1670 = arith.select %1652, %1669, %1667 : vector<8x8xi1>, vector<8x8xf32>
      %1671 = vector.extract_strided_slice %1670 {offsets = [0, 3], sizes = [8, 1], strides = [1, 1]} : vector<8x8xf32> to vector<8x1xf32>
      %1672 = vector.extract_strided_slice %1670 {offsets = [0, 5], sizes = [8, 1], strides = [1, 1]} : vector<8x8xf32> to vector<8x1xf32>
      %c3_i32_287 = arith.constant 3 : i32
      %1673 = vector.broadcast %c3_i32_287 : i32 to vector<8x8xi32>
      %1674 = arith.cmpi eq, %1648, %1673 : vector<8x8xi32>
      %1675 = vector.broadcast %1644 : vector<1x1xf32> to vector<8x1xf32>
      %1676 = arith.mulf %1675, %1671 : vector<8x1xf32>
      %1677 = vector.broadcast %1646 : vector<1x1xf32> to vector<8x1xf32>
      %1678 = arith.mulf %1677, %1672 : vector<8x1xf32>
      %1679 = arith.subf %1676, %1678 : vector<8x1xf32>
      %c5_i32_288 = arith.constant 5 : i32
      %1680 = vector.broadcast %c5_i32_288 : i32 to vector<8x8xi32>
      %1681 = arith.cmpi eq, %1648, %1680 : vector<8x8xi32>
      %1682 = vector.broadcast %1646 : vector<1x1xf32> to vector<8x1xf32>
      %1683 = arith.mulf %1682, %1671 : vector<8x1xf32>
      %1684 = vector.broadcast %1644 : vector<1x1xf32> to vector<8x1xf32>
      %1685 = arith.mulf %1684, %1672 : vector<8x1xf32>
      %1686 = arith.addf %1683, %1685 : vector<8x1xf32>
      %1687 = vector.shape_cast %1686 : vector<8x1xf32> to vector<8x1xf32>
      %1688 = vector.broadcast %1687 : vector<8x1xf32> to vector<8x8xf32>
      %1689 = arith.select %1681, %1688, %1670 : vector<8x8xi1>, vector<8x8xf32>
      %1690 = vector.shape_cast %1679 : vector<8x1xf32> to vector<8x1xf32>
      %1691 = vector.broadcast %1690 : vector<8x1xf32> to vector<8x8xf32>
      %1692 = arith.select %1674, %1691, %1689 : vector<8x8xi1>, vector<8x8xf32>
      %1693 = vector.extract_strided_slice %1692 {offsets = [3, 3], sizes = [1, 1], strides = [1, 1]} : vector<8x8xf32> to vector<1x1xf32>
      %1694 = vector.extract_strided_slice %1692 {offsets = [6, 6], sizes = [1, 1], strides = [1, 1]} : vector<8x8xf32> to vector<1x1xf32>
      %1695 = vector.extract_strided_slice %1692 {offsets = [3, 6], sizes = [1, 1], strides = [1, 1]} : vector<8x8xf32> to vector<1x1xf32>
      %1696 = math.absf %1695 : vector<1x1xf32>
      %cst_289 = arith.constant 9.99999996E-13 : f32
      %1697 = vector.broadcast %cst_289 : f32 to vector<1x1xf32>
      %1698 = arith.cmpf ogt, %1696, %1697 : vector<1x1xf32>
      %cst_290 = arith.constant 1.000000e+00 : f32
      %1699 = vector.broadcast %cst_290 : f32 to vector<1x1xf32>
      %1700 = arith.select %1698, %1695, %1699 : vector<1x1xi1>, vector<1x1xf32>
      %1701 = arith.subf %1694, %1693 : vector<1x1xf32>
      %cst_291 = arith.constant 2.000000e+00 : f32
      %1702 = vector.broadcast %cst_291 : f32 to vector<1x1xf32>
      %1703 = arith.mulf %1702, %1700 : vector<1x1xf32>
      %1704 = arith.divf %1701, %1703 : vector<1x1xf32>
      %cst_292 = arith.constant 0.000000e+00 : f32
      %1705 = vector.broadcast %cst_292 : f32 to vector<1x1xf32>
      %1706 = arith.cmpf oge, %1704, %1705 : vector<1x1xf32>
      %cst_293 = arith.constant 1.000000e+00 : f32
      %cst_294 = arith.constant -1.000000e+00 : f32
      %1707 = vector.broadcast %cst_293 : f32 to vector<1x1xf32>
      %1708 = vector.broadcast %cst_294 : f32 to vector<1x1xf32>
      %1709 = arith.select %1706, %1707, %1708 : vector<1x1xi1>, vector<1x1xf32>
      %1710 = math.absf %1704 : vector<1x1xf32>
      %1711 = arith.mulf %1704, %1704 : vector<1x1xf32>
      %cst_295 = arith.constant 1.000000e+00 : f32
      %1712 = vector.broadcast %cst_295 : f32 to vector<1x1xf32>
      %1713 = arith.addf %1712, %1711 : vector<1x1xf32>
      %1714 = math.sqrt %1713 : vector<1x1xf32>
      %1715 = arith.addf %1710, %1714 : vector<1x1xf32>
      %1716 = arith.divf %1709, %1715 : vector<1x1xf32>
      %1717 = arith.mulf %1716, %1716 : vector<1x1xf32>
      %cst_296 = arith.constant 1.000000e+00 : f32
      %1718 = vector.broadcast %cst_296 : f32 to vector<1x1xf32>
      %1719 = arith.addf %1718, %1717 : vector<1x1xf32>
      %1720 = math.rsqrt %1719 : vector<1x1xf32>
      %1721 = arith.mulf %1716, %1720 : vector<1x1xf32>
      %cst_297 = arith.constant 1.000000e+00 : f32
      %1722 = vector.broadcast %cst_297 : f32 to vector<1x1xf32>
      %1723 = arith.select %1698, %1720, %1722 : vector<1x1xi1>, vector<1x1xf32>
      %cst_298 = arith.constant 0.000000e+00 : f32
      %1724 = vector.broadcast %cst_298 : f32 to vector<1x1xf32>
      %1725 = arith.select %1698, %1721, %1724 : vector<1x1xi1>, vector<1x1xf32>
      %1726 = tpu.iota {dimensions = array<i32: 0>} : vector<8x8xi32>
      %1727 = tpu.iota {dimensions = array<i32: 1>} : vector<8x8xi32>
      %1728 = vector.extract_strided_slice %1692 {offsets = [3, 0], sizes = [1, 8], strides = [1, 1]} : vector<8x8xf32> to vector<1x8xf32>
      %1729 = vector.extract_strided_slice %1692 {offsets = [6, 0], sizes = [1, 8], strides = [1, 1]} : vector<8x8xf32> to vector<1x8xf32>
      %c3_i32_299 = arith.constant 3 : i32
      %1730 = vector.broadcast %c3_i32_299 : i32 to vector<8x8xi32>
      %1731 = arith.cmpi eq, %1726, %1730 : vector<8x8xi32>
      %1732 = vector.broadcast %1723 : vector<1x1xf32> to vector<1x8xf32>
      %1733 = arith.mulf %1732, %1728 : vector<1x8xf32>
      %1734 = vector.broadcast %1725 : vector<1x1xf32> to vector<1x8xf32>
      %1735 = arith.mulf %1734, %1729 : vector<1x8xf32>
      %1736 = arith.subf %1733, %1735 : vector<1x8xf32>
      %c6_i32_300 = arith.constant 6 : i32
      %1737 = vector.broadcast %c6_i32_300 : i32 to vector<8x8xi32>
      %1738 = arith.cmpi eq, %1726, %1737 : vector<8x8xi32>
      %1739 = vector.broadcast %1725 : vector<1x1xf32> to vector<1x8xf32>
      %1740 = arith.mulf %1739, %1728 : vector<1x8xf32>
      %1741 = vector.broadcast %1723 : vector<1x1xf32> to vector<1x8xf32>
      %1742 = arith.mulf %1741, %1729 : vector<1x8xf32>
      %1743 = arith.addf %1740, %1742 : vector<1x8xf32>
      %1744 = vector.shape_cast %1743 : vector<1x8xf32> to vector<1x8xf32>
      %1745 = vector.broadcast %1744 : vector<1x8xf32> to vector<8x8xf32>
      %1746 = arith.select %1738, %1745, %1692 : vector<8x8xi1>, vector<8x8xf32>
      %1747 = vector.shape_cast %1736 : vector<1x8xf32> to vector<1x8xf32>
      %1748 = vector.broadcast %1747 : vector<1x8xf32> to vector<8x8xf32>
      %1749 = arith.select %1731, %1748, %1746 : vector<8x8xi1>, vector<8x8xf32>
      %1750 = vector.extract_strided_slice %1749 {offsets = [0, 3], sizes = [8, 1], strides = [1, 1]} : vector<8x8xf32> to vector<8x1xf32>
      %1751 = vector.extract_strided_slice %1749 {offsets = [0, 6], sizes = [8, 1], strides = [1, 1]} : vector<8x8xf32> to vector<8x1xf32>
      %c3_i32_301 = arith.constant 3 : i32
      %1752 = vector.broadcast %c3_i32_301 : i32 to vector<8x8xi32>
      %1753 = arith.cmpi eq, %1727, %1752 : vector<8x8xi32>
      %1754 = vector.broadcast %1723 : vector<1x1xf32> to vector<8x1xf32>
      %1755 = arith.mulf %1754, %1750 : vector<8x1xf32>
      %1756 = vector.broadcast %1725 : vector<1x1xf32> to vector<8x1xf32>
      %1757 = arith.mulf %1756, %1751 : vector<8x1xf32>
      %1758 = arith.subf %1755, %1757 : vector<8x1xf32>
      %c6_i32_302 = arith.constant 6 : i32
      %1759 = vector.broadcast %c6_i32_302 : i32 to vector<8x8xi32>
      %1760 = arith.cmpi eq, %1727, %1759 : vector<8x8xi32>
      %1761 = vector.broadcast %1725 : vector<1x1xf32> to vector<8x1xf32>
      %1762 = arith.mulf %1761, %1750 : vector<8x1xf32>
      %1763 = vector.broadcast %1723 : vector<1x1xf32> to vector<8x1xf32>
      %1764 = arith.mulf %1763, %1751 : vector<8x1xf32>
      %1765 = arith.addf %1762, %1764 : vector<8x1xf32>
      %1766 = vector.shape_cast %1765 : vector<8x1xf32> to vector<8x1xf32>
      %1767 = vector.broadcast %1766 : vector<8x1xf32> to vector<8x8xf32>
      %1768 = arith.select %1760, %1767, %1749 : vector<8x8xi1>, vector<8x8xf32>
      %1769 = vector.shape_cast %1758 : vector<8x1xf32> to vector<8x1xf32>
      %1770 = vector.broadcast %1769 : vector<8x1xf32> to vector<8x8xf32>
      %1771 = arith.select %1753, %1770, %1768 : vector<8x8xi1>, vector<8x8xf32>
      %1772 = vector.extract_strided_slice %1771 {offsets = [3, 3], sizes = [1, 1], strides = [1, 1]} : vector<8x8xf32> to vector<1x1xf32>
      %1773 = vector.extract_strided_slice %1771 {offsets = [7, 7], sizes = [1, 1], strides = [1, 1]} : vector<8x8xf32> to vector<1x1xf32>
      %1774 = vector.extract_strided_slice %1771 {offsets = [3, 7], sizes = [1, 1], strides = [1, 1]} : vector<8x8xf32> to vector<1x1xf32>
      %1775 = math.absf %1774 : vector<1x1xf32>
      %cst_303 = arith.constant 9.99999996E-13 : f32
      %1776 = vector.broadcast %cst_303 : f32 to vector<1x1xf32>
      %1777 = arith.cmpf ogt, %1775, %1776 : vector<1x1xf32>
      %cst_304 = arith.constant 1.000000e+00 : f32
      %1778 = vector.broadcast %cst_304 : f32 to vector<1x1xf32>
      %1779 = arith.select %1777, %1774, %1778 : vector<1x1xi1>, vector<1x1xf32>
      %1780 = arith.subf %1773, %1772 : vector<1x1xf32>
      %cst_305 = arith.constant 2.000000e+00 : f32
      %1781 = vector.broadcast %cst_305 : f32 to vector<1x1xf32>
      %1782 = arith.mulf %1781, %1779 : vector<1x1xf32>
      %1783 = arith.divf %1780, %1782 : vector<1x1xf32>
      %cst_306 = arith.constant 0.000000e+00 : f32
      %1784 = vector.broadcast %cst_306 : f32 to vector<1x1xf32>
      %1785 = arith.cmpf oge, %1783, %1784 : vector<1x1xf32>
      %cst_307 = arith.constant 1.000000e+00 : f32
      %cst_308 = arith.constant -1.000000e+00 : f32
      %1786 = vector.broadcast %cst_307 : f32 to vector<1x1xf32>
      %1787 = vector.broadcast %cst_308 : f32 to vector<1x1xf32>
      %1788 = arith.select %1785, %1786, %1787 : vector<1x1xi1>, vector<1x1xf32>
      %1789 = math.absf %1783 : vector<1x1xf32>
      %1790 = arith.mulf %1783, %1783 : vector<1x1xf32>
      %cst_309 = arith.constant 1.000000e+00 : f32
      %1791 = vector.broadcast %cst_309 : f32 to vector<1x1xf32>
      %1792 = arith.addf %1791, %1790 : vector<1x1xf32>
      %1793 = math.sqrt %1792 : vector<1x1xf32>
      %1794 = arith.addf %1789, %1793 : vector<1x1xf32>
      %1795 = arith.divf %1788, %1794 : vector<1x1xf32>
      %1796 = arith.mulf %1795, %1795 : vector<1x1xf32>
      %cst_310 = arith.constant 1.000000e+00 : f32
      %1797 = vector.broadcast %cst_310 : f32 to vector<1x1xf32>
      %1798 = arith.addf %1797, %1796 : vector<1x1xf32>
      %1799 = math.rsqrt %1798 : vector<1x1xf32>
      %1800 = arith.mulf %1795, %1799 : vector<1x1xf32>
      %cst_311 = arith.constant 1.000000e+00 : f32
      %1801 = vector.broadcast %cst_311 : f32 to vector<1x1xf32>
      %1802 = arith.select %1777, %1799, %1801 : vector<1x1xi1>, vector<1x1xf32>
      %cst_312 = arith.constant 0.000000e+00 : f32
      %1803 = vector.broadcast %cst_312 : f32 to vector<1x1xf32>
      %1804 = arith.select %1777, %1800, %1803 : vector<1x1xi1>, vector<1x1xf32>
      %1805 = tpu.iota {dimensions = array<i32: 0>} : vector<8x8xi32>
      %1806 = tpu.iota {dimensions = array<i32: 1>} : vector<8x8xi32>
      %1807 = vector.extract_strided_slice %1771 {offsets = [3, 0], sizes = [1, 8], strides = [1, 1]} : vector<8x8xf32> to vector<1x8xf32>
      %1808 = vector.extract_strided_slice %1771 {offsets = [7, 0], sizes = [1, 8], strides = [1, 1]} : vector<8x8xf32> to vector<1x8xf32>
      %c3_i32_313 = arith.constant 3 : i32
      %1809 = vector.broadcast %c3_i32_313 : i32 to vector<8x8xi32>
      %1810 = arith.cmpi eq, %1805, %1809 : vector<8x8xi32>
      %1811 = vector.broadcast %1802 : vector<1x1xf32> to vector<1x8xf32>
      %1812 = arith.mulf %1811, %1807 : vector<1x8xf32>
      %1813 = vector.broadcast %1804 : vector<1x1xf32> to vector<1x8xf32>
      %1814 = arith.mulf %1813, %1808 : vector<1x8xf32>
      %1815 = arith.subf %1812, %1814 : vector<1x8xf32>
      %c7_i32_314 = arith.constant 7 : i32
      %1816 = vector.broadcast %c7_i32_314 : i32 to vector<8x8xi32>
      %1817 = arith.cmpi eq, %1805, %1816 : vector<8x8xi32>
      %1818 = vector.broadcast %1804 : vector<1x1xf32> to vector<1x8xf32>
      %1819 = arith.mulf %1818, %1807 : vector<1x8xf32>
      %1820 = vector.broadcast %1802 : vector<1x1xf32> to vector<1x8xf32>
      %1821 = arith.mulf %1820, %1808 : vector<1x8xf32>
      %1822 = arith.addf %1819, %1821 : vector<1x8xf32>
      %1823 = vector.shape_cast %1822 : vector<1x8xf32> to vector<1x8xf32>
      %1824 = vector.broadcast %1823 : vector<1x8xf32> to vector<8x8xf32>
      %1825 = arith.select %1817, %1824, %1771 : vector<8x8xi1>, vector<8x8xf32>
      %1826 = vector.shape_cast %1815 : vector<1x8xf32> to vector<1x8xf32>
      %1827 = vector.broadcast %1826 : vector<1x8xf32> to vector<8x8xf32>
      %1828 = arith.select %1810, %1827, %1825 : vector<8x8xi1>, vector<8x8xf32>
      %1829 = vector.extract_strided_slice %1828 {offsets = [0, 3], sizes = [8, 1], strides = [1, 1]} : vector<8x8xf32> to vector<8x1xf32>
      %1830 = vector.extract_strided_slice %1828 {offsets = [0, 7], sizes = [8, 1], strides = [1, 1]} : vector<8x8xf32> to vector<8x1xf32>
      %c3_i32_315 = arith.constant 3 : i32
      %1831 = vector.broadcast %c3_i32_315 : i32 to vector<8x8xi32>
      %1832 = arith.cmpi eq, %1806, %1831 : vector<8x8xi32>
      %1833 = vector.broadcast %1802 : vector<1x1xf32> to vector<8x1xf32>
      %1834 = arith.mulf %1833, %1829 : vector<8x1xf32>
      %1835 = vector.broadcast %1804 : vector<1x1xf32> to vector<8x1xf32>
      %1836 = arith.mulf %1835, %1830 : vector<8x1xf32>
      %1837 = arith.subf %1834, %1836 : vector<8x1xf32>
      %c7_i32_316 = arith.constant 7 : i32
      %1838 = vector.broadcast %c7_i32_316 : i32 to vector<8x8xi32>
      %1839 = arith.cmpi eq, %1806, %1838 : vector<8x8xi32>
      %1840 = vector.broadcast %1804 : vector<1x1xf32> to vector<8x1xf32>
      %1841 = arith.mulf %1840, %1829 : vector<8x1xf32>
      %1842 = vector.broadcast %1802 : vector<1x1xf32> to vector<8x1xf32>
      %1843 = arith.mulf %1842, %1830 : vector<8x1xf32>
      %1844 = arith.addf %1841, %1843 : vector<8x1xf32>
      %1845 = vector.shape_cast %1844 : vector<8x1xf32> to vector<8x1xf32>
      %1846 = vector.broadcast %1845 : vector<8x1xf32> to vector<8x8xf32>
      %1847 = arith.select %1839, %1846, %1828 : vector<8x8xi1>, vector<8x8xf32>
      %1848 = vector.shape_cast %1837 : vector<8x1xf32> to vector<8x1xf32>
      %1849 = vector.broadcast %1848 : vector<8x1xf32> to vector<8x8xf32>
      %1850 = arith.select %1832, %1849, %1847 : vector<8x8xi1>, vector<8x8xf32>
      %1851 = vector.extract_strided_slice %1850 {offsets = [4, 4], sizes = [1, 1], strides = [1, 1]} : vector<8x8xf32> to vector<1x1xf32>
      %1852 = vector.extract_strided_slice %1850 {offsets = [5, 5], sizes = [1, 1], strides = [1, 1]} : vector<8x8xf32> to vector<1x1xf32>
      %1853 = vector.extract_strided_slice %1850 {offsets = [4, 5], sizes = [1, 1], strides = [1, 1]} : vector<8x8xf32> to vector<1x1xf32>
      %1854 = math.absf %1853 : vector<1x1xf32>
      %cst_317 = arith.constant 9.99999996E-13 : f32
      %1855 = vector.broadcast %cst_317 : f32 to vector<1x1xf32>
      %1856 = arith.cmpf ogt, %1854, %1855 : vector<1x1xf32>
      %cst_318 = arith.constant 1.000000e+00 : f32
      %1857 = vector.broadcast %cst_318 : f32 to vector<1x1xf32>
      %1858 = arith.select %1856, %1853, %1857 : vector<1x1xi1>, vector<1x1xf32>
      %1859 = arith.subf %1852, %1851 : vector<1x1xf32>
      %cst_319 = arith.constant 2.000000e+00 : f32
      %1860 = vector.broadcast %cst_319 : f32 to vector<1x1xf32>
      %1861 = arith.mulf %1860, %1858 : vector<1x1xf32>
      %1862 = arith.divf %1859, %1861 : vector<1x1xf32>
      %cst_320 = arith.constant 0.000000e+00 : f32
      %1863 = vector.broadcast %cst_320 : f32 to vector<1x1xf32>
      %1864 = arith.cmpf oge, %1862, %1863 : vector<1x1xf32>
      %cst_321 = arith.constant 1.000000e+00 : f32
      %cst_322 = arith.constant -1.000000e+00 : f32
      %1865 = vector.broadcast %cst_321 : f32 to vector<1x1xf32>
      %1866 = vector.broadcast %cst_322 : f32 to vector<1x1xf32>
      %1867 = arith.select %1864, %1865, %1866 : vector<1x1xi1>, vector<1x1xf32>
      %1868 = math.absf %1862 : vector<1x1xf32>
      %1869 = arith.mulf %1862, %1862 : vector<1x1xf32>
      %cst_323 = arith.constant 1.000000e+00 : f32
      %1870 = vector.broadcast %cst_323 : f32 to vector<1x1xf32>
      %1871 = arith.addf %1870, %1869 : vector<1x1xf32>
      %1872 = math.sqrt %1871 : vector<1x1xf32>
      %1873 = arith.addf %1868, %1872 : vector<1x1xf32>
      %1874 = arith.divf %1867, %1873 : vector<1x1xf32>
      %1875 = arith.mulf %1874, %1874 : vector<1x1xf32>
      %cst_324 = arith.constant 1.000000e+00 : f32
      %1876 = vector.broadcast %cst_324 : f32 to vector<1x1xf32>
      %1877 = arith.addf %1876, %1875 : vector<1x1xf32>
      %1878 = math.rsqrt %1877 : vector<1x1xf32>
      %1879 = arith.mulf %1874, %1878 : vector<1x1xf32>
      %cst_325 = arith.constant 1.000000e+00 : f32
      %1880 = vector.broadcast %cst_325 : f32 to vector<1x1xf32>
      %1881 = arith.select %1856, %1878, %1880 : vector<1x1xi1>, vector<1x1xf32>
      %cst_326 = arith.constant 0.000000e+00 : f32
      %1882 = vector.broadcast %cst_326 : f32 to vector<1x1xf32>
      %1883 = arith.select %1856, %1879, %1882 : vector<1x1xi1>, vector<1x1xf32>
      %1884 = tpu.iota {dimensions = array<i32: 0>} : vector<8x8xi32>
      %1885 = tpu.iota {dimensions = array<i32: 1>} : vector<8x8xi32>
      %1886 = vector.extract_strided_slice %1850 {offsets = [4, 0], sizes = [1, 8], strides = [1, 1]} : vector<8x8xf32> to vector<1x8xf32>
      %1887 = vector.extract_strided_slice %1850 {offsets = [5, 0], sizes = [1, 8], strides = [1, 1]} : vector<8x8xf32> to vector<1x8xf32>
      %c4_i32_327 = arith.constant 4 : i32
      %1888 = vector.broadcast %c4_i32_327 : i32 to vector<8x8xi32>
      %1889 = arith.cmpi eq, %1884, %1888 : vector<8x8xi32>
      %1890 = vector.broadcast %1881 : vector<1x1xf32> to vector<1x8xf32>
      %1891 = arith.mulf %1890, %1886 : vector<1x8xf32>
      %1892 = vector.broadcast %1883 : vector<1x1xf32> to vector<1x8xf32>
      %1893 = arith.mulf %1892, %1887 : vector<1x8xf32>
      %1894 = arith.subf %1891, %1893 : vector<1x8xf32>
      %c5_i32_328 = arith.constant 5 : i32
      %1895 = vector.broadcast %c5_i32_328 : i32 to vector<8x8xi32>
      %1896 = arith.cmpi eq, %1884, %1895 : vector<8x8xi32>
      %1897 = vector.broadcast %1883 : vector<1x1xf32> to vector<1x8xf32>
      %1898 = arith.mulf %1897, %1886 : vector<1x8xf32>
      %1899 = vector.broadcast %1881 : vector<1x1xf32> to vector<1x8xf32>
      %1900 = arith.mulf %1899, %1887 : vector<1x8xf32>
      %1901 = arith.addf %1898, %1900 : vector<1x8xf32>
      %1902 = vector.shape_cast %1901 : vector<1x8xf32> to vector<1x8xf32>
      %1903 = vector.broadcast %1902 : vector<1x8xf32> to vector<8x8xf32>
      %1904 = arith.select %1896, %1903, %1850 : vector<8x8xi1>, vector<8x8xf32>
      %1905 = vector.shape_cast %1894 : vector<1x8xf32> to vector<1x8xf32>
      %1906 = vector.broadcast %1905 : vector<1x8xf32> to vector<8x8xf32>
      %1907 = arith.select %1889, %1906, %1904 : vector<8x8xi1>, vector<8x8xf32>
      %1908 = vector.extract_strided_slice %1907 {offsets = [0, 4], sizes = [8, 1], strides = [1, 1]} : vector<8x8xf32> to vector<8x1xf32>
      %1909 = vector.extract_strided_slice %1907 {offsets = [0, 5], sizes = [8, 1], strides = [1, 1]} : vector<8x8xf32> to vector<8x1xf32>
      %c4_i32_329 = arith.constant 4 : i32
      %1910 = vector.broadcast %c4_i32_329 : i32 to vector<8x8xi32>
      %1911 = arith.cmpi eq, %1885, %1910 : vector<8x8xi32>
      %1912 = vector.broadcast %1881 : vector<1x1xf32> to vector<8x1xf32>
      %1913 = arith.mulf %1912, %1908 : vector<8x1xf32>
      %1914 = vector.broadcast %1883 : vector<1x1xf32> to vector<8x1xf32>
      %1915 = arith.mulf %1914, %1909 : vector<8x1xf32>
      %1916 = arith.subf %1913, %1915 : vector<8x1xf32>
      %c5_i32_330 = arith.constant 5 : i32
      %1917 = vector.broadcast %c5_i32_330 : i32 to vector<8x8xi32>
      %1918 = arith.cmpi eq, %1885, %1917 : vector<8x8xi32>
      %1919 = vector.broadcast %1883 : vector<1x1xf32> to vector<8x1xf32>
      %1920 = arith.mulf %1919, %1908 : vector<8x1xf32>
      %1921 = vector.broadcast %1881 : vector<1x1xf32> to vector<8x1xf32>
      %1922 = arith.mulf %1921, %1909 : vector<8x1xf32>
      %1923 = arith.addf %1920, %1922 : vector<8x1xf32>
      %1924 = vector.shape_cast %1923 : vector<8x1xf32> to vector<8x1xf32>
      %1925 = vector.broadcast %1924 : vector<8x1xf32> to vector<8x8xf32>
      %1926 = arith.select %1918, %1925, %1907 : vector<8x8xi1>, vector<8x8xf32>
      %1927 = vector.shape_cast %1916 : vector<8x1xf32> to vector<8x1xf32>
      %1928 = vector.broadcast %1927 : vector<8x1xf32> to vector<8x8xf32>
      %1929 = arith.select %1911, %1928, %1926 : vector<8x8xi1>, vector<8x8xf32>
      %1930 = vector.extract_strided_slice %1929 {offsets = [4, 4], sizes = [1, 1], strides = [1, 1]} : vector<8x8xf32> to vector<1x1xf32>
      %1931 = vector.extract_strided_slice %1929 {offsets = [6, 6], sizes = [1, 1], strides = [1, 1]} : vector<8x8xf32> to vector<1x1xf32>
      %1932 = vector.extract_strided_slice %1929 {offsets = [4, 6], sizes = [1, 1], strides = [1, 1]} : vector<8x8xf32> to vector<1x1xf32>
      %1933 = math.absf %1932 : vector<1x1xf32>
      %cst_331 = arith.constant 9.99999996E-13 : f32
      %1934 = vector.broadcast %cst_331 : f32 to vector<1x1xf32>
      %1935 = arith.cmpf ogt, %1933, %1934 : vector<1x1xf32>
      %cst_332 = arith.constant 1.000000e+00 : f32
      %1936 = vector.broadcast %cst_332 : f32 to vector<1x1xf32>
      %1937 = arith.select %1935, %1932, %1936 : vector<1x1xi1>, vector<1x1xf32>
      %1938 = arith.subf %1931, %1930 : vector<1x1xf32>
      %cst_333 = arith.constant 2.000000e+00 : f32
      %1939 = vector.broadcast %cst_333 : f32 to vector<1x1xf32>
      %1940 = arith.mulf %1939, %1937 : vector<1x1xf32>
      %1941 = arith.divf %1938, %1940 : vector<1x1xf32>
      %cst_334 = arith.constant 0.000000e+00 : f32
      %1942 = vector.broadcast %cst_334 : f32 to vector<1x1xf32>
      %1943 = arith.cmpf oge, %1941, %1942 : vector<1x1xf32>
      %cst_335 = arith.constant 1.000000e+00 : f32
      %cst_336 = arith.constant -1.000000e+00 : f32
      %1944 = vector.broadcast %cst_335 : f32 to vector<1x1xf32>
      %1945 = vector.broadcast %cst_336 : f32 to vector<1x1xf32>
      %1946 = arith.select %1943, %1944, %1945 : vector<1x1xi1>, vector<1x1xf32>
      %1947 = math.absf %1941 : vector<1x1xf32>
      %1948 = arith.mulf %1941, %1941 : vector<1x1xf32>
      %cst_337 = arith.constant 1.000000e+00 : f32
      %1949 = vector.broadcast %cst_337 : f32 to vector<1x1xf32>
      %1950 = arith.addf %1949, %1948 : vector<1x1xf32>
      %1951 = math.sqrt %1950 : vector<1x1xf32>
      %1952 = arith.addf %1947, %1951 : vector<1x1xf32>
      %1953 = arith.divf %1946, %1952 : vector<1x1xf32>
      %1954 = arith.mulf %1953, %1953 : vector<1x1xf32>
      %cst_338 = arith.constant 1.000000e+00 : f32
      %1955 = vector.broadcast %cst_338 : f32 to vector<1x1xf32>
      %1956 = arith.addf %1955, %1954 : vector<1x1xf32>
      %1957 = math.rsqrt %1956 : vector<1x1xf32>
      %1958 = arith.mulf %1953, %1957 : vector<1x1xf32>
      %cst_339 = arith.constant 1.000000e+00 : f32
      %1959 = vector.broadcast %cst_339 : f32 to vector<1x1xf32>
      %1960 = arith.select %1935, %1957, %1959 : vector<1x1xi1>, vector<1x1xf32>
      %cst_340 = arith.constant 0.000000e+00 : f32
      %1961 = vector.broadcast %cst_340 : f32 to vector<1x1xf32>
      %1962 = arith.select %1935, %1958, %1961 : vector<1x1xi1>, vector<1x1xf32>
      %1963 = tpu.iota {dimensions = array<i32: 0>} : vector<8x8xi32>
      %1964 = tpu.iota {dimensions = array<i32: 1>} : vector<8x8xi32>
      %1965 = vector.extract_strided_slice %1929 {offsets = [4, 0], sizes = [1, 8], strides = [1, 1]} : vector<8x8xf32> to vector<1x8xf32>
      %1966 = vector.extract_strided_slice %1929 {offsets = [6, 0], sizes = [1, 8], strides = [1, 1]} : vector<8x8xf32> to vector<1x8xf32>
      %c4_i32_341 = arith.constant 4 : i32
      %1967 = vector.broadcast %c4_i32_341 : i32 to vector<8x8xi32>
      %1968 = arith.cmpi eq, %1963, %1967 : vector<8x8xi32>
      %1969 = vector.broadcast %1960 : vector<1x1xf32> to vector<1x8xf32>
      %1970 = arith.mulf %1969, %1965 : vector<1x8xf32>
      %1971 = vector.broadcast %1962 : vector<1x1xf32> to vector<1x8xf32>
      %1972 = arith.mulf %1971, %1966 : vector<1x8xf32>
      %1973 = arith.subf %1970, %1972 : vector<1x8xf32>
      %c6_i32_342 = arith.constant 6 : i32
      %1974 = vector.broadcast %c6_i32_342 : i32 to vector<8x8xi32>
      %1975 = arith.cmpi eq, %1963, %1974 : vector<8x8xi32>
      %1976 = vector.broadcast %1962 : vector<1x1xf32> to vector<1x8xf32>
      %1977 = arith.mulf %1976, %1965 : vector<1x8xf32>
      %1978 = vector.broadcast %1960 : vector<1x1xf32> to vector<1x8xf32>
      %1979 = arith.mulf %1978, %1966 : vector<1x8xf32>
      %1980 = arith.addf %1977, %1979 : vector<1x8xf32>
      %1981 = vector.shape_cast %1980 : vector<1x8xf32> to vector<1x8xf32>
      %1982 = vector.broadcast %1981 : vector<1x8xf32> to vector<8x8xf32>
      %1983 = arith.select %1975, %1982, %1929 : vector<8x8xi1>, vector<8x8xf32>
      %1984 = vector.shape_cast %1973 : vector<1x8xf32> to vector<1x8xf32>
      %1985 = vector.broadcast %1984 : vector<1x8xf32> to vector<8x8xf32>
      %1986 = arith.select %1968, %1985, %1983 : vector<8x8xi1>, vector<8x8xf32>
      %1987 = vector.extract_strided_slice %1986 {offsets = [0, 4], sizes = [8, 1], strides = [1, 1]} : vector<8x8xf32> to vector<8x1xf32>
      %1988 = vector.extract_strided_slice %1986 {offsets = [0, 6], sizes = [8, 1], strides = [1, 1]} : vector<8x8xf32> to vector<8x1xf32>
      %c4_i32_343 = arith.constant 4 : i32
      %1989 = vector.broadcast %c4_i32_343 : i32 to vector<8x8xi32>
      %1990 = arith.cmpi eq, %1964, %1989 : vector<8x8xi32>
      %1991 = vector.broadcast %1960 : vector<1x1xf32> to vector<8x1xf32>
      %1992 = arith.mulf %1991, %1987 : vector<8x1xf32>
      %1993 = vector.broadcast %1962 : vector<1x1xf32> to vector<8x1xf32>
      %1994 = arith.mulf %1993, %1988 : vector<8x1xf32>
      %1995 = arith.subf %1992, %1994 : vector<8x1xf32>
      %c6_i32_344 = arith.constant 6 : i32
      %1996 = vector.broadcast %c6_i32_344 : i32 to vector<8x8xi32>
      %1997 = arith.cmpi eq, %1964, %1996 : vector<8x8xi32>
      %1998 = vector.broadcast %1962 : vector<1x1xf32> to vector<8x1xf32>
      %1999 = arith.mulf %1998, %1987 : vector<8x1xf32>
      %2000 = vector.broadcast %1960 : vector<1x1xf32> to vector<8x1xf32>
      %2001 = arith.mulf %2000, %1988 : vector<8x1xf32>
      %2002 = arith.addf %1999, %2001 : vector<8x1xf32>
      %2003 = vector.shape_cast %2002 : vector<8x1xf32> to vector<8x1xf32>
      %2004 = vector.broadcast %2003 : vector<8x1xf32> to vector<8x8xf32>
      %2005 = arith.select %1997, %2004, %1986 : vector<8x8xi1>, vector<8x8xf32>
      %2006 = vector.shape_cast %1995 : vector<8x1xf32> to vector<8x1xf32>
      %2007 = vector.broadcast %2006 : vector<8x1xf32> to vector<8x8xf32>
      %2008 = arith.select %1990, %2007, %2005 : vector<8x8xi1>, vector<8x8xf32>
      %2009 = vector.extract_strided_slice %2008 {offsets = [4, 4], sizes = [1, 1], strides = [1, 1]} : vector<8x8xf32> to vector<1x1xf32>
      %2010 = vector.extract_strided_slice %2008 {offsets = [7, 7], sizes = [1, 1], strides = [1, 1]} : vector<8x8xf32> to vector<1x1xf32>
      %2011 = vector.extract_strided_slice %2008 {offsets = [4, 7], sizes = [1, 1], strides = [1, 1]} : vector<8x8xf32> to vector<1x1xf32>
      %2012 = math.absf %2011 : vector<1x1xf32>
      %cst_345 = arith.constant 9.99999996E-13 : f32
      %2013 = vector.broadcast %cst_345 : f32 to vector<1x1xf32>
      %2014 = arith.cmpf ogt, %2012, %2013 : vector<1x1xf32>
      %cst_346 = arith.constant 1.000000e+00 : f32
      %2015 = vector.broadcast %cst_346 : f32 to vector<1x1xf32>
      %2016 = arith.select %2014, %2011, %2015 : vector<1x1xi1>, vector<1x1xf32>
      %2017 = arith.subf %2010, %2009 : vector<1x1xf32>
      %cst_347 = arith.constant 2.000000e+00 : f32
      %2018 = vector.broadcast %cst_347 : f32 to vector<1x1xf32>
      %2019 = arith.mulf %2018, %2016 : vector<1x1xf32>
      %2020 = arith.divf %2017, %2019 : vector<1x1xf32>
      %cst_348 = arith.constant 0.000000e+00 : f32
      %2021 = vector.broadcast %cst_348 : f32 to vector<1x1xf32>
      %2022 = arith.cmpf oge, %2020, %2021 : vector<1x1xf32>
      %cst_349 = arith.constant 1.000000e+00 : f32
      %cst_350 = arith.constant -1.000000e+00 : f32
      %2023 = vector.broadcast %cst_349 : f32 to vector<1x1xf32>
      %2024 = vector.broadcast %cst_350 : f32 to vector<1x1xf32>
      %2025 = arith.select %2022, %2023, %2024 : vector<1x1xi1>, vector<1x1xf32>
      %2026 = math.absf %2020 : vector<1x1xf32>
      %2027 = arith.mulf %2020, %2020 : vector<1x1xf32>
      %cst_351 = arith.constant 1.000000e+00 : f32
      %2028 = vector.broadcast %cst_351 : f32 to vector<1x1xf32>
      %2029 = arith.addf %2028, %2027 : vector<1x1xf32>
      %2030 = math.sqrt %2029 : vector<1x1xf32>
      %2031 = arith.addf %2026, %2030 : vector<1x1xf32>
      %2032 = arith.divf %2025, %2031 : vector<1x1xf32>
      %2033 = arith.mulf %2032, %2032 : vector<1x1xf32>
      %cst_352 = arith.constant 1.000000e+00 : f32
      %2034 = vector.broadcast %cst_352 : f32 to vector<1x1xf32>
      %2035 = arith.addf %2034, %2033 : vector<1x1xf32>
      %2036 = math.rsqrt %2035 : vector<1x1xf32>
      %2037 = arith.mulf %2032, %2036 : vector<1x1xf32>
      %cst_353 = arith.constant 1.000000e+00 : f32
      %2038 = vector.broadcast %cst_353 : f32 to vector<1x1xf32>
      %2039 = arith.select %2014, %2036, %2038 : vector<1x1xi1>, vector<1x1xf32>
      %cst_354 = arith.constant 0.000000e+00 : f32
      %2040 = vector.broadcast %cst_354 : f32 to vector<1x1xf32>
      %2041 = arith.select %2014, %2037, %2040 : vector<1x1xi1>, vector<1x1xf32>
      %2042 = tpu.iota {dimensions = array<i32: 0>} : vector<8x8xi32>
      %2043 = tpu.iota {dimensions = array<i32: 1>} : vector<8x8xi32>
      %2044 = vector.extract_strided_slice %2008 {offsets = [4, 0], sizes = [1, 8], strides = [1, 1]} : vector<8x8xf32> to vector<1x8xf32>
      %2045 = vector.extract_strided_slice %2008 {offsets = [7, 0], sizes = [1, 8], strides = [1, 1]} : vector<8x8xf32> to vector<1x8xf32>
      %c4_i32_355 = arith.constant 4 : i32
      %2046 = vector.broadcast %c4_i32_355 : i32 to vector<8x8xi32>
      %2047 = arith.cmpi eq, %2042, %2046 : vector<8x8xi32>
      %2048 = vector.broadcast %2039 : vector<1x1xf32> to vector<1x8xf32>
      %2049 = arith.mulf %2048, %2044 : vector<1x8xf32>
      %2050 = vector.broadcast %2041 : vector<1x1xf32> to vector<1x8xf32>
      %2051 = arith.mulf %2050, %2045 : vector<1x8xf32>
      %2052 = arith.subf %2049, %2051 : vector<1x8xf32>
      %c7_i32_356 = arith.constant 7 : i32
      %2053 = vector.broadcast %c7_i32_356 : i32 to vector<8x8xi32>
      %2054 = arith.cmpi eq, %2042, %2053 : vector<8x8xi32>
      %2055 = vector.broadcast %2041 : vector<1x1xf32> to vector<1x8xf32>
      %2056 = arith.mulf %2055, %2044 : vector<1x8xf32>
      %2057 = vector.broadcast %2039 : vector<1x1xf32> to vector<1x8xf32>
      %2058 = arith.mulf %2057, %2045 : vector<1x8xf32>
      %2059 = arith.addf %2056, %2058 : vector<1x8xf32>
      %2060 = vector.shape_cast %2059 : vector<1x8xf32> to vector<1x8xf32>
      %2061 = vector.broadcast %2060 : vector<1x8xf32> to vector<8x8xf32>
      %2062 = arith.select %2054, %2061, %2008 : vector<8x8xi1>, vector<8x8xf32>
      %2063 = vector.shape_cast %2052 : vector<1x8xf32> to vector<1x8xf32>
      %2064 = vector.broadcast %2063 : vector<1x8xf32> to vector<8x8xf32>
      %2065 = arith.select %2047, %2064, %2062 : vector<8x8xi1>, vector<8x8xf32>
      %2066 = vector.extract_strided_slice %2065 {offsets = [0, 4], sizes = [8, 1], strides = [1, 1]} : vector<8x8xf32> to vector<8x1xf32>
      %2067 = vector.extract_strided_slice %2065 {offsets = [0, 7], sizes = [8, 1], strides = [1, 1]} : vector<8x8xf32> to vector<8x1xf32>
      %c4_i32_357 = arith.constant 4 : i32
      %2068 = vector.broadcast %c4_i32_357 : i32 to vector<8x8xi32>
      %2069 = arith.cmpi eq, %2043, %2068 : vector<8x8xi32>
      %2070 = vector.broadcast %2039 : vector<1x1xf32> to vector<8x1xf32>
      %2071 = arith.mulf %2070, %2066 : vector<8x1xf32>
      %2072 = vector.broadcast %2041 : vector<1x1xf32> to vector<8x1xf32>
      %2073 = arith.mulf %2072, %2067 : vector<8x1xf32>
      %2074 = arith.subf %2071, %2073 : vector<8x1xf32>
      %c7_i32_358 = arith.constant 7 : i32
      %2075 = vector.broadcast %c7_i32_358 : i32 to vector<8x8xi32>
      %2076 = arith.cmpi eq, %2043, %2075 : vector<8x8xi32>
      %2077 = vector.broadcast %2041 : vector<1x1xf32> to vector<8x1xf32>
      %2078 = arith.mulf %2077, %2066 : vector<8x1xf32>
      %2079 = vector.broadcast %2039 : vector<1x1xf32> to vector<8x1xf32>
      %2080 = arith.mulf %2079, %2067 : vector<8x1xf32>
      %2081 = arith.addf %2078, %2080 : vector<8x1xf32>
      %2082 = vector.shape_cast %2081 : vector<8x1xf32> to vector<8x1xf32>
      %2083 = vector.broadcast %2082 : vector<8x1xf32> to vector<8x8xf32>
      %2084 = arith.select %2076, %2083, %2065 : vector<8x8xi1>, vector<8x8xf32>
      %2085 = vector.shape_cast %2074 : vector<8x1xf32> to vector<8x1xf32>
      %2086 = vector.broadcast %2085 : vector<8x1xf32> to vector<8x8xf32>
      %2087 = arith.select %2069, %2086, %2084 : vector<8x8xi1>, vector<8x8xf32>
      %2088 = vector.extract_strided_slice %2087 {offsets = [5, 5], sizes = [1, 1], strides = [1, 1]} : vector<8x8xf32> to vector<1x1xf32>
      %2089 = vector.extract_strided_slice %2087 {offsets = [6, 6], sizes = [1, 1], strides = [1, 1]} : vector<8x8xf32> to vector<1x1xf32>
      %2090 = vector.extract_strided_slice %2087 {offsets = [5, 6], sizes = [1, 1], strides = [1, 1]} : vector<8x8xf32> to vector<1x1xf32>
      %2091 = math.absf %2090 : vector<1x1xf32>
      %cst_359 = arith.constant 9.99999996E-13 : f32
      %2092 = vector.broadcast %cst_359 : f32 to vector<1x1xf32>
      %2093 = arith.cmpf ogt, %2091, %2092 : vector<1x1xf32>
      %cst_360 = arith.constant 1.000000e+00 : f32
      %2094 = vector.broadcast %cst_360 : f32 to vector<1x1xf32>
      %2095 = arith.select %2093, %2090, %2094 : vector<1x1xi1>, vector<1x1xf32>
      %2096 = arith.subf %2089, %2088 : vector<1x1xf32>
      %cst_361 = arith.constant 2.000000e+00 : f32
      %2097 = vector.broadcast %cst_361 : f32 to vector<1x1xf32>
      %2098 = arith.mulf %2097, %2095 : vector<1x1xf32>
      %2099 = arith.divf %2096, %2098 : vector<1x1xf32>
      %cst_362 = arith.constant 0.000000e+00 : f32
      %2100 = vector.broadcast %cst_362 : f32 to vector<1x1xf32>
      %2101 = arith.cmpf oge, %2099, %2100 : vector<1x1xf32>
      %cst_363 = arith.constant 1.000000e+00 : f32
      %cst_364 = arith.constant -1.000000e+00 : f32
      %2102 = vector.broadcast %cst_363 : f32 to vector<1x1xf32>
      %2103 = vector.broadcast %cst_364 : f32 to vector<1x1xf32>
      %2104 = arith.select %2101, %2102, %2103 : vector<1x1xi1>, vector<1x1xf32>
      %2105 = math.absf %2099 : vector<1x1xf32>
      %2106 = arith.mulf %2099, %2099 : vector<1x1xf32>
      %cst_365 = arith.constant 1.000000e+00 : f32
      %2107 = vector.broadcast %cst_365 : f32 to vector<1x1xf32>
      %2108 = arith.addf %2107, %2106 : vector<1x1xf32>
      %2109 = math.sqrt %2108 : vector<1x1xf32>
      %2110 = arith.addf %2105, %2109 : vector<1x1xf32>
      %2111 = arith.divf %2104, %2110 : vector<1x1xf32>
      %2112 = arith.mulf %2111, %2111 : vector<1x1xf32>
      %cst_366 = arith.constant 1.000000e+00 : f32
      %2113 = vector.broadcast %cst_366 : f32 to vector<1x1xf32>
      %2114 = arith.addf %2113, %2112 : vector<1x1xf32>
      %2115 = math.rsqrt %2114 : vector<1x1xf32>
      %2116 = arith.mulf %2111, %2115 : vector<1x1xf32>
      %cst_367 = arith.constant 1.000000e+00 : f32
      %2117 = vector.broadcast %cst_367 : f32 to vector<1x1xf32>
      %2118 = arith.select %2093, %2115, %2117 : vector<1x1xi1>, vector<1x1xf32>
      %cst_368 = arith.constant 0.000000e+00 : f32
      %2119 = vector.broadcast %cst_368 : f32 to vector<1x1xf32>
      %2120 = arith.select %2093, %2116, %2119 : vector<1x1xi1>, vector<1x1xf32>
      %2121 = tpu.iota {dimensions = array<i32: 0>} : vector<8x8xi32>
      %2122 = tpu.iota {dimensions = array<i32: 1>} : vector<8x8xi32>
      %2123 = vector.extract_strided_slice %2087 {offsets = [5, 0], sizes = [1, 8], strides = [1, 1]} : vector<8x8xf32> to vector<1x8xf32>
      %2124 = vector.extract_strided_slice %2087 {offsets = [6, 0], sizes = [1, 8], strides = [1, 1]} : vector<8x8xf32> to vector<1x8xf32>
      %c5_i32_369 = arith.constant 5 : i32
      %2125 = vector.broadcast %c5_i32_369 : i32 to vector<8x8xi32>
      %2126 = arith.cmpi eq, %2121, %2125 : vector<8x8xi32>
      %2127 = vector.broadcast %2118 : vector<1x1xf32> to vector<1x8xf32>
      %2128 = arith.mulf %2127, %2123 : vector<1x8xf32>
      %2129 = vector.broadcast %2120 : vector<1x1xf32> to vector<1x8xf32>
      %2130 = arith.mulf %2129, %2124 : vector<1x8xf32>
      %2131 = arith.subf %2128, %2130 : vector<1x8xf32>
      %c6_i32_370 = arith.constant 6 : i32
      %2132 = vector.broadcast %c6_i32_370 : i32 to vector<8x8xi32>
      %2133 = arith.cmpi eq, %2121, %2132 : vector<8x8xi32>
      %2134 = vector.broadcast %2120 : vector<1x1xf32> to vector<1x8xf32>
      %2135 = arith.mulf %2134, %2123 : vector<1x8xf32>
      %2136 = vector.broadcast %2118 : vector<1x1xf32> to vector<1x8xf32>
      %2137 = arith.mulf %2136, %2124 : vector<1x8xf32>
      %2138 = arith.addf %2135, %2137 : vector<1x8xf32>
      %2139 = vector.shape_cast %2138 : vector<1x8xf32> to vector<1x8xf32>
      %2140 = vector.broadcast %2139 : vector<1x8xf32> to vector<8x8xf32>
      %2141 = arith.select %2133, %2140, %2087 : vector<8x8xi1>, vector<8x8xf32>
      %2142 = vector.shape_cast %2131 : vector<1x8xf32> to vector<1x8xf32>
      %2143 = vector.broadcast %2142 : vector<1x8xf32> to vector<8x8xf32>
      %2144 = arith.select %2126, %2143, %2141 : vector<8x8xi1>, vector<8x8xf32>
      %2145 = vector.extract_strided_slice %2144 {offsets = [0, 5], sizes = [8, 1], strides = [1, 1]} : vector<8x8xf32> to vector<8x1xf32>
      %2146 = vector.extract_strided_slice %2144 {offsets = [0, 6], sizes = [8, 1], strides = [1, 1]} : vector<8x8xf32> to vector<8x1xf32>
      %c5_i32_371 = arith.constant 5 : i32
      %2147 = vector.broadcast %c5_i32_371 : i32 to vector<8x8xi32>
      %2148 = arith.cmpi eq, %2122, %2147 : vector<8x8xi32>
      %2149 = vector.broadcast %2118 : vector<1x1xf32> to vector<8x1xf32>
      %2150 = arith.mulf %2149, %2145 : vector<8x1xf32>
      %2151 = vector.broadcast %2120 : vector<1x1xf32> to vector<8x1xf32>
      %2152 = arith.mulf %2151, %2146 : vector<8x1xf32>
      %2153 = arith.subf %2150, %2152 : vector<8x1xf32>
      %c6_i32_372 = arith.constant 6 : i32
      %2154 = vector.broadcast %c6_i32_372 : i32 to vector<8x8xi32>
      %2155 = arith.cmpi eq, %2122, %2154 : vector<8x8xi32>
      %2156 = vector.broadcast %2120 : vector<1x1xf32> to vector<8x1xf32>
      %2157 = arith.mulf %2156, %2145 : vector<8x1xf32>
      %2158 = vector.broadcast %2118 : vector<1x1xf32> to vector<8x1xf32>
      %2159 = arith.mulf %2158, %2146 : vector<8x1xf32>
      %2160 = arith.addf %2157, %2159 : vector<8x1xf32>
      %2161 = vector.shape_cast %2160 : vector<8x1xf32> to vector<8x1xf32>
      %2162 = vector.broadcast %2161 : vector<8x1xf32> to vector<8x8xf32>
      %2163 = arith.select %2155, %2162, %2144 : vector<8x8xi1>, vector<8x8xf32>
      %2164 = vector.shape_cast %2153 : vector<8x1xf32> to vector<8x1xf32>
      %2165 = vector.broadcast %2164 : vector<8x1xf32> to vector<8x8xf32>
      %2166 = arith.select %2148, %2165, %2163 : vector<8x8xi1>, vector<8x8xf32>
      %2167 = vector.extract_strided_slice %2166 {offsets = [5, 5], sizes = [1, 1], strides = [1, 1]} : vector<8x8xf32> to vector<1x1xf32>
      %2168 = vector.extract_strided_slice %2166 {offsets = [7, 7], sizes = [1, 1], strides = [1, 1]} : vector<8x8xf32> to vector<1x1xf32>
      %2169 = vector.extract_strided_slice %2166 {offsets = [5, 7], sizes = [1, 1], strides = [1, 1]} : vector<8x8xf32> to vector<1x1xf32>
      %2170 = math.absf %2169 : vector<1x1xf32>
      %cst_373 = arith.constant 9.99999996E-13 : f32
      %2171 = vector.broadcast %cst_373 : f32 to vector<1x1xf32>
      %2172 = arith.cmpf ogt, %2170, %2171 : vector<1x1xf32>
      %cst_374 = arith.constant 1.000000e+00 : f32
      %2173 = vector.broadcast %cst_374 : f32 to vector<1x1xf32>
      %2174 = arith.select %2172, %2169, %2173 : vector<1x1xi1>, vector<1x1xf32>
      %2175 = arith.subf %2168, %2167 : vector<1x1xf32>
      %cst_375 = arith.constant 2.000000e+00 : f32
      %2176 = vector.broadcast %cst_375 : f32 to vector<1x1xf32>
      %2177 = arith.mulf %2176, %2174 : vector<1x1xf32>
      %2178 = arith.divf %2175, %2177 : vector<1x1xf32>
      %cst_376 = arith.constant 0.000000e+00 : f32
      %2179 = vector.broadcast %cst_376 : f32 to vector<1x1xf32>
      %2180 = arith.cmpf oge, %2178, %2179 : vector<1x1xf32>
      %cst_377 = arith.constant 1.000000e+00 : f32
      %cst_378 = arith.constant -1.000000e+00 : f32
      %2181 = vector.broadcast %cst_377 : f32 to vector<1x1xf32>
      %2182 = vector.broadcast %cst_378 : f32 to vector<1x1xf32>
      %2183 = arith.select %2180, %2181, %2182 : vector<1x1xi1>, vector<1x1xf32>
      %2184 = math.absf %2178 : vector<1x1xf32>
      %2185 = arith.mulf %2178, %2178 : vector<1x1xf32>
      %cst_379 = arith.constant 1.000000e+00 : f32
      %2186 = vector.broadcast %cst_379 : f32 to vector<1x1xf32>
      %2187 = arith.addf %2186, %2185 : vector<1x1xf32>
      %2188 = math.sqrt %2187 : vector<1x1xf32>
      %2189 = arith.addf %2184, %2188 : vector<1x1xf32>
      %2190 = arith.divf %2183, %2189 : vector<1x1xf32>
      %2191 = arith.mulf %2190, %2190 : vector<1x1xf32>
      %cst_380 = arith.constant 1.000000e+00 : f32
      %2192 = vector.broadcast %cst_380 : f32 to vector<1x1xf32>
      %2193 = arith.addf %2192, %2191 : vector<1x1xf32>
      %2194 = math.rsqrt %2193 : vector<1x1xf32>
      %2195 = arith.mulf %2190, %2194 : vector<1x1xf32>
      %cst_381 = arith.constant 1.000000e+00 : f32
      %2196 = vector.broadcast %cst_381 : f32 to vector<1x1xf32>
      %2197 = arith.select %2172, %2194, %2196 : vector<1x1xi1>, vector<1x1xf32>
      %cst_382 = arith.constant 0.000000e+00 : f32
      %2198 = vector.broadcast %cst_382 : f32 to vector<1x1xf32>
      %2199 = arith.select %2172, %2195, %2198 : vector<1x1xi1>, vector<1x1xf32>
      %2200 = tpu.iota {dimensions = array<i32: 0>} : vector<8x8xi32>
      %2201 = tpu.iota {dimensions = array<i32: 1>} : vector<8x8xi32>
      %2202 = vector.extract_strided_slice %2166 {offsets = [5, 0], sizes = [1, 8], strides = [1, 1]} : vector<8x8xf32> to vector<1x8xf32>
      %2203 = vector.extract_strided_slice %2166 {offsets = [7, 0], sizes = [1, 8], strides = [1, 1]} : vector<8x8xf32> to vector<1x8xf32>
      %c5_i32_383 = arith.constant 5 : i32
      %2204 = vector.broadcast %c5_i32_383 : i32 to vector<8x8xi32>
      %2205 = arith.cmpi eq, %2200, %2204 : vector<8x8xi32>
      %2206 = vector.broadcast %2197 : vector<1x1xf32> to vector<1x8xf32>
      %2207 = arith.mulf %2206, %2202 : vector<1x8xf32>
      %2208 = vector.broadcast %2199 : vector<1x1xf32> to vector<1x8xf32>
      %2209 = arith.mulf %2208, %2203 : vector<1x8xf32>
      %2210 = arith.subf %2207, %2209 : vector<1x8xf32>
      %c7_i32_384 = arith.constant 7 : i32
      %2211 = vector.broadcast %c7_i32_384 : i32 to vector<8x8xi32>
      %2212 = arith.cmpi eq, %2200, %2211 : vector<8x8xi32>
      %2213 = vector.broadcast %2199 : vector<1x1xf32> to vector<1x8xf32>
      %2214 = arith.mulf %2213, %2202 : vector<1x8xf32>
      %2215 = vector.broadcast %2197 : vector<1x1xf32> to vector<1x8xf32>
      %2216 = arith.mulf %2215, %2203 : vector<1x8xf32>
      %2217 = arith.addf %2214, %2216 : vector<1x8xf32>
      %2218 = vector.shape_cast %2217 : vector<1x8xf32> to vector<1x8xf32>
      %2219 = vector.broadcast %2218 : vector<1x8xf32> to vector<8x8xf32>
      %2220 = arith.select %2212, %2219, %2166 : vector<8x8xi1>, vector<8x8xf32>
      %2221 = vector.shape_cast %2210 : vector<1x8xf32> to vector<1x8xf32>
      %2222 = vector.broadcast %2221 : vector<1x8xf32> to vector<8x8xf32>
      %2223 = arith.select %2205, %2222, %2220 : vector<8x8xi1>, vector<8x8xf32>
      %2224 = vector.extract_strided_slice %2223 {offsets = [0, 5], sizes = [8, 1], strides = [1, 1]} : vector<8x8xf32> to vector<8x1xf32>
      %2225 = vector.extract_strided_slice %2223 {offsets = [0, 7], sizes = [8, 1], strides = [1, 1]} : vector<8x8xf32> to vector<8x1xf32>
      %c5_i32_385 = arith.constant 5 : i32
      %2226 = vector.broadcast %c5_i32_385 : i32 to vector<8x8xi32>
      %2227 = arith.cmpi eq, %2201, %2226 : vector<8x8xi32>
      %2228 = vector.broadcast %2197 : vector<1x1xf32> to vector<8x1xf32>
      %2229 = arith.mulf %2228, %2224 : vector<8x1xf32>
      %2230 = vector.broadcast %2199 : vector<1x1xf32> to vector<8x1xf32>
      %2231 = arith.mulf %2230, %2225 : vector<8x1xf32>
      %2232 = arith.subf %2229, %2231 : vector<8x1xf32>
      %c7_i32_386 = arith.constant 7 : i32
      %2233 = vector.broadcast %c7_i32_386 : i32 to vector<8x8xi32>
      %2234 = arith.cmpi eq, %2201, %2233 : vector<8x8xi32>
      %2235 = vector.broadcast %2199 : vector<1x1xf32> to vector<8x1xf32>
      %2236 = arith.mulf %2235, %2224 : vector<8x1xf32>
      %2237 = vector.broadcast %2197 : vector<1x1xf32> to vector<8x1xf32>
      %2238 = arith.mulf %2237, %2225 : vector<8x1xf32>
      %2239 = arith.addf %2236, %2238 : vector<8x1xf32>
      %2240 = vector.shape_cast %2239 : vector<8x1xf32> to vector<8x1xf32>
      %2241 = vector.broadcast %2240 : vector<8x1xf32> to vector<8x8xf32>
      %2242 = arith.select %2234, %2241, %2223 : vector<8x8xi1>, vector<8x8xf32>
      %2243 = vector.shape_cast %2232 : vector<8x1xf32> to vector<8x1xf32>
      %2244 = vector.broadcast %2243 : vector<8x1xf32> to vector<8x8xf32>
      %2245 = arith.select %2227, %2244, %2242 : vector<8x8xi1>, vector<8x8xf32>
      %2246 = vector.extract_strided_slice %2245 {offsets = [6, 6], sizes = [1, 1], strides = [1, 1]} : vector<8x8xf32> to vector<1x1xf32>
      %2247 = vector.extract_strided_slice %2245 {offsets = [7, 7], sizes = [1, 1], strides = [1, 1]} : vector<8x8xf32> to vector<1x1xf32>
      %2248 = vector.extract_strided_slice %2245 {offsets = [6, 7], sizes = [1, 1], strides = [1, 1]} : vector<8x8xf32> to vector<1x1xf32>
      %2249 = math.absf %2248 : vector<1x1xf32>
      %cst_387 = arith.constant 9.99999996E-13 : f32
      %2250 = vector.broadcast %cst_387 : f32 to vector<1x1xf32>
      %2251 = arith.cmpf ogt, %2249, %2250 : vector<1x1xf32>
      %cst_388 = arith.constant 1.000000e+00 : f32
      %2252 = vector.broadcast %cst_388 : f32 to vector<1x1xf32>
      %2253 = arith.select %2251, %2248, %2252 : vector<1x1xi1>, vector<1x1xf32>
      %2254 = arith.subf %2247, %2246 : vector<1x1xf32>
      %cst_389 = arith.constant 2.000000e+00 : f32
      %2255 = vector.broadcast %cst_389 : f32 to vector<1x1xf32>
      %2256 = arith.mulf %2255, %2253 : vector<1x1xf32>
      %2257 = arith.divf %2254, %2256 : vector<1x1xf32>
      %cst_390 = arith.constant 0.000000e+00 : f32
      %2258 = vector.broadcast %cst_390 : f32 to vector<1x1xf32>
      %2259 = arith.cmpf oge, %2257, %2258 : vector<1x1xf32>
      %cst_391 = arith.constant 1.000000e+00 : f32
      %cst_392 = arith.constant -1.000000e+00 : f32
      %2260 = vector.broadcast %cst_391 : f32 to vector<1x1xf32>
      %2261 = vector.broadcast %cst_392 : f32 to vector<1x1xf32>
      %2262 = arith.select %2259, %2260, %2261 : vector<1x1xi1>, vector<1x1xf32>
      %2263 = math.absf %2257 : vector<1x1xf32>
      %2264 = arith.mulf %2257, %2257 : vector<1x1xf32>
      %cst_393 = arith.constant 1.000000e+00 : f32
      %2265 = vector.broadcast %cst_393 : f32 to vector<1x1xf32>
      %2266 = arith.addf %2265, %2264 : vector<1x1xf32>
      %2267 = math.sqrt %2266 : vector<1x1xf32>
      %2268 = arith.addf %2263, %2267 : vector<1x1xf32>
      %2269 = arith.divf %2262, %2268 : vector<1x1xf32>
      %2270 = arith.mulf %2269, %2269 : vector<1x1xf32>
      %cst_394 = arith.constant 1.000000e+00 : f32
      %2271 = vector.broadcast %cst_394 : f32 to vector<1x1xf32>
      %2272 = arith.addf %2271, %2270 : vector<1x1xf32>
      %2273 = math.rsqrt %2272 : vector<1x1xf32>
      %2274 = arith.mulf %2269, %2273 : vector<1x1xf32>
      %cst_395 = arith.constant 1.000000e+00 : f32
      %2275 = vector.broadcast %cst_395 : f32 to vector<1x1xf32>
      %2276 = arith.select %2251, %2273, %2275 : vector<1x1xi1>, vector<1x1xf32>
      %cst_396 = arith.constant 0.000000e+00 : f32
      %2277 = vector.broadcast %cst_396 : f32 to vector<1x1xf32>
      %2278 = arith.select %2251, %2274, %2277 : vector<1x1xi1>, vector<1x1xf32>
      %2279 = tpu.iota {dimensions = array<i32: 0>} : vector<8x8xi32>
      %2280 = tpu.iota {dimensions = array<i32: 1>} : vector<8x8xi32>
      %2281 = vector.extract_strided_slice %2245 {offsets = [6, 0], sizes = [1, 8], strides = [1, 1]} : vector<8x8xf32> to vector<1x8xf32>
      %2282 = vector.extract_strided_slice %2245 {offsets = [7, 0], sizes = [1, 8], strides = [1, 1]} : vector<8x8xf32> to vector<1x8xf32>
      %c6_i32_397 = arith.constant 6 : i32
      %2283 = vector.broadcast %c6_i32_397 : i32 to vector<8x8xi32>
      %2284 = arith.cmpi eq, %2279, %2283 : vector<8x8xi32>
      %2285 = vector.broadcast %2276 : vector<1x1xf32> to vector<1x8xf32>
      %2286 = arith.mulf %2285, %2281 : vector<1x8xf32>
      %2287 = vector.broadcast %2278 : vector<1x1xf32> to vector<1x8xf32>
      %2288 = arith.mulf %2287, %2282 : vector<1x8xf32>
      %2289 = arith.subf %2286, %2288 : vector<1x8xf32>
      %c7_i32_398 = arith.constant 7 : i32
      %2290 = vector.broadcast %c7_i32_398 : i32 to vector<8x8xi32>
      %2291 = arith.cmpi eq, %2279, %2290 : vector<8x8xi32>
      %2292 = vector.broadcast %2278 : vector<1x1xf32> to vector<1x8xf32>
      %2293 = arith.mulf %2292, %2281 : vector<1x8xf32>
      %2294 = vector.broadcast %2276 : vector<1x1xf32> to vector<1x8xf32>
      %2295 = arith.mulf %2294, %2282 : vector<1x8xf32>
      %2296 = arith.addf %2293, %2295 : vector<1x8xf32>
      %2297 = vector.shape_cast %2296 : vector<1x8xf32> to vector<1x8xf32>
      %2298 = vector.broadcast %2297 : vector<1x8xf32> to vector<8x8xf32>
      %2299 = arith.select %2291, %2298, %2245 : vector<8x8xi1>, vector<8x8xf32>
      %2300 = vector.shape_cast %2289 : vector<1x8xf32> to vector<1x8xf32>
      %2301 = vector.broadcast %2300 : vector<1x8xf32> to vector<8x8xf32>
      %2302 = arith.select %2284, %2301, %2299 : vector<8x8xi1>, vector<8x8xf32>
      %2303 = vector.extract_strided_slice %2302 {offsets = [0, 6], sizes = [8, 1], strides = [1, 1]} : vector<8x8xf32> to vector<8x1xf32>
      %2304 = vector.extract_strided_slice %2302 {offsets = [0, 7], sizes = [8, 1], strides = [1, 1]} : vector<8x8xf32> to vector<8x1xf32>
      %c6_i32_399 = arith.constant 6 : i32
      %2305 = vector.broadcast %c6_i32_399 : i32 to vector<8x8xi32>
      %2306 = arith.cmpi eq, %2280, %2305 : vector<8x8xi32>
      %2307 = vector.broadcast %2276 : vector<1x1xf32> to vector<8x1xf32>
      %2308 = arith.mulf %2307, %2303 : vector<8x1xf32>
      %2309 = vector.broadcast %2278 : vector<1x1xf32> to vector<8x1xf32>
      %2310 = arith.mulf %2309, %2304 : vector<8x1xf32>
      %2311 = arith.subf %2308, %2310 : vector<8x1xf32>
      %c7_i32_400 = arith.constant 7 : i32
      %2312 = vector.broadcast %c7_i32_400 : i32 to vector<8x8xi32>
      %2313 = arith.cmpi eq, %2280, %2312 : vector<8x8xi32>
      %2314 = vector.broadcast %2278 : vector<1x1xf32> to vector<8x1xf32>
      %2315 = arith.mulf %2314, %2303 : vector<8x1xf32>
      %2316 = vector.broadcast %2276 : vector<1x1xf32> to vector<8x1xf32>
      %2317 = arith.mulf %2316, %2304 : vector<8x1xf32>
      %2318 = arith.addf %2315, %2317 : vector<8x1xf32>
      %2319 = vector.shape_cast %2318 : vector<8x1xf32> to vector<8x1xf32>
      %2320 = vector.broadcast %2319 : vector<8x1xf32> to vector<8x8xf32>
      %2321 = arith.select %2313, %2320, %2302 : vector<8x8xi1>, vector<8x8xf32>
      %2322 = vector.shape_cast %2311 : vector<8x1xf32> to vector<8x1xf32>
      %2323 = vector.broadcast %2322 : vector<8x1xf32> to vector<8x8xf32>
      %2324 = arith.select %2306, %2323, %2321 : vector<8x8xi1>, vector<8x8xf32>
      scf.yield %2324 : vector<8x8xf32>
    }
    %cst_7 = arith.constant 0.000000e+00 : f32
    %84 = vector.broadcast %cst_7 : f32 to vector<8x8xf32>
    %85 = arith.select %75, %83, %84 : vector<8x8xi1>, vector<8x8xf32>
    %cst_8 = arith.constant dense<0.000000e+00> : vector<8xf32>
    %86 = vector.multi_reduction <add>, %85, %cst_8 [0] : vector<8x8xf32> to vector<8xf32>
    %87 = vector.shape_cast %86 : vector<8xf32> to vector<1x8xf32>
    %88 = math.absf %87 : vector<1x8xf32>
    %cst_9 = arith.constant dense<0.000000e+00> : vector<8xf32>
    %89 = vector.multi_reduction <add>, %85, %cst_9 [1] : vector<8x8xf32> to vector<8xf32>
    %90 = vector.shape_cast %89 : vector<8xf32> to vector<8x1xf32>
    %91 = math.absf %90 : vector<8x1xf32>
    %92 = vector.broadcast %91 : vector<8x1xf32> to vector<8x8xf32>
    %93 = vector.broadcast %88 : vector<1x8xf32> to vector<8x8xf32>
    %94 = arith.cmpf ogt, %92, %93 : vector<8x8xf32>
    %95 = vector.broadcast %91 : vector<8x1xf32> to vector<8x8xf32>
    %96 = vector.broadcast %88 : vector<1x8xf32> to vector<8x8xf32>
    %97 = arith.cmpf oeq, %95, %96 : vector<8x8xf32>
    %98 = arith.cmpi slt, %73, %74 : vector<8x8xi32>
    %99 = arith.andi %97, %98 : vector<8x8xi1>
    %100 = arith.ori %94, %99 : vector<8x8xi1>
    %101 = arith.extui %100 : vector<8x8xi1> to vector<8x8xi32>
    %cst_10 = arith.constant dense<0> : vector<8xi32>
    %102 = vector.multi_reduction <add>, %101, %cst_10 [0] : vector<8x8xi32> to vector<8xi32>
    %103 = vector.shape_cast %102 : vector<8xi32> to vector<1x8xi32>
    %104 = vector.broadcast %103 : vector<1x8xi32> to vector<8x8xi32>
    %105 = arith.cmpi eq, %104, %73 : vector<8x8xi32>
    %cst_11 = arith.constant 0.000000e+00 : f32
    %106 = vector.shape_cast %88 : vector<1x8xf32> to vector<1x8xf32>
    %107 = vector.broadcast %106 : vector<1x8xf32> to vector<8x8xf32>
    %108 = vector.broadcast %cst_11 : f32 to vector<8x8xf32>
    %109 = arith.select %105, %107, %108 : vector<8x8xi1>, vector<8x8xf32>
    %cst_12 = arith.constant dense<0.000000e+00> : vector<8xf32>
    %110 = vector.multi_reduction <add>, %109, %cst_12 [1] : vector<8x8xf32> to vector<8xf32>
    %111 = vector.shape_cast %110 : vector<8xf32> to vector<8x1xf32>
    %c0_13 = arith.constant 0 : index
    %c0_14 = arith.constant 0 : index
    %112 = vector.load %arg1[%c0_13, %c0_14] : memref<8x1xf32, #tpu.memory_space<vmem>>, vector<8x1xf32>
    tpu.vector_store %arg1[%c0_13, %c0_14], %111 {strides = array<i32>} : memref<8x1xf32, #tpu.memory_space<vmem>>, vector<8x1xf32>,
    return
  }
}

</mosaic_0001>

<llo_original>
// kernel: net_forward.1
$region0: #{net_forward.1}
  #allocation0 [shape = 'u32[]', space=smem, size = 0x4, offset = 0x4, fixed_abs, tag = 'smem constant byte address 0x4 - core index']
  #allocation1 [shape = 'u32[144,128]{1,0:T(1,128)}', space=vmem, size = 0x12000, scoped, tag = 'internal scratch']
  %s0 = inlined_call_operand.vmem [shape: f32[8,8], index: 0, kind: input, shape index: {}]
  %s1 = inlined_call_operand.vmem [shape: f32[8,1], index: 1, kind: output, shape index: {0}]
  %s2 = inlined_call_operand.hbm [shape: f32[8,8], index: 2, kind: output, shape index: {1}]
  %3 = xla_tuple %s1, %s2
  %s4 = sld [smem:[#allocation0]]
  $region29: #{net_forward.1} parent=0
    _
  %s6 = ssub.s32 1, %s4
  %s7 = scalar_select 0, %s6, %s4
  $region1: #{net_forward.1} parent=0
    #allocation2 [shape = 'u8[4096]{0}', space=vmem, size = 0x1000, scoped, tag = 'output window, operand 1, single buffered']
    #allocation3 [shape = 's32[1]{0}', space=sflag, size = 0x4, scoped, tag = 'scoped memory for net_forward.1']
    %8 = vsyncpa [#allocation3], 0
    // Predicated region
    $region2: #{net_forward.1} parent=1 // pred_check
      _
    $region3: #{net_forward.1} parent=1 // pred_check_branch
      %10 = sbr.rel (0) target = $region5
    $region4: #{net_forward.1} parent=1 // pred_region
      _
    $region5: #{net_forward.1} parent=1 // pred_fallthru
      _
    %v11 = vld [vmem:[%s0] sm:$0xff]
    %13 = vset.pattern.permute.xlu0 0
    %14 = vperm.xlu0 %13, %v11
    %v15 = vpop.permute.xlu0 %14
    %v17 = vlaneseq
    %v18 = vshrl.u32 %v17, 7
    %v19 = vsub.s32 0, %v18
    %v20 = vrot.slane %v11, %v19
    %v21 = vmul.f32 %v15, %v20
    %22 = vset.pattern.permute.xlu0 1
    %23 = vperm.xlu0 %22, %v11
    %v24 = vpop.permute.xlu0 %23
    %v26 = vlaneseq
    %v27 = vshrl.u32 %v26, 7
    %v28 = vsub.s32 1, %v27
    %v29 = vrot.slane %v11, %v28
    %v30 = vmul.f32 %v24, %v29
    %v31 = vadd.f32 %v21, %v30
    %v32 = vlaneseq
    %v33 = vshrl.u32 %v32, 7
    %v34 = vsub.s32 2, %v33
    %v35 = vrot.slane %v11, %v34
    %v36 = vadd.f32 %v31, %v35
    %v37 = vxor.u32 %v36, 2147483648
    %v38 = vmul.f32 %v37, 1.442695
    %v39 = vpow.pop %v38
    %v40 = vadd.f32 %v39, 1.0
    %v41 = vrcp.pop %v40
    %v42 = vmul.f32 1.0, %v41
    %44 = vset.pattern.permute.xlu0 2
    %45 = vperm.xlu0 %44, %v42
    %v46 = vpop.permute.xlu0 %45
    %v48 = vmul.f32 %v46, %v20
    %49 = vset.pattern.permute.xlu0 3
    %50 = vperm.xlu0 %49, %v42
    %v51 = vpop.permute.xlu0 %50
    %v53 = vmul.f32 %v51, %v29
    %v54 = vadd.f32 %v48, %v53
    %55 = vset.pattern.permute.xlu0 4
    %56 = vperm.xlu0 %55, %v42
    %v57 = vpop.permute.xlu0 %56
    %v59 = vmul.f32 %v57, %v35
    %v60 = vadd.f32 %v54, %v59
    %61 = vset.pattern.permute.xlu0 5
    %62 = vperm.xlu0 %61, %v42
    %v63 = vpop.permute.xlu0 %62
    %v65 = vlaneseq
    %v66 = vshrl.u32 %v65, 7
    %v67 = vsub.s32 3, %v66
    %v68 = vrot.slane %v11, %v67
    %v69 = vmul.f32 %v63, %v68
    %v70 = vadd.f32 %v60, %v69
    %v71 = vlaneseq
    %v72 = vshrl.u32 %v71, 7
    %v73 = vsub.s32 4, %v72
    %v74 = vrot.slane %v11, %v73
    %v75 = vadd.f32 %v70, %v74
    %v76 = vxor.u32 %v75, 2147483648
    %v77 = vmul.f32 %v76, 1.442695
    %v78 = vpow.pop %v77
    %v79 = vadd.f32 %v78, 1.0
    %v80 = vrcp.pop %v79
    %v81 = vmul.f32 1.0, %v80
    %83 = vrot.lane.b32.xlu0 %v81, 122
    %v84 = vpop.permute.xlu0 %83
    %86 = vxpose.xlu0.b32.start [1/16] %v84, 128
    %87 = vxpose.xlu0.b32.cont [2/16] 0.0, 128
    %88 = vxpose.xlu0.b32.cont [3/16] 0.0, 128
    %89 = vxpose.xlu0.b32.cont [4/16] 0.0, 128
    %90 = vxpose.xlu0.b32.cont [5/16] 0.0, 128
    %91 = vxpose.xlu0.b32.cont [6/16] 0.0, 128
    %92 = vxpose.xlu0.b32.cont [7/16] 0.0, 128
    %93 = vxpose.xlu0.b32.cont [8/16] 0.0, 128
    %94 = vxpose.xlu0.b32.cont [9/16] 0.0, 128
    %95 = vxpose.xlu0.b32.cont [10/16] 0.0, 128
    %96 = vxpose.xlu0.b32.cont [11/16] 0.0, 128
    %97 = vxpose.xlu0.b32.cont [12/16] 0.0, 128
    %98 = vxpose.xlu0.b32.cont [13/16] 0.0, 128
    %99 = vxpose.xlu0.b32.cont [14/16] 0.0, 128
    %100 = vxpose.xlu0.b32.cont [15/16] 0.0, 128
    %101 = vxpose.xlu0.b32.end [16/16] 0.0, 128
    %v102 = vpop.trf.xlu0
    %v103 = vpop.trf.xlu0
    %v104 = vpop.trf.xlu0
    %v105 = vpop.trf.xlu0
    %v106 = vpop.trf.xlu0
    %v107 = vpop.trf.xlu0
    %v108 = vpop.trf.xlu0
    %v109 = vpop.trf.xlu0
    %v110 = vpop.trf.xlu0
    %v111 = vpop.trf.xlu0
    %v112 = vpop.trf.xlu0
    %v113 = vpop.trf.xlu0
    %v114 = vpop.trf.xlu0
    %v115 = vpop.trf.xlu0
    %v116 = vpop.trf.xlu0
    %v117 = vpop.trf.xlu0
    %118 = vset.pattern.permute.xlu0 6
    %119 = vperm.xlu0 %118, %v81
    %v120 = vpop.permute.xlu0 %119
    %v122 = vlaneseq
    %v123 = vshrl.u32 %v122, 7
    %v124 = vsub.s32 0, %v123
    %v125 = vrot.slane %v102, %v124
    %v126 = vsub.f32 %v120, %v125
    %v127 = vmul.f32 %v126, %v126
    %128 = vset.pattern.permute.xlu0 7
    %129 = vperm.xlu0 %128, %v81
    %v130 = vpop.permute.xlu0 %129
    %v132 = vlaneseq
    %v133 = vshrl.u32 %v132, 7
    %v134 = vsub.s32 1, %v133
    %v135 = vrot.slane %v102, %v134
    %v136 = vsub.f32 %v130, %v135
    %v137 = vmul.f32 %v136, %v136
    %v138 = vadd.f32 %v127, %v137
    %v139 = vmul.f32 %v138, -10.0
    %v140 = vmul.f32 %v139, 1.442695
    %v141 = vpow.pop %v140
    %vm142 = vcmask 64512
    %v143 = vsel %vm142, %v141, 0.0
    %144 = vadd.xlane.f32.xlu0 %v143
    %v145 = vpop.xlane.xlu0 %144
    %v146 = vlaneseq
    %v147 = vshrl.u32 %v146, 7
    %v148 = vlaneseq
    %v149 = vand.u32 %v148, 127
    %vm150 = vcmp.eq.s32.totalorder %v147, %v149
    %v151 = vsub.f32 %v145, %v141
    %v152 = vsub.f32 0.0, %v141
    %v153 = vsel %vm150, %v151, %v152
    %154 = vst.msk [vmem:[#allocation2] sm:$0xff] %vm142, %v153
    loop: start=0, step=1, limit=10
    $region6: #{net_forward.1} parent=1 // loop_pre_header
      _
    $region7: #{net_forward.1} parent=1 // loop_header
      %s156 = sphi 0, %s160
      %p157 = scmp.ge.s32.totalorder %s156, 10
      %v161 = vphi %v153, %v2973
    $region8: #{net_forward.1} parent=1 // loop_header_branch
      %159 = sbr.rel (%p157) target = $region12
    $region9: #{net_forward.1} parent=1 // loop_body
      %v162 = vand.u32 2147483647, %v161
      %vm163 = vcmp.gt.f32.partialorder %v162, 1e-12
      %v164 = vsel %vm163, %v161, 1.0
      %v166 = vrot.slane %v161, 7
      %167 = vrot.lane.b32.xlu0 %v166, 1
      %v168 = vpop.permute.xlu0 %167
      %v170 = vsub.f32 %v161, %v168
      %v171 = vmul.f32 %v164, 2.0
      %v173 = vrot.slane %v171, 7
      %v175 = vrcp.pop %v173
      %v176 = vmul.f32 %v170, %v175
      %vm177 = vcmp.ge.f32.partialorder %v176, 0.0
      %v178 = vsel %vm177, 1.0, -1.0
      %v179 = vand.u32 2147483647, %v176
      %v180 = vmul.f32 %v176, %v176
      %v181 = vadd.f32 %v180, 1.0
      %v182 = vrsqrt.pop %v181
      %v183 = vmul.f32 %v181, %v182
      %vm184 = vcmp.eq.f32.partialorder %v181, inf
      %v185 = vsel %vm184, %v181, %v183
      %vm186 = vcmp.eq.f32.partialorder %v181, 0.0
      %v187 = vand.u32 %v181, 2147483648
      %v188 = vsel %vm186, %v187, %v185
      %v189 = vadd.f32 %v179, %v188
      %v190 = vrcp.pop %v189
      %v191 = vmul.f32 %v178, %v190
      %v192 = vmul.f32 %v191, %v191
      %v193 = vadd.f32 %v192, 1.0
      %v194 = vrsqrt.pop %v193
      %v195 = vmul.f32 %v191, %v194
      %v197 = vrot.slane %v194, 1
      %v199 = vsel %vm163, %v197, 1.0
      %v201 = vrot.slane %v195, 1
      %v203 = vsel %vm163, %v201, 0.0
      %vm204 = vcmp.eq.s32.totalorder %v147, 0
      %206 = vset.pattern.permute.xlu0 1
      %207 = vperm.xlu0 %206, %v199
      %v208 = vpop.permute.xlu0 %207
      %v210 = vmul.f32 %v208, %v161
      %212 = vset.pattern.permute.xlu0 1
      %213 = vperm.xlu0 %212, %v203
      %v214 = vpop.permute.xlu0 %213
      %v216 = vrot.slane %v161, 1
      %v218 = vmul.f32 %v214, %v216
      %v219 = vsub.f32 %v210, %v218
      %vm220 = vcmp.eq.s32.totalorder %v147, 1
      %v221 = vmul.f32 %v214, %v161
      %v222 = vmul.f32 %v208, %v216
      %v223 = vadd.f32 %v221, %v222
      %v224 = vlaneseq
      %v225 = vshrl.u32 %v224, 7
      %v226 = vsub.s32 0, %v225
      %v227 = vrot.slane %v223, %v226
      %v228 = vsel %vm220, %v227, %v161
      %v229 = vlaneseq
      %v230 = vshrl.u32 %v229, 7
      %v231 = vsub.s32 0, %v230
      %v232 = vrot.slane %v219, %v231
      %v233 = vsel %vm204, %v232, %v228
      %vm234 = vcmp.eq.s32.totalorder %v149, 0
      %v235 = vlaneseq
      %v236 = vshrl.u32 %v235, 7
      %v237 = vsub.s32 0, %v236
      %v238 = vrot.slane %v199, %v237
      %240 = vrot.lane.b32.xlu0 %v233, 1
      %v241 = vpop.permute.xlu0 %240
      %v243 = vmul.f32 %v238, %v241
      %v244 = vlaneseq
      %v245 = vshrl.u32 %v244, 7
      %v246 = vsub.s32 0, %v245
      %v247 = vrot.slane %v203, %v246
      %v248 = vmul.f32 %v247, %v233
      %v249 = vsub.f32 %v243, %v248
      %vm250 = vcmp.eq.s32.totalorder %v149, 1
      %v251 = vmul.f32 %v247, %v241
      %v252 = vmul.f32 %v238, %v233
      %v253 = vadd.f32 %v251, %v252
      %255 = vset.pattern.permute.xlu0 1
      %256 = vperm.xlu0 %255, %v253
      %v257 = vpop.permute.xlu0 %256
      %v259 = vsel %vm250, %v257, %v233
      %261 = vset.pattern.permute.xlu0 1
      %262 = vperm.xlu0 %261, %v249
      %v263 = vpop.permute.xlu0 %262
      %v265 = vsel %vm234, %v263, %v259
      %v266 = vand.u32 2147483647, %v265
      %vm267 = vcmp.gt.f32.partialorder %v266, 1e-12
      %v268 = vsel %vm267, %v265, 1.0
      %v270 = vrot.slane %v265, 6
      %271 = vrot.lane.b32.xlu0 %v270, 2
      %v272 = vpop.permute.xlu0 %271
      %v274 = vsub.f32 %v265, %v272
      %v275 = vmul.f32 %v268, 2.0
      %v277 = vrot.slane %v275, 6
      %v279 = vrcp.pop %v277
      %v280 = vmul.f32 %v274, %v279
      %vm281 = vcmp.ge.f32.partialorder %v280, 0.0
      %v282 = vsel %vm281, 1.0, -1.0
      %v283 = vand.u32 2147483647, %v280
      %v284 = vmul.f32 %v280, %v280
      %v285 = vadd.f32 %v284, 1.0
      %v286 = vrsqrt.pop %v285
      %v287 = vmul.f32 %v285, %v286
      %vm288 = vcmp.eq.f32.partialorder %v285, inf
      %v289 = vsel %vm288, %v285, %v287
      %vm290 = vcmp.eq.f32.partialorder %v285, 0.0
      %v291 = vand.u32 %v285, 2147483648
      %v292 = vsel %vm290, %v291, %v289
      %v293 = vadd.f32 %v283, %v292
      %v294 = vrcp.pop %v293
      %v295 = vmul.f32 %v282, %v294
      %v296 = vmul.f32 %v295, %v295
      %v297 = vadd.f32 %v296, 1.0
      %v298 = vrsqrt.pop %v297
      %v299 = vmul.f32 %v295, %v298
      %v301 = vrot.slane %v298, 2
      %v303 = vsel %vm267, %v301, 1.0
      %v305 = vrot.slane %v299, 2
      %v307 = vsel %vm267, %v305, 0.0
      %309 = vset.pattern.permute.xlu0 2
      %310 = vperm.xlu0 %309, %v303
      %v311 = vpop.permute.xlu0 %310
      %v313 = vmul.f32 %v311, %v265
      %315 = vset.pattern.permute.xlu0 2
      %316 = vperm.xlu0 %315, %v307
      %v317 = vpop.permute.xlu0 %316
      %v319 = vrot.slane %v265, 2
      %v321 = vmul.f32 %v317, %v319
      %v322 = vsub.f32 %v313, %v321
      %vm323 = vcmp.eq.s32.totalorder %v147, 2
      %v324 = vmul.f32 %v317, %v265
      %v325 = vmul.f32 %v311, %v319
      %v326 = vadd.f32 %v324, %v325
      %v327 = vlaneseq
      %v328 = vshrl.u32 %v327, 7
      %v329 = vsub.s32 0, %v328
      %v330 = vrot.slane %v326, %v329
      %v331 = vsel %vm323, %v330, %v265
      %v332 = vlaneseq
      %v333 = vshrl.u32 %v332, 7
      %v334 = vsub.s32 0, %v333
      %v335 = vrot.slane %v322, %v334
      %v336 = vsel %vm204, %v335, %v331
      %v337 = vlaneseq
      %v338 = vshrl.u32 %v337, 7
      %v339 = vsub.s32 0, %v338
      %v340 = vrot.slane %v303, %v339
      %342 = vrot.lane.b32.xlu0 %v336, 2
      %v343 = vpop.permute.xlu0 %342
      %v345 = vmul.f32 %v340, %v343
      %v346 = vlaneseq
      %v347 = vshrl.u32 %v346, 7
      %v348 = vsub.s32 0, %v347
      %v349 = vrot.slane %v307, %v348
      %v350 = vmul.f32 %v349, %v336
      %v351 = vsub.f32 %v345, %v350
      %vm352 = vcmp.eq.s32.totalorder %v149, 2
      %v353 = vmul.f32 %v349, %v343
      %v354 = vmul.f32 %v340, %v336
      %v355 = vadd.f32 %v353, %v354
      %357 = vset.pattern.permute.xlu0 2
      %358 = vperm.xlu0 %357, %v355
      %v359 = vpop.permute.xlu0 %358
      %v361 = vsel %vm352, %v359, %v336
      %363 = vset.pattern.permute.xlu0 2
      %364 = vperm.xlu0 %363, %v351
      %v365 = vpop.permute.xlu0 %364
      %v367 = vsel %vm234, %v365, %v361
      %v368 = vand.u32 2147483647, %v367
      %vm369 = vcmp.gt.f32.partialorder %v368, 1e-12
      %v370 = vsel %vm369, %v367, 1.0
      %v372 = vrot.slane %v367, 5
      %373 = vrot.lane.b32.xlu0 %v372, 3
      %v374 = vpop.permute.xlu0 %373
      %v376 = vsub.f32 %v367, %v374
      %v377 = vmul.f32 %v370, 2.0
      %v379 = vrot.slane %v377, 5
      %v381 = vrcp.pop %v379
      %v382 = vmul.f32 %v376, %v381
      %vm383 = vcmp.ge.f32.partialorder %v382, 0.0
      %v384 = vsel %vm383, 1.0, -1.0
      %v385 = vand.u32 2147483647, %v382
      %v386 = vmul.f32 %v382, %v382
      %v387 = vadd.f32 %v386, 1.0
      %v388 = vrsqrt.pop %v387
      %v389 = vmul.f32 %v387, %v388
      %vm390 = vcmp.eq.f32.partialorder %v387, inf
      %v391 = vsel %vm390, %v387, %v389
      %vm392 = vcmp.eq.f32.partialorder %v387, 0.0
      %v393 = vand.u32 %v387, 2147483648
      %v394 = vsel %vm392, %v393, %v391
      %v395 = vadd.f32 %v385, %v394
      %v396 = vrcp.pop %v395
      %v397 = vmul.f32 %v384, %v396
      %v398 = vmul.f32 %v397, %v397
      %v399 = vadd.f32 %v398, 1.0
      %v400 = vrsqrt.pop %v399
      %v401 = vmul.f32 %v397, %v400
      %v403 = vrot.slane %v400, 3
      %v405 = vsel %vm369, %v403, 1.0
      %v407 = vrot.slane %v401, 3
      %v409 = vsel %vm369, %v407, 0.0
      %411 = vset.pattern.permute.xlu0 3
      %412 = vperm.xlu0 %411, %v405
      %v413 = vpop.permute.xlu0 %412
      %v415 = vmul.f32 %v413, %v367
      %417 = vset.pattern.permute.xlu0 3
      %418 = vperm.xlu0 %417, %v409
      %v419 = vpop.permute.xlu0 %418
      %v421 = vrot.slane %v367, 3
      %v423 = vmul.f32 %v419, %v421
      %v424 = vsub.f32 %v415, %v423
      %vm425 = vcmp.eq.s32.totalorder %v147, 3
      %v426 = vmul.f32 %v419, %v367
      %v427 = vmul.f32 %v413, %v421
      %v428 = vadd.f32 %v426, %v427
      %v429 = vlaneseq
      %v430 = vshrl.u32 %v429, 7
      %v431 = vsub.s32 0, %v430
      %v432 = vrot.slane %v428, %v431
      %v433 = vsel %vm425, %v432, %v367
      %v434 = vlaneseq
      %v435 = vshrl.u32 %v434, 7
      %v436 = vsub.s32 0, %v435
      %v437 = vrot.slane %v424, %v436
      %v438 = vsel %vm204, %v437, %v433
      %v439 = vlaneseq
      %v440 = vshrl.u32 %v439, 7
      %v441 = vsub.s32 0, %v440
      %v442 = vrot.slane %v405, %v441
      %444 = vrot.lane.b32.xlu0 %v438, 3
      %v445 = vpop.permute.xlu0 %444
      %v447 = vmul.f32 %v442, %v445
      %v448 = vlaneseq
      %v449 = vshrl.u32 %v448, 7
      %v450 = vsub.s32 0, %v449
      %v451 = vrot.slane %v409, %v450
      %v452 = vmul.f32 %v451, %v438
      %v453 = vsub.f32 %v447, %v452
      %vm454 = vcmp.eq.s32.totalorder %v149, 3
      %v455 = vmul.f32 %v451, %v445
      %v456 = vmul.f32 %v442, %v438
      %v457 = vadd.f32 %v455, %v456
      %459 = vset.pattern.permute.xlu0 3
      %460 = vperm.xlu0 %459, %v457
      %v461 = vpop.permute.xlu0 %460
      %v463 = vsel %vm454, %v461, %v438
      %465 = vset.pattern.permute.xlu0 3
      %466 = vperm.xlu0 %465, %v453
      %v467 = vpop.permute.xlu0 %466
      %v469 = vsel %vm234, %v467, %v463
      %v470 = vand.u32 2147483647, %v469
      %vm471 = vcmp.gt.f32.partialorder %v470, 1e-12
      %v472 = vsel %vm471, %v469, 1.0
      %v474 = vrot.slane %v469, 4
      %475 = vrot.lane.b32.xlu0 %v474, 4
      %v476 = vpop.permute.xlu0 %475
      %v478 = vsub.f32 %v469, %v476
      %v479 = vmul.f32 %v472, 2.0
      %v481 = vrot.slane %v479, 4
      %v483 = vrcp.pop %v481
      %v484 = vmul.f32 %v478, %v483
      %vm485 = vcmp.ge.f32.partialorder %v484, 0.0
      %v486 = vsel %vm485, 1.0, -1.0
      %v487 = vand.u32 2147483647, %v484
      %v488 = vmul.f32 %v484, %v484
      %v489 = vadd.f32 %v488, 1.0
      %v490 = vrsqrt.pop %v489
      %v491 = vmul.f32 %v489, %v490
      %vm492 = vcmp.eq.f32.partialorder %v489, inf
      %v493 = vsel %vm492, %v489, %v491
      %vm494 = vcmp.eq.f32.partialorder %v489, 0.0
      %v495 = vand.u32 %v489, 2147483648
      %v496 = vsel %vm494, %v495, %v493
      %v497 = vadd.f32 %v487, %v496
      %v498 = vrcp.pop %v497
      %v499 = vmul.f32 %v486, %v498
      %v500 = vmul.f32 %v499, %v499
      %v501 = vadd.f32 %v500, 1.0
      %v502 = vrsqrt.pop %v501
      %v503 = vmul.f32 %v499, %v502
      %v505 = vrot.slane %v502, 4
      %v507 = vsel %vm471, %v505, 1.0
      %v509 = vrot.slane %v503, 4
      %v511 = vsel %vm471, %v509, 0.0
      %513 = vset.pattern.permute.xlu0 4
      %514 = vperm.xlu0 %513, %v507
      %v515 = vpop.permute.xlu0 %514
      %v517 = vmul.f32 %v515, %v469
      %519 = vset.pattern.permute.xlu0 4
      %520 = vperm.xlu0 %519, %v511
      %v521 = vpop.permute.xlu0 %520
      %v524 = vmul.f32 %v521, %v474
      %v525 = vsub.f32 %v517, %v524
      %vm526 = vcmp.eq.s32.totalorder %v147, 4
      %v527 = vmul.f32 %v521, %v469
      %v528 = vmul.f32 %v515, %v474
      %v529 = vadd.f32 %v527, %v528
      %v530 = vlaneseq
      %v531 = vshrl.u32 %v530, 7
      %v532 = vsub.s32 0, %v531
      %v533 = vrot.slane %v529, %v532
      %v534 = vsel %vm526, %v533, %v469
      %v535 = vlaneseq
      %v536 = vshrl.u32 %v535, 7
      %v537 = vsub.s32 0, %v536
      %v538 = vrot.slane %v525, %v537
      %v539 = vsel %vm204, %v538, %v534
      %v540 = vlaneseq
      %v541 = vshrl.u32 %v540, 7
      %v542 = vsub.s32 0, %v541
      %v543 = vrot.slane %v507, %v542
      %545 = vrot.lane.b32.xlu0 %v539, 4
      %v546 = vpop.permute.xlu0 %545
      %v548 = vmul.f32 %v543, %v546
      %v549 = vlaneseq
      %v550 = vshrl.u32 %v549, 7
      %v551 = vsub.s32 0, %v550
      %v552 = vrot.slane %v511, %v551
      %v553 = vmul.f32 %v552, %v539
      %v554 = vsub.f32 %v548, %v553
      %vm555 = vcmp.eq.s32.totalorder %v149, 4
      %v556 = vmul.f32 %v552, %v546
      %v557 = vmul.f32 %v543, %v539
      %v558 = vadd.f32 %v556, %v557
      %560 = vset.pattern.permute.xlu0 4
      %561 = vperm.xlu0 %560, %v558
      %v562 = vpop.permute.xlu0 %561
      %v564 = vsel %vm555, %v562, %v539
      %566 = vset.pattern.permute.xlu0 4
      %567 = vperm.xlu0 %566, %v554
      %v568 = vpop.permute.xlu0 %567
      %v570 = vsel %vm234, %v568, %v564
      %v571 = vand.u32 2147483647, %v570
      %vm572 = vcmp.gt.f32.partialorder %v571, 1e-12
      %v573 = vsel %vm572, %v570, 1.0
      %v575 = vrot.slane %v570, 3
      %576 = vrot.lane.b32.xlu0 %v575, 5
      %v577 = vpop.permute.xlu0 %576
      %v579 = vsub.f32 %v570, %v577
      %v580 = vmul.f32 %v573, 2.0
      %v582 = vrot.slane %v580, 3
      %v584 = vrcp.pop %v582
      %v585 = vmul.f32 %v579, %v584
      %vm586 = vcmp.ge.f32.partialorder %v585, 0.0
      %v587 = vsel %vm586, 1.0, -1.0
      %v588 = vand.u32 2147483647, %v585
      %v589 = vmul.f32 %v585, %v585
      %v590 = vadd.f32 %v589, 1.0
      %v591 = vrsqrt.pop %v590
      %v592 = vmul.f32 %v590, %v591
      %vm593 = vcmp.eq.f32.partialorder %v590, inf
      %v594 = vsel %vm593, %v590, %v592
      %vm595 = vcmp.eq.f32.partialorder %v590, 0.0
      %v596 = vand.u32 %v590, 2147483648
      %v597 = vsel %vm595, %v596, %v594
      %v598 = vadd.f32 %v588, %v597
      %v599 = vrcp.pop %v598
      %v600 = vmul.f32 %v587, %v599
      %v601 = vmul.f32 %v600, %v600
      %v602 = vadd.f32 %v601, 1.0
      %v603 = vrsqrt.pop %v602
      %v604 = vmul.f32 %v600, %v603
      %v606 = vrot.slane %v603, 5
      %v608 = vsel %vm572, %v606, 1.0
      %v610 = vrot.slane %v604, 5
      %v612 = vsel %vm572, %v610, 0.0
      %614 = vset.pattern.permute.xlu0 5
      %615 = vperm.xlu0 %614, %v608
      %v616 = vpop.permute.xlu0 %615
      %v618 = vmul.f32 %v616, %v570
      %620 = vset.pattern.permute.xlu0 5
      %621 = vperm.xlu0 %620, %v612
      %v622 = vpop.permute.xlu0 %621
      %v624 = vrot.slane %v570, 5
      %v626 = vmul.f32 %v622, %v624
      %v627 = vsub.f32 %v618, %v626
      %vm628 = vcmp.eq.s32.totalorder %v147, 5
      %v629 = vmul.f32 %v622, %v570
      %v630 = vmul.f32 %v616, %v624
      %v631 = vadd.f32 %v629, %v630
      %v632 = vlaneseq
      %v633 = vshrl.u32 %v632, 7
      %v634 = vsub.s32 0, %v633
      %v635 = vrot.slane %v631, %v634
      %v636 = vsel %vm628, %v635, %v570
      %v637 = vlaneseq
      %v638 = vshrl.u32 %v637, 7
      %v639 = vsub.s32 0, %v638
      %v640 = vrot.slane %v627, %v639
      %v641 = vsel %vm204, %v640, %v636
      %v642 = vlaneseq
      %v643 = vshrl.u32 %v642, 7
      %v644 = vsub.s32 0, %v643
      %v645 = vrot.slane %v608, %v644
      %647 = vrot.lane.b32.xlu0 %v641, 5
      %v648 = vpop.permute.xlu0 %647
      %v650 = vmul.f32 %v645, %v648
      %v651 = vlaneseq
      %v652 = vshrl.u32 %v651, 7
      %v653 = vsub.s32 0, %v652
      %v654 = vrot.slane %v612, %v653
      %v655 = vmul.f32 %v654, %v641
      %v656 = vsub.f32 %v650, %v655
      %vm657 = vcmp.eq.s32.totalorder %v149, 5
      %v658 = vmul.f32 %v654, %v648
      %v659 = vmul.f32 %v645, %v641
      %v660 = vadd.f32 %v658, %v659
      %662 = vset.pattern.permute.xlu0 5
      %663 = vperm.xlu0 %662, %v660
      %v664 = vpop.permute.xlu0 %663
      %v666 = vsel %vm657, %v664, %v641
      %668 = vset.pattern.permute.xlu0 5
      %669 = vperm.xlu0 %668, %v656
      %v670 = vpop.permute.xlu0 %669
      %v672 = vsel %vm234, %v670, %v666
      %v673 = vand.u32 2147483647, %v672
      %vm674 = vcmp.gt.f32.partialorder %v673, 1e-12
      %v675 = vsel %vm674, %v672, 1.0
      %v677 = vrot.slane %v672, 2
      %678 = vrot.lane.b32.xlu0 %v677, 6
      %v679 = vpop.permute.xlu0 %678
      %v681 = vsub.f32 %v672, %v679
      %v682 = vmul.f32 %v675, 2.0
      %v684 = vrot.slane %v682, 2
      %v686 = vrcp.pop %v684
      %v687 = vmul.f32 %v681, %v686
      %vm688 = vcmp.ge.f32.partialorder %v687, 0.0
      %v689 = vsel %vm688, 1.0, -1.0
      %v690 = vand.u32 2147483647, %v687
      %v691 = vmul.f32 %v687, %v687
      %v692 = vadd.f32 %v691, 1.0
      %v693 = vrsqrt.pop %v692
      %v694 = vmul.f32 %v692, %v693
      %vm695 = vcmp.eq.f32.partialorder %v692, inf
      %v696 = vsel %vm695, %v692, %v694
      %vm697 = vcmp.eq.f32.partialorder %v692, 0.0
      %v698 = vand.u32 %v692, 2147483648
      %v699 = vsel %vm697, %v698, %v696
      %v700 = vadd.f32 %v690, %v699
      %v701 = vrcp.pop %v700
      %v702 = vmul.f32 %v689, %v701
      %v703 = vmul.f32 %v702, %v702
      %v704 = vadd.f32 %v703, 1.0
      %v705 = vrsqrt.pop %v704
      %v706 = vmul.f32 %v702, %v705
      %v708 = vrot.slane %v705, 6
      %v710 = vsel %vm674, %v708, 1.0
      %v712 = vrot.slane %v706, 6
      %v714 = vsel %vm674, %v712, 0.0
      %716 = vset.pattern.permute.xlu0 6
      %717 = vperm.xlu0 %716, %v710
      %v718 = vpop.permute.xlu0 %717
      %v720 = vmul.f32 %v718, %v672
      %722 = vset.pattern.permute.xlu0 6
      %723 = vperm.xlu0 %722, %v714
      %v724 = vpop.permute.xlu0 %723
      %v726 = vrot.slane %v672, 6
      %v728 = vmul.f32 %v724, %v726
      %v729 = vsub.f32 %v720, %v728
      %vm730 = vcmp.eq.s32.totalorder %v147, 6
      %v731 = vmul.f32 %v724, %v672
      %v732 = vmul.f32 %v718, %v726
      %v733 = vadd.f32 %v731, %v732
      %v734 = vlaneseq
      %v735 = vshrl.u32 %v734, 7
      %v736 = vsub.s32 0, %v735
      %v737 = vrot.slane %v733, %v736
      %v738 = vsel %vm730, %v737, %v672
      %v739 = vlaneseq
      %v740 = vshrl.u32 %v739, 7
      %v741 = vsub.s32 0, %v740
      %v742 = vrot.slane %v729, %v741
      %v743 = vsel %vm204, %v742, %v738
      %v744 = vlaneseq
      %v745 = vshrl.u32 %v744, 7
      %v746 = vsub.s32 0, %v745
      %v747 = vrot.slane %v710, %v746
      %749 = vrot.lane.b32.xlu0 %v743, 6
      %v750 = vpop.permute.xlu0 %749
      %v752 = vmul.f32 %v747, %v750
      %v753 = vlaneseq
      %v754 = vshrl.u32 %v753, 7
      %v755 = vsub.s32 0, %v754
      %v756 = vrot.slane %v714, %v755
      %v757 = vmul.f32 %v756, %v743
      %v758 = vsub.f32 %v752, %v757
      %vm759 = vcmp.eq.s32.totalorder %v149, 6
      %v760 = vmul.f32 %v756, %v750
      %v761 = vmul.f32 %v747, %v743
      %v762 = vadd.f32 %v760, %v761
      %764 = vset.pattern.permute.xlu0 6
      %765 = vperm.xlu0 %764, %v762
      %v766 = vpop.permute.xlu0 %765
      %v768 = vsel %vm759, %v766, %v743
      %770 = vset.pattern.permute.xlu0 6
      %771 = vperm.xlu0 %770, %v758
      %v772 = vpop.permute.xlu0 %771
      %v774 = vsel %vm234, %v772, %v768
      %v775 = vand.u32 2147483647, %v774
      %vm776 = vcmp.gt.f32.partialorder %v775, 1e-12
      %v777 = vsel %vm776, %v774, 1.0
      %v779 = vrot.slane %v774, 1
      %780 = vrot.lane.b32.xlu0 %v779, 7
      %v781 = vpop.permute.xlu0 %780
      %v783 = vsub.f32 %v774, %v781
      %v784 = vmul.f32 %v777, 2.0
      %v786 = vrot.slane %v784, 1
      %v788 = vrcp.pop %v786
      %v789 = vmul.f32 %v783, %v788
      %vm790 = vcmp.ge.f32.partialorder %v789, 0.0
      %v791 = vsel %vm790, 1.0, -1.0
      %v792 = vand.u32 2147483647, %v789
      %v793 = vmul.f32 %v789, %v789
      %v794 = vadd.f32 %v793, 1.0
      %v795 = vrsqrt.pop %v794
      %v796 = vmul.f32 %v794, %v795
      %vm797 = vcmp.eq.f32.partialorder %v794, inf
      %v798 = vsel %vm797, %v794, %v796
      %vm799 = vcmp.eq.f32.partialorder %v794, 0.0
      %v800 = vand.u32 %v794, 2147483648
      %v801 = vsel %vm799, %v800, %v798
      %v802 = vadd.f32 %v792, %v801
      %v803 = vrcp.pop %v802
      %v804 = vmul.f32 %v791, %v803
      %v805 = vmul.f32 %v804, %v804
      %v806 = vadd.f32 %v805, 1.0
      %v807 = vrsqrt.pop %v806
      %v808 = vmul.f32 %v804, %v807
      %v810 = vrot.slane %v807, 7
      %v812 = vsel %vm776, %v810, 1.0
      %v814 = vrot.slane %v808, 7
      %v816 = vsel %vm776, %v814, 0.0
      %818 = vset.pattern.permute.xlu0 7
      %819 = vperm.xlu0 %818, %v812
      %v820 = vpop.permute.xlu0 %819
      %v822 = vmul.f32 %v820, %v774
      %824 = vset.pattern.permute.xlu0 7
      %825 = vperm.xlu0 %824, %v816
      %v826 = vpop.permute.xlu0 %825
      %v828 = vrot.slane %v774, 7
      %v830 = vmul.f32 %v826, %v828
      %v831 = vsub.f32 %v822, %v830
      %vm832 = vcmp.eq.s32.totalorder %v147, 7
      %v833 = vmul.f32 %v826, %v774
      %v834 = vmul.f32 %v820, %v828
      %v835 = vadd.f32 %v833, %v834
      %v836 = vlaneseq
      %v837 = vshrl.u32 %v836, 7
      %v838 = vsub.s32 0, %v837
      %v839 = vrot.slane %v835, %v838
      %v840 = vsel %vm832, %v839, %v774
      %v841 = vlaneseq
      %v842 = vshrl.u32 %v841, 7
      %v843 = vsub.s32 0, %v842
      %v844 = vrot.slane %v831, %v843
      %v845 = vsel %vm204, %v844, %v840
      %v846 = vlaneseq
      %v847 = vshrl.u32 %v846, 7
      %v848 = vsub.s32 0, %v847
      %v849 = vrot.slane %v812, %v848
      %851 = vrot.lane.b32.xlu0 %v845, 7
      %v852 = vpop.permute.xlu0 %851
      %v854 = vmul.f32 %v849, %v852
      %v855 = vlaneseq
      %v856 = vshrl.u32 %v855, 7
      %v857 = vsub.s32 0, %v856
      %v858 = vrot.slane %v816, %v857
      %v859 = vmul.f32 %v858, %v845
      %v860 = vsub.f32 %v854, %v859
      %vm861 = vcmp.eq.s32.totalorder %v149, 7
      %v862 = vmul.f32 %v858, %v852
      %v863 = vmul.f32 %v849, %v845
      %v864 = vadd.f32 %v862, %v863
      %866 = vset.pattern.permute.xlu0 7
      %867 = vperm.xlu0 %866, %v864
      %v868 = vpop.permute.xlu0 %867
      %v870 = vsel %vm861, %v868, %v845
      %872 = vset.pattern.permute.xlu0 7
      %873 = vperm.xlu0 %872, %v860
      %v874 = vpop.permute.xlu0 %873
      %v876 = vsel %vm234, %v874, %v870
      %v877 = vand.u32 2147483647, %v876
      %vm878 = vcmp.gt.f32.partialorder %v877, 1e-12
      %v879 = vsel %vm878, %v876, 1.0
      %v881 = vrot.slane %v876, 7
      %882 = vrot.lane.b32.xlu0 %v881, 1
      %v883 = vpop.permute.xlu0 %882
      %v885 = vsub.f32 %v876, %v883
      %v886 = vmul.f32 %v879, 2.0
      %v888 = vrot.slane %v886, 7
      %v890 = vrcp.pop %v888
      %v891 = vmul.f32 %v885, %v890
      %vm892 = vcmp.ge.f32.partialorder %v891, 0.0
      %v893 = vsel %vm892, 1.0, -1.0
      %v894 = vand.u32 2147483647, %v891
      %v895 = vmul.f32 %v891, %v891
      %v896 = vadd.f32 %v895, 1.0
      %v897 = vrsqrt.pop %v896
      %v898 = vmul.f32 %v896, %v897
      %vm899 = vcmp.eq.f32.partialorder %v896, inf
      %v900 = vsel %vm899, %v896, %v898
      %vm901 = vcmp.eq.f32.partialorder %v896, 0.0
      %v902 = vand.u32 %v896, 2147483648
      %v903 = vsel %vm901, %v902, %v900
      %v904 = vadd.f32 %v894, %v903
      %v905 = vrcp.pop %v904
      %v906 = vmul.f32 %v893, %v905
      %v907 = vmul.f32 %v906, %v906
      %v908 = vadd.f32 %v907, 1.0
      %v909 = vrsqrt.pop %v908
      %v910 = vmul.f32 %v906, %v909
      %v912 = vrot.slane %v909, 1
      %v914 = vsel %vm878, %v912, 1.0
      %v916 = vrot.slane %v910, 1
      %v918 = vsel %vm878, %v916, 0.0
      %920 = vset.pattern.permute.xlu0 2
      %921 = vperm.xlu0 %920, %v914
      %v922 = vpop.permute.xlu0 %921
      %v924 = vmul.f32 %v922, %v876
      %926 = vset.pattern.permute.xlu0 2
      %927 = vperm.xlu0 %926, %v918
      %v928 = vpop.permute.xlu0 %927
      %v930 = vrot.slane %v876, 1
      %v932 = vmul.f32 %v928, %v930
      %v933 = vsub.f32 %v924, %v932
      %v934 = vmul.f32 %v928, %v876
      %v935 = vmul.f32 %v922, %v930
      %v936 = vadd.f32 %v934, %v935
      %v937 = vlaneseq
      %v938 = vshrl.u32 %v937, 7
      %v939 = vsub.s32 1, %v938
      %v940 = vrot.slane %v936, %v939
      %v941 = vsel %vm323, %v940, %v876
      %v942 = vlaneseq
      %v943 = vshrl.u32 %v942, 7
      %v944 = vsub.s32 1, %v943
      %v945 = vrot.slane %v933, %v944
      %v946 = vsel %vm220, %v945, %v941
      %v947 = vlaneseq
      %v948 = vshrl.u32 %v947, 7
      %v949 = vsub.s32 1, %v948
      %v950 = vrot.slane %v914, %v949
      %952 = vrot.lane.b32.xlu0 %v946, 1
      %v953 = vpop.permute.xlu0 %952
      %v955 = vmul.f32 %v950, %v953
      %v956 = vlaneseq
      %v957 = vshrl.u32 %v956, 7
      %v958 = vsub.s32 1, %v957
      %v959 = vrot.slane %v918, %v958
      %v960 = vmul.f32 %v959, %v946
      %v961 = vsub.f32 %v955, %v960
      %v962 = vmul.f32 %v959, %v953
      %v963 = vmul.f32 %v950, %v946
      %v964 = vadd.f32 %v962, %v963
      %966 = vset.pattern.permute.xlu0 2
      %967 = vperm.xlu0 %966, %v964
      %v968 = vpop.permute.xlu0 %967
      %v970 = vsel %vm352, %v968, %v946
      %972 = vset.pattern.permute.xlu0 2
      %973 = vperm.xlu0 %972, %v961
      %v974 = vpop.permute.xlu0 %973
      %v976 = vsel %vm250, %v974, %v970
      %v977 = vand.u32 2147483647, %v976
      %vm978 = vcmp.gt.f32.partialorder %v977, 1e-12
      %v979 = vsel %vm978, %v976, 1.0
      %v981 = vrot.slane %v976, 6
      %982 = vrot.lane.b32.xlu0 %v981, 2
      %v983 = vpop.permute.xlu0 %982
      %v985 = vsub.f32 %v976, %v983
      %v986 = vmul.f32 %v979, 2.0
      %v988 = vrot.slane %v986, 6
      %v990 = vrcp.pop %v988
      %v991 = vmul.f32 %v985, %v990
      %vm992 = vcmp.ge.f32.partialorder %v991, 0.0
      %v993 = vsel %vm992, 1.0, -1.0
      %v994 = vand.u32 2147483647, %v991
      %v995 = vmul.f32 %v991, %v991
      %v996 = vadd.f32 %v995, 1.0
      %v997 = vrsqrt.pop %v996
      %v998 = vmul.f32 %v996, %v997
      %vm999 = vcmp.eq.f32.partialorder %v996, inf
      %v1000 = vsel %vm999, %v996, %v998
      %vm1001 = vcmp.eq.f32.partialorder %v996, 0.0
      %v1002 = vand.u32 %v996, 2147483648
      %v1003 = vsel %vm1001, %v1002, %v1000
      %v1004 = vadd.f32 %v994, %v1003
      %v1005 = vrcp.pop %v1004
      %v1006 = vmul.f32 %v993, %v1005
      %v1007 = vmul.f32 %v1006, %v1006
      %v1008 = vadd.f32 %v1007, 1.0
      %v1009 = vrsqrt.pop %v1008
      %v1010 = vmul.f32 %v1006, %v1009
      %v1012 = vrot.slane %v1009, 2
      %v1014 = vsel %vm978, %v1012, 1.0
      %v1016 = vrot.slane %v1010, 2
      %v1018 = vsel %vm978, %v1016, 0.0
      %1020 = vset.pattern.permute.xlu0 3
      %1021 = vperm.xlu0 %1020, %v1014
      %v1022 = vpop.permute.xlu0 %1021
      %v1024 = vmul.f32 %v1022, %v976
      %1026 = vset.pattern.permute.xlu0 3
      %1027 = vperm.xlu0 %1026, %v1018
      %v1028 = vpop.permute.xlu0 %1027
      %v1030 = vrot.slane %v976, 2
      %v1032 = vmul.f32 %v1028, %v1030
      %v1033 = vsub.f32 %v1024, %v1032
      %v1034 = vmul.f32 %v1028, %v976
      %v1035 = vmul.f32 %v1022, %v1030
      %v1036 = vadd.f32 %v1034, %v1035
      %v1037 = vlaneseq
      %v1038 = vshrl.u32 %v1037, 7
      %v1039 = vsub.s32 1, %v1038
      %v1040 = vrot.slane %v1036, %v1039
      %v1041 = vsel %vm425, %v1040, %v976
      %v1042 = vlaneseq
      %v1043 = vshrl.u32 %v1042, 7
      %v1044 = vsub.s32 1, %v1043
      %v1045 = vrot.slane %v1033, %v1044
      %v1046 = vsel %vm220, %v1045, %v1041
      %v1047 = vlaneseq
      %v1048 = vshrl.u32 %v1047, 7
      %v1049 = vsub.s32 1, %v1048
      %v1050 = vrot.slane %v1014, %v1049
      %1052 = vrot.lane.b32.xlu0 %v1046, 2
      %v1053 = vpop.permute.xlu0 %1052
      %v1055 = vmul.f32 %v1050, %v1053
      %v1056 = vlaneseq
      %v1057 = vshrl.u32 %v1056, 7
      %v1058 = vsub.s32 1, %v1057
      %v1059 = vrot.slane %v1018, %v1058
      %v1060 = vmul.f32 %v1059, %v1046
      %v1061 = vsub.f32 %v1055, %v1060
      %v1062 = vmul.f32 %v1059, %v1053
      %v1063 = vmul.f32 %v1050, %v1046
      %v1064 = vadd.f32 %v1062, %v1063
      %1066 = vset.pattern.permute.xlu0 3
      %1067 = vperm.xlu0 %1066, %v1064
      %v1068 = vpop.permute.xlu0 %1067
      %v1070 = vsel %vm454, %v1068, %v1046
      %1072 = vset.pattern.permute.xlu0 3
      %1073 = vperm.xlu0 %1072, %v1061
      %v1074 = vpop.permute.xlu0 %1073
      %v1076 = vsel %vm250, %v1074, %v1070
      %v1077 = vand.u32 2147483647, %v1076
      %vm1078 = vcmp.gt.f32.partialorder %v1077, 1e-12
      %v1079 = vsel %vm1078, %v1076, 1.0
      %v1081 = vrot.slane %v1076, 5
      %1082 = vrot.lane.b32.xlu0 %v1081, 3
      %v1083 = vpop.permute.xlu0 %1082
      %v1085 = vsub.f32 %v1076, %v1083
      %v1086 = vmul.f32 %v1079, 2.0
      %v1088 = vrot.slane %v1086, 5
      %v1090 = vrcp.pop %v1088
      %v1091 = vmul.f32 %v1085, %v1090
      %vm1092 = vcmp.ge.f32.partialorder %v1091, 0.0
      %v1093 = vsel %vm1092, 1.0, -1.0
      %v1094 = vand.u32 2147483647, %v1091
      %v1095 = vmul.f32 %v1091, %v1091
      %v1096 = vadd.f32 %v1095, 1.0
      %v1097 = vrsqrt.pop %v1096
      %v1098 = vmul.f32 %v1096, %v1097
      %vm1099 = vcmp.eq.f32.partialorder %v1096, inf
      %v1100 = vsel %vm1099, %v1096, %v1098
      %vm1101 = vcmp.eq.f32.partialorder %v1096, 0.0
      %v1102 = vand.u32 %v1096, 2147483648
      %v1103 = vsel %vm1101, %v1102, %v1100
      %v1104 = vadd.f32 %v1094, %v1103
      %v1105 = vrcp.pop %v1104
      %v1106 = vmul.f32 %v1093, %v1105
      %v1107 = vmul.f32 %v1106, %v1106
      %v1108 = vadd.f32 %v1107, 1.0
      %v1109 = vrsqrt.pop %v1108
      %v1110 = vmul.f32 %v1106, %v1109
      %v1112 = vrot.slane %v1109, 3
      %v1114 = vsel %vm1078, %v1112, 1.0
      %v1116 = vrot.slane %v1110, 3
      %v1118 = vsel %vm1078, %v1116, 0.0
      %1120 = vset.pattern.permute.xlu0 4
      %1121 = vperm.xlu0 %1120, %v1114
      %v1122 = vpop.permute.xlu0 %1121
      %v1124 = vmul.f32 %v1122, %v1076
      %1126 = vset.pattern.permute.xlu0 4
      %1127 = vperm.xlu0 %1126, %v1118
      %v1128 = vpop.permute.xlu0 %1127
      %v1130 = vrot.slane %v1076, 3
      %v1132 = vmul.f32 %v1128, %v1130
      %v1133 = vsub.f32 %v1124, %v1132
      %v1134 = vmul.f32 %v1128, %v1076
      %v1135 = vmul.f32 %v1122, %v1130
      %v1136 = vadd.f32 %v1134, %v1135
      %v1137 = vlaneseq
      %v1138 = vshrl.u32 %v1137, 7
      %v1139 = vsub.s32 1, %v1138
      %v1140 = vrot.slane %v1136, %v1139
      %v1141 = vsel %vm526, %v1140, %v1076
      %v1142 = vlaneseq
      %v1143 = vshrl.u32 %v1142, 7
      %v1144 = vsub.s32 1, %v1143
      %v1145 = vrot.slane %v1133, %v1144
      %v1146 = vsel %vm220, %v1145, %v1141
      %v1147 = vlaneseq
      %v1148 = vshrl.u32 %v1147, 7
      %v1149 = vsub.s32 1, %v1148
      %v1150 = vrot.slane %v1114, %v1149
      %1152 = vrot.lane.b32.xlu0 %v1146, 3
      %v1153 = vpop.permute.xlu0 %1152
      %v1155 = vmul.f32 %v1150, %v1153
      %v1156 = vlaneseq
      %v1157 = vshrl.u32 %v1156, 7
      %v1158 = vsub.s32 1, %v1157
      %v1159 = vrot.slane %v1118, %v1158
      %v1160 = vmul.f32 %v1159, %v1146
      %v1161 = vsub.f32 %v1155, %v1160
      %v1162 = vmul.f32 %v1159, %v1153
      %v1163 = vmul.f32 %v1150, %v1146
      %v1164 = vadd.f32 %v1162, %v1163
      %1166 = vset.pattern.permute.xlu0 4
      %1167 = vperm.xlu0 %1166, %v1164
      %v1168 = vpop.permute.xlu0 %1167
      %v1170 = vsel %vm555, %v1168, %v1146
      %1172 = vset.pattern.permute.xlu0 4
      %1173 = vperm.xlu0 %1172, %v1161
      %v1174 = vpop.permute.xlu0 %1173
      %v1176 = vsel %vm250, %v1174, %v1170
      %v1177 = vand.u32 2147483647, %v1176
      %vm1178 = vcmp.gt.f32.partialorder %v1177, 1e-12
      %v1179 = vsel %vm1178, %v1176, 1.0
      %v1181 = vrot.slane %v1176, 4
      %1182 = vrot.lane.b32.xlu0 %v1181, 4
      %v1183 = vpop.permute.xlu0 %1182
      %v1185 = vsub.f32 %v1176, %v1183
      %v1186 = vmul.f32 %v1179, 2.0
      %v1188 = vrot.slane %v1186, 4
      %v1190 = vrcp.pop %v1188
      %v1191 = vmul.f32 %v1185, %v1190
      %vm1192 = vcmp.ge.f32.partialorder %v1191, 0.0
      %v1193 = vsel %vm1192, 1.0, -1.0
      %v1194 = vand.u32 2147483647, %v1191
      %v1195 = vmul.f32 %v1191, %v1191
      %v1196 = vadd.f32 %v1195, 1.0
      %v1197 = vrsqrt.pop %v1196
      %v1198 = vmul.f32 %v1196, %v1197
      %vm1199 = vcmp.eq.f32.partialorder %v1196, inf
      %v1200 = vsel %vm1199, %v1196, %v1198
      %vm1201 = vcmp.eq.f32.partialorder %v1196, 0.0
      %v1202 = vand.u32 %v1196, 2147483648
      %v1203 = vsel %vm1201, %v1202, %v1200
      %v1204 = vadd.f32 %v1194, %v1203
      %v1205 = vrcp.pop %v1204
      %v1206 = vmul.f32 %v1193, %v1205
      %v1207 = vmul.f32 %v1206, %v1206
      %v1208 = vadd.f32 %v1207, 1.0
      %v1209 = vrsqrt.pop %v1208
      %v1210 = vmul.f32 %v1206, %v1209
      %v1212 = vrot.slane %v1209, 4
      %v1214 = vsel %vm1178, %v1212, 1.0
      %v1216 = vrot.slane %v1210, 4
      %v1218 = vsel %vm1178, %v1216, 0.0
      %1220 = vset.pattern.permute.xlu0 5
      %1221 = vperm.xlu0 %1220, %v1214
      %v1222 = vpop.permute.xlu0 %1221
      %v1224 = vmul.f32 %v1222, %v1176
      %1226 = vset.pattern.permute.xlu0 5
      %1227 = vperm.xlu0 %1226, %v1218
      %v1228 = vpop.permute.xlu0 %1227
      %v1231 = vmul.f32 %v1228, %v1181
      %v1232 = vsub.f32 %v1224, %v1231
      %v1233 = vmul.f32 %v1228, %v1176
      %v1234 = vmul.f32 %v1222, %v1181
      %v1235 = vadd.f32 %v1233, %v1234
      %v1236 = vlaneseq
      %v1237 = vshrl.u32 %v1236, 7
      %v1238 = vsub.s32 1, %v1237
      %v1239 = vrot.slane %v1235, %v1238
      %v1240 = vsel %vm628, %v1239, %v1176
      %v1241 = vlaneseq
      %v1242 = vshrl.u32 %v1241, 7
      %v1243 = vsub.s32 1, %v1242
      %v1244 = vrot.slane %v1232, %v1243
      %v1245 = vsel %vm220, %v1244, %v1240
      %v1246 = vlaneseq
      %v1247 = vshrl.u32 %v1246, 7
      %v1248 = vsub.s32 1, %v1247
      %v1249 = vrot.slane %v1214, %v1248
      %1251 = vrot.lane.b32.xlu0 %v1245, 4
      %v1252 = vpop.permute.xlu0 %1251
      %v1254 = vmul.f32 %v1249, %v1252
      %v1255 = vlaneseq
      %v1256 = vshrl.u32 %v1255, 7
      %v1257 = vsub.s32 1, %v1256
      %v1258 = vrot.slane %v1218, %v1257
      %v1259 = vmul.f32 %v1258, %v1245
      %v1260 = vsub.f32 %v1254, %v1259
      %v1261 = vmul.f32 %v1258, %v1252
      %v1262 = vmul.f32 %v1249, %v1245
      %v1263 = vadd.f32 %v1261, %v1262
      %1265 = vset.pattern.permute.xlu0 5
      %1266 = vperm.xlu0 %1265, %v1263
      %v1267 = vpop.permute.xlu0 %1266
      %v1269 = vsel %vm657, %v1267, %v1245
      %1271 = vset.pattern.permute.xlu0 5
      %1272 = vperm.xlu0 %1271, %v1260
      %v1273 = vpop.permute.xlu0 %1272
      %v1275 = vsel %vm250, %v1273, %v1269
      %v1276 = vand.u32 2147483647, %v1275
      %vm1277 = vcmp.gt.f32.partialorder %v1276, 1e-12
      %v1278 = vsel %vm1277, %v1275, 1.0
      %v1280 = vrot.slane %v1275, 3
      %1281 = vrot.lane.b32.xlu0 %v1280, 5
      %v1282 = vpop.permute.xlu0 %1281
      %v1284 = vsub.f32 %v1275, %v1282
      %v1285 = vmul.f32 %v1278, 2.0
      %v1287 = vrot.slane %v1285, 3
      %v1289 = vrcp.pop %v1287
      %v1290 = vmul.f32 %v1284, %v1289
      %vm1291 = vcmp.ge.f32.partialorder %v1290, 0.0
      %v1292 = vsel %vm1291, 1.0, -1.0
      %v1293 = vand.u32 2147483647, %v1290
      %v1294 = vmul.f32 %v1290, %v1290
      %v1295 = vadd.f32 %v1294, 1.0
      %v1296 = vrsqrt.pop %v1295
      %v1297 = vmul.f32 %v1295, %v1296
      %vm1298 = vcmp.eq.f32.partialorder %v1295, inf
      %v1299 = vsel %vm1298, %v1295, %v1297
      %vm1300 = vcmp.eq.f32.partialorder %v1295, 0.0
      %v1301 = vand.u32 %v1295, 2147483648
      %v1302 = vsel %vm1300, %v1301, %v1299
      %v1303 = vadd.f32 %v1293, %v1302
      %v1304 = vrcp.pop %v1303
      %v1305 = vmul.f32 %v1292, %v1304
      %v1306 = vmul.f32 %v1305, %v1305
      %v1307 = vadd.f32 %v1306, 1.0
      %v1308 = vrsqrt.pop %v1307
      %v1309 = vmul.f32 %v1305, %v1308
      %v1311 = vrot.slane %v1308, 5
      %v1313 = vsel %vm1277, %v1311, 1.0
      %v1315 = vrot.slane %v1309, 5
      %v1317 = vsel %vm1277, %v1315, 0.0
      %1319 = vset.pattern.permute.xlu0 6
      %1320 = vperm.xlu0 %1319, %v1313
      %v1321 = vpop.permute.xlu0 %1320
      %v1323 = vmul.f32 %v1321, %v1275
      %1325 = vset.pattern.permute.xlu0 6
      %1326 = vperm.xlu0 %1325, %v1317
      %v1327 = vpop.permute.xlu0 %1326
      %v1329 = vrot.slane %v1275, 5
      %v1331 = vmul.f32 %v1327, %v1329
      %v1332 = vsub.f32 %v1323, %v1331
      %v1333 = vmul.f32 %v1327, %v1275
      %v1334 = vmul.f32 %v1321, %v1329
      %v1335 = vadd.f32 %v1333, %v1334
      %v1336 = vlaneseq
      %v1337 = vshrl.u32 %v1336, 7
      %v1338 = vsub.s32 1, %v1337
      %v1339 = vrot.slane %v1335, %v1338
      %v1340 = vsel %vm730, %v1339, %v1275
      %v1341 = vlaneseq
      %v1342 = vshrl.u32 %v1341, 7
      %v1343 = vsub.s32 1, %v1342
      %v1344 = vrot.slane %v1332, %v1343
      %v1345 = vsel %vm220, %v1344, %v1340
      %v1346 = vlaneseq
      %v1347 = vshrl.u32 %v1346, 7
      %v1348 = vsub.s32 1, %v1347
      %v1349 = vrot.slane %v1313, %v1348
      %1351 = vrot.lane.b32.xlu0 %v1345, 5
      %v1352 = vpop.permute.xlu0 %1351
      %v1354 = vmul.f32 %v1349, %v1352
      %v1355 = vlaneseq
      %v1356 = vshrl.u32 %v1355, 7
      %v1357 = vsub.s32 1, %v1356
      %v1358 = vrot.slane %v1317, %v1357
      %v1359 = vmul.f32 %v1358, %v1345
      %v1360 = vsub.f32 %v1354, %v1359
      %v1361 = vmul.f32 %v1358, %v1352
      %v1362 = vmul.f32 %v1349, %v1345
      %v1363 = vadd.f32 %v1361, %v1362
      %1365 = vset.pattern.permute.xlu0 6
      %1366 = vperm.xlu0 %1365, %v1363
      %v1367 = vpop.permute.xlu0 %1366
      %v1369 = vsel %vm759, %v1367, %v1345
      %1371 = vset.pattern.permute.xlu0 6
      %1372 = vperm.xlu0 %1371, %v1360
      %v1373 = vpop.permute.xlu0 %1372
      %v1375 = vsel %vm250, %v1373, %v1369
      %v1376 = vand.u32 2147483647, %v1375
      %vm1377 = vcmp.gt.f32.partialorder %v1376, 1e-12
      %v1378 = vsel %vm1377, %v1375, 1.0
      %v1380 = vrot.slane %v1375, 2
      %1381 = vrot.lane.b32.xlu0 %v1380, 6
      %v1382 = vpop.permute.xlu0 %1381
      %v1384 = vsub.f32 %v1375, %v1382
      %v1385 = vmul.f32 %v1378, 2.0
      %v1387 = vrot.slane %v1385, 2
      %v1389 = vrcp.pop %v1387
      %v1390 = vmul.f32 %v1384, %v1389
      %vm1391 = vcmp.ge.f32.partialorder %v1390, 0.0
      %v1392 = vsel %vm1391, 1.0, -1.0
      %v1393 = vand.u32 2147483647, %v1390
      %v1394 = vmul.f32 %v1390, %v1390
      %v1395 = vadd.f32 %v1394, 1.0
      %v1396 = vrsqrt.pop %v1395
      %v1397 = vmul.f32 %v1395, %v1396
      %vm1398 = vcmp.eq.f32.partialorder %v1395, inf
      %v1399 = vsel %vm1398, %v1395, %v1397
      %vm1400 = vcmp.eq.f32.partialorder %v1395, 0.0
      %v1401 = vand.u32 %v1395, 2147483648
      %v1402 = vsel %vm1400, %v1401, %v1399
      %v1403 = vadd.f32 %v1393, %v1402
      %v1404 = vrcp.pop %v1403
      %v1405 = vmul.f32 %v1392, %v1404
      %v1406 = vmul.f32 %v1405, %v1405
      %v1407 = vadd.f32 %v1406, 1.0
      %v1408 = vrsqrt.pop %v1407
      %v1409 = vmul.f32 %v1405, %v1408
      %v1411 = vrot.slane %v1408, 6
      %v1413 = vsel %vm1377, %v1411, 1.0
      %v1415 = vrot.slane %v1409, 6
      %v1417 = vsel %vm1377, %v1415, 0.0
      %1419 = vset.pattern.permute.xlu0 7
      %1420 = vperm.xlu0 %1419, %v1413
      %v1421 = vpop.permute.xlu0 %1420
      %v1423 = vmul.f32 %v1421, %v1375
      %1425 = vset.pattern.permute.xlu0 7
      %1426 = vperm.xlu0 %1425, %v1417
      %v1427 = vpop.permute.xlu0 %1426
      %v1429 = vrot.slane %v1375, 6
      %v1431 = vmul.f32 %v1427, %v1429
      %v1432 = vsub.f32 %v1423, %v1431
      %v1433 = vmul.f32 %v1427, %v1375
      %v1434 = vmul.f32 %v1421, %v1429
      %v1435 = vadd.f32 %v1433, %v1434
      %v1436 = vlaneseq
      %v1437 = vshrl.u32 %v1436, 7
      %v1438 = vsub.s32 1, %v1437
      %v1439 = vrot.slane %v1435, %v1438
      %v1440 = vsel %vm832, %v1439, %v1375
      %v1441 = vlaneseq
      %v1442 = vshrl.u32 %v1441, 7
      %v1443 = vsub.s32 1, %v1442
      %v1444 = vrot.slane %v1432, %v1443
      %v1445 = vsel %vm220, %v1444, %v1440
      %v1446 = vlaneseq
      %v1447 = vshrl.u32 %v1446, 7
      %v1448 = vsub.s32 1, %v1447
      %v1449 = vrot.slane %v1413, %v1448
      %1451 = vrot.lane.b32.xlu0 %v1445, 6
      %v1452 = vpop.permute.xlu0 %1451
      %v1454 = vmul.f32 %v1449, %v1452
      %v1455 = vlaneseq
      %v1456 = vshrl.u32 %v1455, 7
      %v1457 = vsub.s32 1, %v1456
      %v1458 = vrot.slane %v1417, %v1457
      %v1459 = vmul.f32 %v1458, %v1445
      %v1460 = vsub.f32 %v1454, %v1459
      %v1461 = vmul.f32 %v1458, %v1452
      %v1462 = vmul.f32 %v1449, %v1445
      %v1463 = vadd.f32 %v1461, %v1462
      %1465 = vset.pattern.permute.xlu0 7
      %1466 = vperm.xlu0 %1465, %v1463
      %v1467 = vpop.permute.xlu0 %1466
      %v1469 = vsel %vm861, %v1467, %v1445
      %1471 = vset.pattern.permute.xlu0 7
      %1472 = vperm.xlu0 %1471, %v1460
      %v1473 = vpop.permute.xlu0 %1472
      %v1475 = vsel %vm250, %v1473, %v1469
      %v1476 = vand.u32 2147483647, %v1475
      %vm1477 = vcmp.gt.f32.partialorder %v1476, 1e-12
      %v1478 = vsel %vm1477, %v1475, 1.0
      %v1480 = vrot.slane %v1475, 7
      %1481 = vrot.lane.b32.xlu0 %v1480, 1
      %v1482 = vpop.permute.xlu0 %1481
      %v1484 = vsub.f32 %v1475, %v1482
      %v1485 = vmul.f32 %v1478, 2.0
      %v1487 = vrot.slane %v1485, 7
      %v1489 = vrcp.pop %v1487
      %v1490 = vmul.f32 %v1484, %v1489
      %vm1491 = vcmp.ge.f32.partialorder %v1490, 0.0
      %v1492 = vsel %vm1491, 1.0, -1.0
      %v1493 = vand.u32 2147483647, %v1490
      %v1494 = vmul.f32 %v1490, %v1490
      %v1495 = vadd.f32 %v1494, 1.0
      %v1496 = vrsqrt.pop %v1495
      %v1497 = vmul.f32 %v1495, %v1496
      %vm1498 = vcmp.eq.f32.partialorder %v1495, inf
      %v1499 = vsel %vm1498, %v1495, %v1497
      %vm1500 = vcmp.eq.f32.partialorder %v1495, 0.0
      %v1501 = vand.u32 %v1495, 2147483648
      %v1502 = vsel %vm1500, %v1501, %v1499
      %v1503 = vadd.f32 %v1493, %v1502
      %v1504 = vrcp.pop %v1503
      %v1505 = vmul.f32 %v1492, %v1504
      %v1506 = vmul.f32 %v1505, %v1505
      %v1507 = vadd.f32 %v1506, 1.0
      %v1508 = vrsqrt.pop %v1507
      %v1509 = vmul.f32 %v1505, %v1508
      %v1511 = vrot.slane %v1508, 1
      %v1513 = vsel %vm1477, %v1511, 1.0
      %v1515 = vrot.slane %v1509, 1
      %v1517 = vsel %vm1477, %v1515, 0.0
      %1519 = vset.pattern.permute.xlu0 3
      %1520 = vperm.xlu0 %1519, %v1513
      %v1521 = vpop.permute.xlu0 %1520
      %v1523 = vmul.f32 %v1521, %v1475
      %1525 = vset.pattern.permute.xlu0 3
      %1526 = vperm.xlu0 %1525, %v1517
      %v1527 = vpop.permute.xlu0 %1526
      %v1529 = vrot.slane %v1475, 1
      %v1531 = vmul.f32 %v1527, %v1529
      %v1532 = vsub.f32 %v1523, %v1531
      %v1533 = vmul.f32 %v1527, %v1475
      %v1534 = vmul.f32 %v1521, %v1529
      %v1535 = vadd.f32 %v1533, %v1534
      %v1536 = vlaneseq
      %v1537 = vshrl.u32 %v1536, 7
      %v1538 = vsub.s32 2, %v1537
      %v1539 = vrot.slane %v1535, %v1538
      %v1540 = vsel %vm425, %v1539, %v1475
      %v1541 = vlaneseq
      %v1542 = vshrl.u32 %v1541, 7
      %v1543 = vsub.s32 2, %v1542
      %v1544 = vrot.slane %v1532, %v1543
      %v1545 = vsel %vm323, %v1544, %v1540
      %v1546 = vlaneseq
      %v1547 = vshrl.u32 %v1546, 7
      %v1548 = vsub.s32 2, %v1547
      %v1549 = vrot.slane %v1513, %v1548
      %1551 = vrot.lane.b32.xlu0 %v1545, 1
      %v1552 = vpop.permute.xlu0 %1551
      %v1554 = vmul.f32 %v1549, %v1552
      %v1555 = vlaneseq
      %v1556 = vshrl.u32 %v1555, 7
      %v1557 = vsub.s32 2, %v1556
      %v1558 = vrot.slane %v1517, %v1557
      %v1559 = vmul.f32 %v1558, %v1545
      %v1560 = vsub.f32 %v1554, %v1559
      %v1561 = vmul.f32 %v1558, %v1552
      %v1562 = vmul.f32 %v1549, %v1545
      %v1563 = vadd.f32 %v1561, %v1562
      %1565 = vset.pattern.permute.xlu0 3
      %1566 = vperm.xlu0 %1565, %v1563
      %v1567 = vpop.permute.xlu0 %1566
      %v1569 = vsel %vm454, %v1567, %v1545
      %1571 = vset.pattern.permute.xlu0 3
      %1572 = vperm.xlu0 %1571, %v1560
      %v1573 = vpop.permute.xlu0 %1572
      %v1575 = vsel %vm352, %v1573, %v1569
      %v1576 = vand.u32 2147483647, %v1575
      %vm1577 = vcmp.gt.f32.partialorder %v1576, 1e-12
      %v1578 = vsel %vm1577, %v1575, 1.0
      %v1580 = vrot.slane %v1575, 6
      %1581 = vrot.lane.b32.xlu0 %v1580, 2
      %v1582 = vpop.permute.xlu0 %1581
      %v1584 = vsub.f32 %v1575, %v1582
      %v1585 = vmul.f32 %v1578, 2.0
      %v1587 = vrot.slane %v1585, 6
      %v1589 = vrcp.pop %v1587
      %v1590 = vmul.f32 %v1584, %v1589
      %vm1591 = vcmp.ge.f32.partialorder %v1590, 0.0
      %v1592 = vsel %vm1591, 1.0, -1.0
      %v1593 = vand.u32 2147483647, %v1590
      %v1594 = vmul.f32 %v1590, %v1590
      %v1595 = vadd.f32 %v1594, 1.0
      %v1596 = vrsqrt.pop %v1595
      %v1597 = vmul.f32 %v1595, %v1596
      %vm1598 = vcmp.eq.f32.partialorder %v1595, inf
      %v1599 = vsel %vm1598, %v1595, %v1597
      %vm1600 = vcmp.eq.f32.partialorder %v1595, 0.0
      %v1601 = vand.u32 %v1595, 2147483648
      %v1602 = vsel %vm1600, %v1601, %v1599
      %v1603 = vadd.f32 %v1593, %v1602
      %v1604 = vrcp.pop %v1603
      %v1605 = vmul.f32 %v1592, %v1604
      %v1606 = vmul.f32 %v1605, %v1605
      %v1607 = vadd.f32 %v1606, 1.0
      %v1608 = vrsqrt.pop %v1607
      %v1609 = vmul.f32 %v1605, %v1608
      %v1611 = vrot.slane %v1608, 2
      %v1613 = vsel %vm1577, %v1611, 1.0
      %v1615 = vrot.slane %v1609, 2
      %v1617 = vsel %vm1577, %v1615, 0.0
      %1619 = vset.pattern.permute.xlu0 4
      %1620 = vperm.xlu0 %1619, %v1613
      %v1621 = vpop.permute.xlu0 %1620
      %v1623 = vmul.f32 %v1621, %v1575
      %1625 = vset.pattern.permute.xlu0 4
      %1626 = vperm.xlu0 %1625, %v1617
      %v1627 = vpop.permute.xlu0 %1626
      %v1629 = vrot.slane %v1575, 2
      %v1631 = vmul.f32 %v1627, %v1629
      %v1632 = vsub.f32 %v1623, %v1631
      %v1633 = vmul.f32 %v1627, %v1575
      %v1634 = vmul.f32 %v1621, %v1629
      %v1635 = vadd.f32 %v1633, %v1634
      %v1636 = vlaneseq
      %v1637 = vshrl.u32 %v1636, 7
      %v1638 = vsub.s32 2, %v1637
      %v1639 = vrot.slane %v1635, %v1638
      %v1640 = vsel %vm526, %v1639, %v1575
      %v1641 = vlaneseq
      %v1642 = vshrl.u32 %v1641, 7
      %v1643 = vsub.s32 2, %v1642
      %v1644 = vrot.slane %v1632, %v1643
      %v1645 = vsel %vm323, %v1644, %v1640
      %v1646 = vlaneseq
      %v1647 = vshrl.u32 %v1646, 7
      %v1648 = vsub.s32 2, %v1647
      %v1649 = vrot.slane %v1613, %v1648
      %1651 = vrot.lane.b32.xlu0 %v1645, 2
      %v1652 = vpop.permute.xlu0 %1651
      %v1654 = vmul.f32 %v1649, %v1652
      %v1655 = vlaneseq
      %v1656 = vshrl.u32 %v1655, 7
      %v1657 = vsub.s32 2, %v1656
      %v1658 = vrot.slane %v1617, %v1657
      %v1659 = vmul.f32 %v1658, %v1645
      %v1660 = vsub.f32 %v1654, %v1659
      %v1661 = vmul.f32 %v1658, %v1652
      %v1662 = vmul.f32 %v1649, %v1645
      %v1663 = vadd.f32 %v1661, %v1662
      %1665 = vset.pattern.permute.xlu0 4
      %1666 = vperm.xlu0 %1665, %v1663
      %v1667 = vpop.permute.xlu0 %1666
      %v1669 = vsel %vm555, %v1667, %v1645
      %1671 = vset.pattern.permute.xlu0 4
      %1672 = vperm.xlu0 %1671, %v1660
      %v1673 = vpop.permute.xlu0 %1672
      %v1675 = vsel %vm352, %v1673, %v1669
      %v1676 = vand.u32 2147483647, %v1675
      %vm1677 = vcmp.gt.f32.partialorder %v1676, 1e-12
      %v1678 = vsel %vm1677, %v1675, 1.0
      %v1680 = vrot.slane %v1675, 5
      %1681 = vrot.lane.b32.xlu0 %v1680, 3
      %v1682 = vpop.permute.xlu0 %1681
      %v1684 = vsub.f32 %v1675, %v1682
      %v1685 = vmul.f32 %v1678, 2.0
      %v1687 = vrot.slane %v1685, 5
      %v1689 = vrcp.pop %v1687
      %v1690 = vmul.f32 %v1684, %v1689
      %vm1691 = vcmp.ge.f32.partialorder %v1690, 0.0
      %v1692 = vsel %vm1691, 1.0, -1.0
      %v1693 = vand.u32 2147483647, %v1690
      %v1694 = vmul.f32 %v1690, %v1690
      %v1695 = vadd.f32 %v1694, 1.0
      %v1696 = vrsqrt.pop %v1695
      %v1697 = vmul.f32 %v1695, %v1696
      %vm1698 = vcmp.eq.f32.partialorder %v1695, inf
      %v1699 = vsel %vm1698, %v1695, %v1697
      %vm1700 = vcmp.eq.f32.partialorder %v1695, 0.0
      %v1701 = vand.u32 %v1695, 2147483648
      %v1702 = vsel %vm1700, %v1701, %v1699
      %v1703 = vadd.f32 %v1693, %v1702
      %v1704 = vrcp.pop %v1703
      %v1705 = vmul.f32 %v1692, %v1704
      %v1706 = vmul.f32 %v1705, %v1705
      %v1707 = vadd.f32 %v1706, 1.0
      %v1708 = vrsqrt.pop %v1707
      %v1709 = vmul.f32 %v1705, %v1708
      %v1711 = vrot.slane %v1708, 3
      %v1713 = vsel %vm1677, %v1711, 1.0
      %v1715 = vrot.slane %v1709, 3
      %v1717 = vsel %vm1677, %v1715, 0.0
      %1719 = vset.pattern.permute.xlu0 5
      %1720 = vperm.xlu0 %1719, %v1713
      %v1721 = vpop.permute.xlu0 %1720
      %v1723 = vmul.f32 %v1721, %v1675
      %1725 = vset.pattern.permute.xlu0 5
      %1726 = vperm.xlu0 %1725, %v1717
      %v1727 = vpop.permute.xlu0 %1726
      %v1729 = vrot.slane %v1675, 3
      %v1731 = vmul.f32 %v1727, %v1729
      %v1732 = vsub.f32 %v1723, %v1731
      %v1733 = vmul.f32 %v1727, %v1675
      %v1734 = vmul.f32 %v1721, %v1729
      %v1735 = vadd.f32 %v1733, %v1734
      %v1736 = vlaneseq
      %v1737 = vshrl.u32 %v1736, 7
      %v1738 = vsub.s32 2, %v1737
      %v1739 = vrot.slane %v1735, %v1738
      %v1740 = vsel %vm628, %v1739, %v1675
      %v1741 = vlaneseq
      %v1742 = vshrl.u32 %v1741, 7
      %v1743 = vsub.s32 2, %v1742
      %v1744 = vrot.slane %v1732, %v1743
      %v1745 = vsel %vm323, %v1744, %v1740
      %v1746 = vlaneseq
      %v1747 = vshrl.u32 %v1746, 7
      %v1748 = vsub.s32 2, %v1747
      %v1749 = vrot.slane %v1713, %v1748
      %1751 = vrot.lane.b32.xlu0 %v1745, 3
      %v1752 = vpop.permute.xlu0 %1751
      %v1754 = vmul.f32 %v1749, %v1752
      %v1755 = vlaneseq
      %v1756 = vshrl.u32 %v1755, 7
      %v1757 = vsub.s32 2, %v1756
      %v1758 = vrot.slane %v1717, %v1757
      %v1759 = vmul.f32 %v1758, %v1745
      %v1760 = vsub.f32 %v1754, %v1759
      %v1761 = vmul.f32 %v1758, %v1752
      %v1762 = vmul.f32 %v1749, %v1745
      %v1763 = vadd.f32 %v1761, %v1762
      %1765 = vset.pattern.permute.xlu0 5
      %1766 = vperm.xlu0 %1765, %v1763
      %v1767 = vpop.permute.xlu0 %1766
      %v1769 = vsel %vm657, %v1767, %v1745
      %1771 = vset.pattern.permute.xlu0 5
      %1772 = vperm.xlu0 %1771, %v1760
      %v1773 = vpop.permute.xlu0 %1772
      %v1775 = vsel %vm352, %v1773, %v1769
      %v1776 = vand.u32 2147483647, %v1775
      %vm1777 = vcmp.gt.f32.partialorder %v1776, 1e-12
      %v1778 = vsel %vm1777, %v1775, 1.0
      %v1780 = vrot.slane %v1775, 4
      %1781 = vrot.lane.b32.xlu0 %v1780, 4
      %v1782 = vpop.permute.xlu0 %1781
      %v1784 = vsub.f32 %v1775, %v1782
      %v1785 = vmul.f32 %v1778, 2.0
      %v1787 = vrot.slane %v1785, 4
      %v1789 = vrcp.pop %v1787
      %v1790 = vmul.f32 %v1784, %v1789
      %vm1791 = vcmp.ge.f32.partialorder %v1790, 0.0
      %v1792 = vsel %vm1791, 1.0, -1.0
      %v1793 = vand.u32 2147483647, %v1790
      %v1794 = vmul.f32 %v1790, %v1790
      %v1795 = vadd.f32 %v1794, 1.0
      %v1796 = vrsqrt.pop %v1795
      %v1797 = vmul.f32 %v1795, %v1796
      %vm1798 = vcmp.eq.f32.partialorder %v1795, inf
      %v1799 = vsel %vm1798, %v1795, %v1797
      %vm1800 = vcmp.eq.f32.partialorder %v1795, 0.0
      %v1801 = vand.u32 %v1795, 2147483648
      %v1802 = vsel %vm1800, %v1801, %v1799
      %v1803 = vadd.f32 %v1793, %v1802
      %v1804 = vrcp.pop %v1803
      %v1805 = vmul.f32 %v1792, %v1804
      %v1806 = vmul.f32 %v1805, %v1805
      %v1807 = vadd.f32 %v1806, 1.0
      %v1808 = vrsqrt.pop %v1807
      %v1809 = vmul.f32 %v1805, %v1808
      %v1811 = vrot.slane %v1808, 4
      %v1813 = vsel %vm1777, %v1811, 1.0
      %v1815 = vrot.slane %v1809, 4
      %v1817 = vsel %vm1777, %v1815, 0.0
      %1819 = vset.pattern.permute.xlu0 6
      %1820 = vperm.xlu0 %1819, %v1813
      %v1821 = vpop.permute.xlu0 %1820
      %v1823 = vmul.f32 %v1821, %v1775
      %1825 = vset.pattern.permute.xlu0 6
      %1826 = vperm.xlu0 %1825, %v1817
      %v1827 = vpop.permute.xlu0 %1826
      %v1830 = vmul.f32 %v1827, %v1780
      %v1831 = vsub.f32 %v1823, %v1830
      %v1832 = vmul.f32 %v1827, %v1775
      %v1833 = vmul.f32 %v1821, %v1780
      %v1834 = vadd.f32 %v1832, %v1833
      %v1835 = vlaneseq
      %v1836 = vshrl.u32 %v1835, 7
      %v1837 = vsub.s32 2, %v1836
      %v1838 = vrot.slane %v1834, %v1837
      %v1839 = vsel %vm730, %v1838, %v1775
      %v1840 = vlaneseq
      %v1841 = vshrl.u32 %v1840, 7
      %v1842 = vsub.s32 2, %v1841
      %v1843 = vrot.slane %v1831, %v1842
      %v1844 = vsel %vm323, %v1843, %v1839
      %v1845 = vlaneseq
      %v1846 = vshrl.u32 %v1845, 7
      %v1847 = vsub.s32 2, %v1846
      %v1848 = vrot.slane %v1813, %v1847
      %1850 = vrot.lane.b32.xlu0 %v1844, 4
      %v1851 = vpop.permute.xlu0 %1850
      %v1853 = vmul.f32 %v1848, %v1851
      %v1854 = vlaneseq
      %v1855 = vshrl.u32 %v1854, 7
      %v1856 = vsub.s32 2, %v1855
      %v1857 = vrot.slane %v1817, %v1856
      %v1858 = vmul.f32 %v1857, %v1844
      %v1859 = vsub.f32 %v1853, %v1858
      %v1860 = vmul.f32 %v1857, %v1851
      %v1861 = vmul.f32 %v1848, %v1844
      %v1862 = vadd.f32 %v1860, %v1861
      %1864 = vset.pattern.permute.xlu0 6
      %1865 = vperm.xlu0 %1864, %v1862
      %v1866 = vpop.permute.xlu0 %1865
      %v1868 = vsel %vm759, %v1866, %v1844
      %1870 = vset.pattern.permute.xlu0 6
      %1871 = vperm.xlu0 %1870, %v1859
      %v1872 = vpop.permute.xlu0 %1871
      %v1874 = vsel %vm352, %v1872, %v1868
      %v1875 = vand.u32 2147483647, %v1874
      %vm1876 = vcmp.gt.f32.partialorder %v1875, 1e-12
      %v1877 = vsel %vm1876, %v1874, 1.0
      %v1879 = vrot.slane %v1874, 3
      %1880 = vrot.lane.b32.xlu0 %v1879, 5
      %v1881 = vpop.permute.xlu0 %1880
      %v1883 = vsub.f32 %v1874, %v1881
      %v1884 = vmul.f32 %v1877, 2.0
      %v1886 = vrot.slane %v1884, 3
      %v1888 = vrcp.pop %v1886
      %v1889 = vmul.f32 %v1883, %v1888
      %vm1890 = vcmp.ge.f32.partialorder %v1889, 0.0
      %v1891 = vsel %vm1890, 1.0, -1.0
      %v1892 = vand.u32 2147483647, %v1889
      %v1893 = vmul.f32 %v1889, %v1889
      %v1894 = vadd.f32 %v1893, 1.0
      %v1895 = vrsqrt.pop %v1894
      %v1896 = vmul.f32 %v1894, %v1895
      %vm1897 = vcmp.eq.f32.partialorder %v1894, inf
      %v1898 = vsel %vm1897, %v1894, %v1896
      %vm1899 = vcmp.eq.f32.partialorder %v1894, 0.0
      %v1900 = vand.u32 %v1894, 2147483648
      %v1901 = vsel %vm1899, %v1900, %v1898
      %v1902 = vadd.f32 %v1892, %v1901
      %v1903 = vrcp.pop %v1902
      %v1904 = vmul.f32 %v1891, %v1903
      %v1905 = vmul.f32 %v1904, %v1904
      %v1906 = vadd.f32 %v1905, 1.0
      %v1907 = vrsqrt.pop %v1906
      %v1908 = vmul.f32 %v1904, %v1907
      %v1910 = vrot.slane %v1907, 5
      %v1912 = vsel %vm1876, %v1910, 1.0
      %v1914 = vrot.slane %v1908, 5
      %v1916 = vsel %vm1876, %v1914, 0.0
      %1918 = vset.pattern.permute.xlu0 7
      %1919 = vperm.xlu0 %1918, %v1912
      %v1920 = vpop.permute.xlu0 %1919
      %v1922 = vmul.f32 %v1920, %v1874
      %1924 = vset.pattern.permute.xlu0 7
      %1925 = vperm.xlu0 %1924, %v1916
      %v1926 = vpop.permute.xlu0 %1925
      %v1928 = vrot.slane %v1874, 5
      %v1930 = vmul.f32 %v1926, %v1928
      %v1931 = vsub.f32 %v1922, %v1930
      %v1932 = vmul.f32 %v1926, %v1874
      %v1933 = vmul.f32 %v1920, %v1928
      %v1934 = vadd.f32 %v1932, %v1933
      %v1935 = vlaneseq
      %v1936 = vshrl.u32 %v1935, 7
      %v1937 = vsub.s32 2, %v1936
      %v1938 = vrot.slane %v1934, %v1937
      %v1939 = vsel %vm832, %v1938, %v1874
      %v1940 = vlaneseq
      %v1941 = vshrl.u32 %v1940, 7
      %v1942 = vsub.s32 2, %v1941
      %v1943 = vrot.slane %v1931, %v1942
      %v1944 = vsel %vm323, %v1943, %v1939
      %v1945 = vlaneseq
      %v1946 = vshrl.u32 %v1945, 7
      %v1947 = vsub.s32 2, %v1946
      %v1948 = vrot.slane %v1912, %v1947
      %1950 = vrot.lane.b32.xlu0 %v1944, 5
      %v1951 = vpop.permute.xlu0 %1950
      %v1953 = vmul.f32 %v1948, %v1951
      %v1954 = vlaneseq
      %v1955 = vshrl.u32 %v1954, 7
      %v1956 = vsub.s32 2, %v1955
      %v1957 = vrot.slane %v1916, %v1956
      %v1958 = vmul.f32 %v1957, %v1944
      %v1959 = vsub.f32 %v1953, %v1958
      %v1960 = vmul.f32 %v1957, %v1951
      %v1961 = vmul.f32 %v1948, %v1944
      %v1962 = vadd.f32 %v1960, %v1961
      %1964 = vset.pattern.permute.xlu0 7
      %1965 = vperm.xlu0 %1964, %v1962
      %v1966 = vpop.permute.xlu0 %1965
      %v1968 = vsel %vm861, %v1966, %v1944
      %1970 = vset.pattern.permute.xlu0 7
      %1971 = vperm.xlu0 %1970, %v1959
      %v1972 = vpop.permute.xlu0 %1971
      %v1974 = vsel %vm352, %v1972, %v1968
      %v1975 = vand.u32 2147483647, %v1974
      %vm1976 = vcmp.gt.f32.partialorder %v1975, 1e-12
      %v1977 = vsel %vm1976, %v1974, 1.0
      %v1979 = vrot.slane %v1974, 7
      %1980 = vrot.lane.b32.xlu0 %v1979, 1
      %v1981 = vpop.permute.xlu0 %1980
      %v1983 = vsub.f32 %v1974, %v1981
      %v1984 = vmul.f32 %v1977, 2.0
      %v1986 = vrot.slane %v1984, 7
      %v1988 = vrcp.pop %v1986
      %v1989 = vmul.f32 %v1983, %v1988
      %vm1990 = vcmp.ge.f32.partialorder %v1989, 0.0
      %v1991 = vsel %vm1990, 1.0, -1.0
      %v1992 = vand.u32 2147483647, %v1989
      %v1993 = vmul.f32 %v1989, %v1989
      %v1994 = vadd.f32 %v1993, 1.0
      %v1995 = vrsqrt.pop %v1994
      %v1996 = vmul.f32 %v1994, %v1995
      %vm1997 = vcmp.eq.f32.partialorder %v1994, inf
      %v1998 = vsel %vm1997, %v1994, %v1996
      %vm1999 = vcmp.eq.f32.partialorder %v1994, 0.0
      %v2000 = vand.u32 %v1994, 2147483648
      %v2001 = vsel %vm1999, %v2000, %v1998
      %v2002 = vadd.f32 %v1992, %v2001
      %v2003 = vrcp.pop %v2002
      %v2004 = vmul.f32 %v1991, %v2003
      %v2005 = vmul.f32 %v2004, %v2004
      %v2006 = vadd.f32 %v2005, 1.0
      %v2007 = vrsqrt.pop %v2006
      %v2008 = vmul.f32 %v2004, %v2007
      %v2010 = vrot.slane %v2007, 1
      %v2012 = vsel %vm1976, %v2010, 1.0
      %v2014 = vrot.slane %v2008, 1
      %v2016 = vsel %vm1976, %v2014, 0.0
      %2018 = vset.pattern.permute.xlu0 4
      %2019 = vperm.xlu0 %2018, %v2012
      %v2020 = vpop.permute.xlu0 %2019
      %v2022 = vmul.f32 %v2020, %v1974
      %2024 = vset.pattern.permute.xlu0 4
      %2025 = vperm.xlu0 %2024, %v2016
      %v2026 = vpop.permute.xlu0 %2025
      %v2028 = vrot.slane %v1974, 1
      %v2030 = vmul.f32 %v2026, %v2028
      %v2031 = vsub.f32 %v2022, %v2030
      %v2032 = vmul.f32 %v2026, %v1974
      %v2033 = vmul.f32 %v2020, %v2028
      %v2034 = vadd.f32 %v2032, %v2033
      %v2035 = vlaneseq
      %v2036 = vshrl.u32 %v2035, 7
      %v2037 = vsub.s32 3, %v2036
      %v2038 = vrot.slane %v2034, %v2037
      %v2039 = vsel %vm526, %v2038, %v1974
      %v2040 = vlaneseq
      %v2041 = vshrl.u32 %v2040, 7
      %v2042 = vsub.s32 3, %v2041
      %v2043 = vrot.slane %v2031, %v2042
      %v2044 = vsel %vm425, %v2043, %v2039
      %v2045 = vlaneseq
      %v2046 = vshrl.u32 %v2045, 7
      %v2047 = vsub.s32 3, %v2046
      %v2048 = vrot.slane %v2012, %v2047
      %2050 = vrot.lane.b32.xlu0 %v2044, 1
      %v2051 = vpop.permute.xlu0 %2050
      %v2053 = vmul.f32 %v2048, %v2051
      %v2054 = vlaneseq
      %v2055 = vshrl.u32 %v2054, 7
      %v2056 = vsub.s32 3, %v2055
      %v2057 = vrot.slane %v2016, %v2056
      %v2058 = vmul.f32 %v2057, %v2044
      %v2059 = vsub.f32 %v2053, %v2058
      %v2060 = vmul.f32 %v2057, %v2051
      %v2061 = vmul.f32 %v2048, %v2044
      %v2062 = vadd.f32 %v2060, %v2061
      %2064 = vset.pattern.permute.xlu0 4
      %2065 = vperm.xlu0 %2064, %v2062
      %v2066 = vpop.permute.xlu0 %2065
      %v2068 = vsel %vm555, %v2066, %v2044
      %2070 = vset.pattern.permute.xlu0 4
      %2071 = vperm.xlu0 %2070, %v2059
      %v2072 = vpop.permute.xlu0 %2071
      %v2074 = vsel %vm454, %v2072, %v2068
      %v2075 = vand.u32 2147483647, %v2074
      %vm2076 = vcmp.gt.f32.partialorder %v2075, 1e-12
      %v2077 = vsel %vm2076, %v2074, 1.0
      %v2079 = vrot.slane %v2074, 6
      %2080 = vrot.lane.b32.xlu0 %v2079, 2
      %v2081 = vpop.permute.xlu0 %2080
      %v2083 = vsub.f32 %v2074, %v2081
      %v2084 = vmul.f32 %v2077, 2.0
      %v2086 = vrot.slane %v2084, 6
      %v2088 = vrcp.pop %v2086
      %v2089 = vmul.f32 %v2083, %v2088
      %vm2090 = vcmp.ge.f32.partialorder %v2089, 0.0
      %v2091 = vsel %vm2090, 1.0, -1.0
      %v2092 = vand.u32 2147483647, %v2089
      %v2093 = vmul.f32 %v2089, %v2089
      %v2094 = vadd.f32 %v2093, 1.0
      %v2095 = vrsqrt.pop %v2094
      %v2096 = vmul.f32 %v2094, %v2095
      %vm2097 = vcmp.eq.f32.partialorder %v2094, inf
      %v2098 = vsel %vm2097, %v2094, %v2096
      %vm2099 = vcmp.eq.f32.partialorder %v2094, 0.0
      %v2100 = vand.u32 %v2094, 2147483648
      %v2101 = vsel %vm2099, %v2100, %v2098
      %v2102 = vadd.f32 %v2092, %v2101
      %v2103 = vrcp.pop %v2102
      %v2104 = vmul.f32 %v2091, %v2103
      %v2105 = vmul.f32 %v2104, %v2104
      %v2106 = vadd.f32 %v2105, 1.0
      %v2107 = vrsqrt.pop %v2106
      %v2108 = vmul.f32 %v2104, %v2107
      %v2110 = vrot.slane %v2107, 2
      %v2112 = vsel %vm2076, %v2110, 1.0
      %v2114 = vrot.slane %v2108, 2
      %v2116 = vsel %vm2076, %v2114, 0.0
      %2118 = vset.pattern.permute.xlu0 5
      %2119 = vperm.xlu0 %2118, %v2112
      %v2120 = vpop.permute.xlu0 %2119
      %v2122 = vmul.f32 %v2120, %v2074
      %2124 = vset.pattern.permute.xlu0 5
      %2125 = vperm.xlu0 %2124, %v2116
      %v2126 = vpop.permute.xlu0 %2125
      %v2128 = vrot.slane %v2074, 2
      %v2130 = vmul.f32 %v2126, %v2128
      %v2131 = vsub.f32 %v2122, %v2130
      %v2132 = vmul.f32 %v2126, %v2074
      %v2133 = vmul.f32 %v2120, %v2128
      %v2134 = vadd.f32 %v2132, %v2133
      %v2135 = vlaneseq
      %v2136 = vshrl.u32 %v2135, 7
      %v2137 = vsub.s32 3, %v2136
      %v2138 = vrot.slane %v2134, %v2137
      %v2139 = vsel %vm628, %v2138, %v2074
      %v2140 = vlaneseq
      %v2141 = vshrl.u32 %v2140, 7
      %v2142 = vsub.s32 3, %v2141
      %v2143 = vrot.slane %v2131, %v2142
      %v2144 = vsel %vm425, %v2143, %v2139
      %v2145 = vlaneseq
      %v2146 = vshrl.u32 %v2145, 7
      %v2147 = vsub.s32 3, %v2146
      %v2148 = vrot.slane %v2112, %v2147
      %2150 = vrot.lane.b32.xlu0 %v2144, 2
      %v2151 = vpop.permute.xlu0 %2150
      %v2153 = vmul.f32 %v2148, %v2151
      %v2154 = vlaneseq
      %v2155 = vshrl.u32 %v2154, 7
      %v2156 = vsub.s32 3, %v2155
      %v2157 = vrot.slane %v2116, %v2156
      %v2158 = vmul.f32 %v2157, %v2144
      %v2159 = vsub.f32 %v2153, %v2158
      %v2160 = vmul.f32 %v2157, %v2151
      %v2161 = vmul.f32 %v2148, %v2144
      %v2162 = vadd.f32 %v2160, %v2161
      %2164 = vset.pattern.permute.xlu0 5
      %2165 = vperm.xlu0 %2164, %v2162
      %v2166 = vpop.permute.xlu0 %2165
      %v2168 = vsel %vm657, %v2166, %v2144
      %2170 = vset.pattern.permute.xlu0 5
      %2171 = vperm.xlu0 %2170, %v2159
      %v2172 = vpop.permute.xlu0 %2171
      %v2174 = vsel %vm454, %v2172, %v2168
      %v2175 = vand.u32 2147483647, %v2174
      %vm2176 = vcmp.gt.f32.partialorder %v2175, 1e-12
      %v2177 = vsel %vm2176, %v2174, 1.0
      %v2179 = vrot.slane %v2174, 5
      %2180 = vrot.lane.b32.xlu0 %v2179, 3
      %v2181 = vpop.permute.xlu0 %2180
      %v2183 = vsub.f32 %v2174, %v2181
      %v2184 = vmul.f32 %v2177, 2.0
      %v2186 = vrot.slane %v2184, 5
      %v2188 = vrcp.pop %v2186
      %v2189 = vmul.f32 %v2183, %v2188
      %vm2190 = vcmp.ge.f32.partialorder %v2189, 0.0
      %v2191 = vsel %vm2190, 1.0, -1.0
      %v2192 = vand.u32 2147483647, %v2189
      %v2193 = vmul.f32 %v2189, %v2189
      %v2194 = vadd.f32 %v2193, 1.0
      %v2195 = vrsqrt.pop %v2194
      %v2196 = vmul.f32 %v2194, %v2195
      %vm2197 = vcmp.eq.f32.partialorder %v2194, inf
      %v2198 = vsel %vm2197, %v2194, %v2196
      %vm2199 = vcmp.eq.f32.partialorder %v2194, 0.0
      %v2200 = vand.u32 %v2194, 2147483648
      %v2201 = vsel %vm2199, %v2200, %v2198
      %v2202 = vadd.f32 %v2192, %v2201
      %v2203 = vrcp.pop %v2202
      %v2204 = vmul.f32 %v2191, %v2203
      %v2205 = vmul.f32 %v2204, %v2204
      %v2206 = vadd.f32 %v2205, 1.0
      %v2207 = vrsqrt.pop %v2206
      %v2208 = vmul.f32 %v2204, %v2207
      %v2210 = vrot.slane %v2207, 3
      %v2212 = vsel %vm2176, %v2210, 1.0
      %v2214 = vrot.slane %v2208, 3
      %v2216 = vsel %vm2176, %v2214, 0.0
      %2218 = vset.pattern.permute.xlu0 6
      %2219 = vperm.xlu0 %2218, %v2212
      %v2220 = vpop.permute.xlu0 %2219
      %v2222 = vmul.f32 %v2220, %v2174
      %2224 = vset.pattern.permute.xlu0 6
      %2225 = vperm.xlu0 %2224, %v2216
      %v2226 = vpop.permute.xlu0 %2225
      %v2228 = vrot.slane %v2174, 3
      %v2230 = vmul.f32 %v2226, %v2228
      %v2231 = vsub.f32 %v2222, %v2230
      %v2232 = vmul.f32 %v2226, %v2174
      %v2233 = vmul.f32 %v2220, %v2228
      %v2234 = vadd.f32 %v2232, %v2233
      %v2235 = vlaneseq
      %v2236 = vshrl.u32 %v2235, 7
      %v2237 = vsub.s32 3, %v2236
      %v2238 = vrot.slane %v2234, %v2237
      %v2239 = vsel %vm730, %v2238, %v2174
      %v2240 = vlaneseq
      %v2241 = vshrl.u32 %v2240, 7
      %v2242 = vsub.s32 3, %v2241
      %v2243 = vrot.slane %v2231, %v2242
      %v2244 = vsel %vm425, %v2243, %v2239
      %v2245 = vlaneseq
      %v2246 = vshrl.u32 %v2245, 7
      %v2247 = vsub.s32 3, %v2246
      %v2248 = vrot.slane %v2212, %v2247
      %2250 = vrot.lane.b32.xlu0 %v2244, 3
      %v2251 = vpop.permute.xlu0 %2250
      %v2253 = vmul.f32 %v2248, %v2251
      %v2254 = vlaneseq
      %v2255 = vshrl.u32 %v2254, 7
      %v2256 = vsub.s32 3, %v2255
      %v2257 = vrot.slane %v2216, %v2256
      %v2258 = vmul.f32 %v2257, %v2244
      %v2259 = vsub.f32 %v2253, %v2258
      %v2260 = vmul.f32 %v2257, %v2251
      %v2261 = vmul.f32 %v2248, %v2244
      %v2262 = vadd.f32 %v2260, %v2261
      %2264 = vset.pattern.permute.xlu0 6
      %2265 = vperm.xlu0 %2264, %v2262
      %v2266 = vpop.permute.xlu0 %2265
      %v2268 = vsel %vm759, %v2266, %v2244
      %2270 = vset.pattern.permute.xlu0 6
      %2271 = vperm.xlu0 %2270, %v2259
      %v2272 = vpop.permute.xlu0 %2271
      %v2274 = vsel %vm454, %v2272, %v2268
      %v2275 = vand.u32 2147483647, %v2274
      %vm2276 = vcmp.gt.f32.partialorder %v2275, 1e-12
      %v2277 = vsel %vm2276, %v2274, 1.0
      %v2279 = vrot.slane %v2274, 4
      %2280 = vrot.lane.b32.xlu0 %v2279, 4
      %v2281 = vpop.permute.xlu0 %2280
      %v2283 = vsub.f32 %v2274, %v2281
      %v2284 = vmul.f32 %v2277, 2.0
      %v2286 = vrot.slane %v2284, 4
      %v2288 = vrcp.pop %v2286
      %v2289 = vmul.f32 %v2283, %v2288
      %vm2290 = vcmp.ge.f32.partialorder %v2289, 0.0
      %v2291 = vsel %vm2290, 1.0, -1.0
      %v2292 = vand.u32 2147483647, %v2289
      %v2293 = vmul.f32 %v2289, %v2289
      %v2294 = vadd.f32 %v2293, 1.0
      %v2295 = vrsqrt.pop %v2294
      %v2296 = vmul.f32 %v2294, %v2295
      %vm2297 = vcmp.eq.f32.partialorder %v2294, inf
      %v2298 = vsel %vm2297, %v2294, %v2296
      %vm2299 = vcmp.eq.f32.partialorder %v2294, 0.0
      %v2300 = vand.u32 %v2294, 2147483648
      %v2301 = vsel %vm2299, %v2300, %v2298
      %v2302 = vadd.f32 %v2292, %v2301
      %v2303 = vrcp.pop %v2302
      %v2304 = vmul.f32 %v2291, %v2303
      %v2305 = vmul.f32 %v2304, %v2304
      %v2306 = vadd.f32 %v2305, 1.0
      %v2307 = vrsqrt.pop %v2306
      %v2308 = vmul.f32 %v2304, %v2307
      %v2310 = vrot.slane %v2307, 4
      %v2312 = vsel %vm2276, %v2310, 1.0
      %v2314 = vrot.slane %v2308, 4
      %v2316 = vsel %vm2276, %v2314, 0.0
      %2318 = vset.pattern.permute.xlu0 7
      %2319 = vperm.xlu0 %2318, %v2312
      %v2320 = vpop.permute.xlu0 %2319
      %v2322 = vmul.f32 %v2320, %v2274
      %2324 = vset.pattern.permute.xlu0 7
      %2325 = vperm.xlu0 %2324, %v2316
      %v2326 = vpop.permute.xlu0 %2325
      %v2329 = vmul.f32 %v2326, %v2279
      %v2330 = vsub.f32 %v2322, %v2329
      %v2331 = vmul.f32 %v2326, %v2274
      %v2332 = vmul.f32 %v2320, %v2279
      %v2333 = vadd.f32 %v2331, %v2332
      %v2334 = vlaneseq
      %v2335 = vshrl.u32 %v2334, 7
      %v2336 = vsub.s32 3, %v2335
      %v2337 = vrot.slane %v2333, %v2336
      %v2338 = vsel %vm832, %v2337, %v2274
      %v2339 = vlaneseq
      %v2340 = vshrl.u32 %v2339, 7
      %v2341 = vsub.s32 3, %v2340
      %v2342 = vrot.slane %v2330, %v2341
      %v2343 = vsel %vm425, %v2342, %v2338
      %v2344 = vlaneseq
      %v2345 = vshrl.u32 %v2344, 7
      %v2346 = vsub.s32 3, %v2345
      %v2347 = vrot.slane %v2312, %v2346
      %2349 = vrot.lane.b32.xlu0 %v2343, 4
      %v2350 = vpop.permute.xlu0 %2349
      %v2352 = vmul.f32 %v2347, %v2350
      %v2353 = vlaneseq
      %v2354 = vshrl.u32 %v2353, 7
      %v2355 = vsub.s32 3, %v2354
      %v2356 = vrot.slane %v2316, %v2355
      %v2357 = vmul.f32 %v2356, %v2343
      %v2358 = vsub.f32 %v2352, %v2357
      %v2359 = vmul.f32 %v2356, %v2350
      %v2360 = vmul.f32 %v2347, %v2343
      %v2361 = vadd.f32 %v2359, %v2360
      %2363 = vset.pattern.permute.xlu0 7
      %2364 = vperm.xlu0 %2363, %v2361
      %v2365 = vpop.permute.xlu0 %2364
      %v2367 = vsel %vm861, %v2365, %v2343
      %2369 = vset.pattern.permute.xlu0 7
      %2370 = vperm.xlu0 %2369, %v2358
      %v2371 = vpop.permute.xlu0 %2370
      %v2373 = vsel %vm454, %v2371, %v2367
      %v2374 = vand.u32 2147483647, %v2373
      %vm2375 = vcmp.gt.f32.partialorder %v2374, 1e-12
      %v2376 = vsel %vm2375, %v2373, 1.0
      %v2378 = vrot.slane %v2373, 7
      %2379 = vrot.lane.b32.xlu0 %v2378, 1
      %v2380 = vpop.permute.xlu0 %2379
      %v2382 = vsub.f32 %v2373, %v2380
      %v2383 = vmul.f32 %v2376, 2.0
      %v2385 = vrot.slane %v2383, 7
      %v2387 = vrcp.pop %v2385
      %v2388 = vmul.f32 %v2382, %v2387
      %vm2389 = vcmp.ge.f32.partialorder %v2388, 0.0
      %v2390 = vsel %vm2389, 1.0, -1.0
      %v2391 = vand.u32 2147483647, %v2388
      %v2392 = vmul.f32 %v2388, %v2388
      %v2393 = vadd.f32 %v2392, 1.0
      %v2394 = vrsqrt.pop %v2393
      %v2395 = vmul.f32 %v2393, %v2394
      %vm2396 = vcmp.eq.f32.partialorder %v2393, inf
      %v2397 = vsel %vm2396, %v2393, %v2395
      %vm2398 = vcmp.eq.f32.partialorder %v2393, 0.0
      %v2399 = vand.u32 %v2393, 2147483648
      %v2400 = vsel %vm2398, %v2399, %v2397
      %v2401 = vadd.f32 %v2391, %v2400
      %v2402 = vrcp.pop %v2401
      %v2403 = vmul.f32 %v2390, %v2402
      %v2404 = vmul.f32 %v2403, %v2403
      %v2405 = vadd.f32 %v2404, 1.0
      %v2406 = vrsqrt.pop %v2405
      %v2407 = vmul.f32 %v2403, %v2406
      %v2409 = vrot.slane %v2406, 1
      %v2411 = vsel %vm2375, %v2409, 1.0
      %v2413 = vrot.slane %v2407, 1
      %v2415 = vsel %vm2375, %v2413, 0.0
      %2417 = vset.pattern.permute.xlu0 5
      %2418 = vperm.xlu0 %2417, %v2411
      %v2419 = vpop.permute.xlu0 %2418
      %v2421 = vmul.f32 %v2419, %v2373
      %2423 = vset.pattern.permute.xlu0 5
      %2424 = vperm.xlu0 %2423, %v2415
      %v2425 = vpop.permute.xlu0 %2424
      %v2427 = vrot.slane %v2373, 1
      %v2429 = vmul.f32 %v2425, %v2427
      %v2430 = vsub.f32 %v2421, %v2429
      %v2431 = vmul.f32 %v2425, %v2373
      %v2432 = vmul.f32 %v2419, %v2427
      %v2433 = vadd.f32 %v2431, %v2432
      %v2434 = vlaneseq
      %v2435 = vshrl.u32 %v2434, 7
      %v2436 = vsub.s32 4, %v2435
      %v2437 = vrot.slane %v2433, %v2436
      %v2438 = vsel %vm628, %v2437, %v2373
      %v2439 = vlaneseq
      %v2440 = vshrl.u32 %v2439, 7
      %v2441 = vsub.s32 4, %v2440
      %v2442 = vrot.slane %v2430, %v2441
      %v2443 = vsel %vm526, %v2442, %v2438
      %v2444 = vlaneseq
      %v2445 = vshrl.u32 %v2444, 7
      %v2446 = vsub.s32 4, %v2445
      %v2447 = vrot.slane %v2411, %v2446
      %2449 = vrot.lane.b32.xlu0 %v2443, 1
      %v2450 = vpop.permute.xlu0 %2449
      %v2452 = vmul.f32 %v2447, %v2450
      %v2453 = vlaneseq
      %v2454 = vshrl.u32 %v2453, 7
      %v2455 = vsub.s32 4, %v2454
      %v2456 = vrot.slane %v2415, %v2455
      %v2457 = vmul.f32 %v2456, %v2443
      %v2458 = vsub.f32 %v2452, %v2457
      %v2459 = vmul.f32 %v2456, %v2450
      %v2460 = vmul.f32 %v2447, %v2443
      %v2461 = vadd.f32 %v2459, %v2460
      %2463 = vset.pattern.permute.xlu0 5
      %2464 = vperm.xlu0 %2463, %v2461
      %v2465 = vpop.permute.xlu0 %2464
      %v2467 = vsel %vm657, %v2465, %v2443
      %2469 = vset.pattern.permute.xlu0 5
      %2470 = vperm.xlu0 %2469, %v2458
      %v2471 = vpop.permute.xlu0 %2470
      %v2473 = vsel %vm555, %v2471, %v2467
      %v2474 = vand.u32 2147483647, %v2473
      %vm2475 = vcmp.gt.f32.partialorder %v2474, 1e-12
      %v2476 = vsel %vm2475, %v2473, 1.0
      %v2478 = vrot.slane %v2473, 6
      %2479 = vrot.lane.b32.xlu0 %v2478, 2
      %v2480 = vpop.permute.xlu0 %2479
      %v2482 = vsub.f32 %v2473, %v2480
      %v2483 = vmul.f32 %v2476, 2.0
      %v2485 = vrot.slane %v2483, 6
      %v2487 = vrcp.pop %v2485
      %v2488 = vmul.f32 %v2482, %v2487
      %vm2489 = vcmp.ge.f32.partialorder %v2488, 0.0
      %v2490 = vsel %vm2489, 1.0, -1.0
      %v2491 = vand.u32 2147483647, %v2488
      %v2492 = vmul.f32 %v2488, %v2488
      %v2493 = vadd.f32 %v2492, 1.0
      %v2494 = vrsqrt.pop %v2493
      %v2495 = vmul.f32 %v2493, %v2494
      %vm2496 = vcmp.eq.f32.partialorder %v2493, inf
      %v2497 = vsel %vm2496, %v2493, %v2495
      %vm2498 = vcmp.eq.f32.partialorder %v2493, 0.0
      %v2499 = vand.u32 %v2493, 2147483648
      %v2500 = vsel %vm2498, %v2499, %v2497
      %v2501 = vadd.f32 %v2491, %v2500
      %v2502 = vrcp.pop %v2501
      %v2503 = vmul.f32 %v2490, %v2502
      %v2504 = vmul.f32 %v2503, %v2503
      %v2505 = vadd.f32 %v2504, 1.0
      %v2506 = vrsqrt.pop %v2505
      %v2507 = vmul.f32 %v2503, %v2506
      %v2509 = vrot.slane %v2506, 2
      %v2511 = vsel %vm2475, %v2509, 1.0
      %v2513 = vrot.slane %v2507, 2
      %v2515 = vsel %vm2475, %v2513, 0.0
      %2517 = vset.pattern.permute.xlu0 6
      %2518 = vperm.xlu0 %2517, %v2511
      %v2519 = vpop.permute.xlu0 %2518
      %v2521 = vmul.f32 %v2519, %v2473
      %2523 = vset.pattern.permute.xlu0 6
      %2524 = vperm.xlu0 %2523, %v2515
      %v2525 = vpop.permute.xlu0 %2524
      %v2527 = vrot.slane %v2473, 2
      %v2529 = vmul.f32 %v2525, %v2527
      %v2530 = vsub.f32 %v2521, %v2529
      %v2531 = vmul.f32 %v2525, %v2473
      %v2532 = vmul.f32 %v2519, %v2527
      %v2533 = vadd.f32 %v2531, %v2532
      %v2534 = vlaneseq
      %v2535 = vshrl.u32 %v2534, 7
      %v2536 = vsub.s32 4, %v2535
      %v2537 = vrot.slane %v2533, %v2536
      %v2538 = vsel %vm730, %v2537, %v2473
      %v2539 = vlaneseq
      %v2540 = vshrl.u32 %v2539, 7
      %v2541 = vsub.s32 4, %v2540
      %v2542 = vrot.slane %v2530, %v2541
      %v2543 = vsel %vm526, %v2542, %v2538
      %v2544 = vlaneseq
      %v2545 = vshrl.u32 %v2544, 7
      %v2546 = vsub.s32 4, %v2545
      %v2547 = vrot.slane %v2511, %v2546
      %2549 = vrot.lane.b32.xlu0 %v2543, 2
      %v2550 = vpop.permute.xlu0 %2549
      %v2552 = vmul.f32 %v2547, %v2550
      %v2553 = vlaneseq
      %v2554 = vshrl.u32 %v2553, 7
      %v2555 = vsub.s32 4, %v2554
      %v2556 = vrot.slane %v2515, %v2555
      %v2557 = vmul.f32 %v2556, %v2543
      %v2558 = vsub.f32 %v2552, %v2557
      %v2559 = vmul.f32 %v2556, %v2550
      %v2560 = vmul.f32 %v2547, %v2543
      %v2561 = vadd.f32 %v2559, %v2560
      %2563 = vset.pattern.permute.xlu0 6
      %2564 = vperm.xlu0 %2563, %v2561
      %v2565 = vpop.permute.xlu0 %2564
      %v2567 = vsel %vm759, %v2565, %v2543
      %2569 = vset.pattern.permute.xlu0 6
      %2570 = vperm.xlu0 %2569, %v2558
      %v2571 = vpop.permute.xlu0 %2570
      %v2573 = vsel %vm555, %v2571, %v2567
      %v2574 = vand.u32 2147483647, %v2573
      %vm2575 = vcmp.gt.f32.partialorder %v2574, 1e-12
      %v2576 = vsel %vm2575, %v2573, 1.0
      %v2578 = vrot.slane %v2573, 5
      %2579 = vrot.lane.b32.xlu0 %v2578, 3
      %v2580 = vpop.permute.xlu0 %2579
      %v2582 = vsub.f32 %v2573, %v2580
      %v2583 = vmul.f32 %v2576, 2.0
      %v2585 = vrot.slane %v2583, 5
      %v2587 = vrcp.pop %v2585
      %v2588 = vmul.f32 %v2582, %v2587
      %vm2589 = vcmp.ge.f32.partialorder %v2588, 0.0
      %v2590 = vsel %vm2589, 1.0, -1.0
      %v2591 = vand.u32 2147483647, %v2588
      %v2592 = vmul.f32 %v2588, %v2588
      %v2593 = vadd.f32 %v2592, 1.0
      %v2594 = vrsqrt.pop %v2593
      %v2595 = vmul.f32 %v2593, %v2594
      %vm2596 = vcmp.eq.f32.partialorder %v2593, inf
      %v2597 = vsel %vm2596, %v2593, %v2595
      %vm2598 = vcmp.eq.f32.partialorder %v2593, 0.0
      %v2599 = vand.u32 %v2593, 2147483648
      %v2600 = vsel %vm2598, %v2599, %v2597
      %v2601 = vadd.f32 %v2591, %v2600
      %v2602 = vrcp.pop %v2601
      %v2603 = vmul.f32 %v2590, %v2602
      %v2604 = vmul.f32 %v2603, %v2603
      %v2605 = vadd.f32 %v2604, 1.0
      %v2606 = vrsqrt.pop %v2605
      %v2607 = vmul.f32 %v2603, %v2606
      %v2609 = vrot.slane %v2606, 3
      %v2611 = vsel %vm2575, %v2609, 1.0
      %v2613 = vrot.slane %v2607, 3
      %v2615 = vsel %vm2575, %v2613, 0.0
      %2617 = vset.pattern.permute.xlu0 7
      %2618 = vperm.xlu0 %2617, %v2611
      %v2619 = vpop.permute.xlu0 %2618
      %v2621 = vmul.f32 %v2619, %v2573
      %2623 = vset.pattern.permute.xlu0 7
      %2624 = vperm.xlu0 %2623, %v2615
      %v2625 = vpop.permute.xlu0 %2624
      %v2627 = vrot.slane %v2573, 3
      %v2629 = vmul.f32 %v2625, %v2627
      %v2630 = vsub.f32 %v2621, %v2629
      %v2631 = vmul.f32 %v2625, %v2573
      %v2632 = vmul.f32 %v2619, %v2627
      %v2633 = vadd.f32 %v2631, %v2632
      %v2634 = vlaneseq
      %v2635 = vshrl.u32 %v2634, 7
      %v2636 = vsub.s32 4, %v2635
      %v2637 = vrot.slane %v2633, %v2636
      %v2638 = vsel %vm832, %v2637, %v2573
      %v2639 = vlaneseq
      %v2640 = vshrl.u32 %v2639, 7
      %v2641 = vsub.s32 4, %v2640
      %v2642 = vrot.slane %v2630, %v2641
      %v2643 = vsel %vm526, %v2642, %v2638
      %v2644 = vlaneseq
      %v2645 = vshrl.u32 %v2644, 7
      %v2646 = vsub.s32 4, %v2645
      %v2647 = vrot.slane %v2611, %v2646
      %2649 = vrot.lane.b32.xlu0 %v2643, 3
      %v2650 = vpop.permute.xlu0 %2649
      %v2652 = vmul.f32 %v2647, %v2650
      %v2653 = vlaneseq
      %v2654 = vshrl.u32 %v2653, 7
      %v2655 = vsub.s32 4, %v2654
      %v2656 = vrot.slane %v2615, %v2655
      %v2657 = vmul.f32 %v2656, %v2643
      %v2658 = vsub.f32 %v2652, %v2657
      %v2659 = vmul.f32 %v2656, %v2650
      %v2660 = vmul.f32 %v2647, %v2643
      %v2661 = vadd.f32 %v2659, %v2660
      %2663 = vset.pattern.permute.xlu0 7
      %2664 = vperm.xlu0 %2663, %v2661
      %v2665 = vpop.permute.xlu0 %2664
      %v2667 = vsel %vm861, %v2665, %v2643
      %2669 = vset.pattern.permute.xlu0 7
      %2670 = vperm.xlu0 %2669, %v2658
      %v2671 = vpop.permute.xlu0 %2670
      %v2673 = vsel %vm555, %v2671, %v2667
      %v2674 = vand.u32 2147483647, %v2673
      %vm2675 = vcmp.gt.f32.partialorder %v2674, 1e-12
      %v2676 = vsel %vm2675, %v2673, 1.0
      %v2678 = vrot.slane %v2673, 7
      %2679 = vrot.lane.b32.xlu0 %v2678, 1
      %v2680 = vpop.permute.xlu0 %2679
      %v2682 = vsub.f32 %v2673, %v2680
      %v2683 = vmul.f32 %v2676, 2.0
      %v2685 = vrot.slane %v2683, 7
      %v2687 = vrcp.pop %v2685
      %v2688 = vmul.f32 %v2682, %v2687
      %vm2689 = vcmp.ge.f32.partialorder %v2688, 0.0
      %v2690 = vsel %vm2689, 1.0, -1.0
      %v2691 = vand.u32 2147483647, %v2688
      %v2692 = vmul.f32 %v2688, %v2688
      %v2693 = vadd.f32 %v2692, 1.0
      %v2694 = vrsqrt.pop %v2693
      %v2695 = vmul.f32 %v2693, %v2694
      %vm2696 = vcmp.eq.f32.partialorder %v2693, inf
      %v2697 = vsel %vm2696, %v2693, %v2695
      %vm2698 = vcmp.eq.f32.partialorder %v2693, 0.0
      %v2699 = vand.u32 %v2693, 2147483648
      %v2700 = vsel %vm2698, %v2699, %v2697
      %v2701 = vadd.f32 %v2691, %v2700
      %v2702 = vrcp.pop %v2701
      %v2703 = vmul.f32 %v2690, %v2702
      %v2704 = vmul.f32 %v2703, %v2703
      %v2705 = vadd.f32 %v2704, 1.0
      %v2706 = vrsqrt.pop %v2705
      %v2707 = vmul.f32 %v2703, %v2706
      %v2709 = vrot.slane %v2706, 1
      %v2711 = vsel %vm2675, %v2709, 1.0
      %v2713 = vrot.slane %v2707, 1
      %v2715 = vsel %vm2675, %v2713, 0.0
      %2717 = vset.pattern.permute.xlu0 6
      %2718 = vperm.xlu0 %2717, %v2711
      %v2719 = vpop.permute.xlu0 %2718
      %v2721 = vmul.f32 %v2719, %v2673
      %2723 = vset.pattern.permute.xlu0 6
      %2724 = vperm.xlu0 %2723, %v2715
      %v2725 = vpop.permute.xlu0 %2724
      %v2727 = vrot.slane %v2673, 1
      %v2729 = vmul.f32 %v2725, %v2727
      %v2730 = vsub.f32 %v2721, %v2729
      %v2731 = vmul.f32 %v2725, %v2673
      %v2732 = vmul.f32 %v2719, %v2727
      %v2733 = vadd.f32 %v2731, %v2732
      %v2734 = vlaneseq
      %v2735 = vshrl.u32 %v2734, 7
      %v2736 = vsub.s32 5, %v2735
      %v2737 = vrot.slane %v2733, %v2736
      %v2738 = vsel %vm730, %v2737, %v2673
      %v2739 = vlaneseq
      %v2740 = vshrl.u32 %v2739, 7
      %v2741 = vsub.s32 5, %v2740
      %v2742 = vrot.slane %v2730, %v2741
      %v2743 = vsel %vm628, %v2742, %v2738
      %v2744 = vlaneseq
      %v2745 = vshrl.u32 %v2744, 7
      %v2746 = vsub.s32 5, %v2745
      %v2747 = vrot.slane %v2711, %v2746
      %2749 = vrot.lane.b32.xlu0 %v2743, 1
      %v2750 = vpop.permute.xlu0 %2749
      %v2752 = vmul.f32 %v2747, %v2750
      %v2753 = vlaneseq
      %v2754 = vshrl.u32 %v2753, 7
      %v2755 = vsub.s32 5, %v2754
      %v2756 = vrot.slane %v2715, %v2755
      %v2757 = vmul.f32 %v2756, %v2743
      %v2758 = vsub.f32 %v2752, %v2757
      %v2759 = vmul.f32 %v2756, %v2750
      %v2760 = vmul.f32 %v2747, %v2743
      %v2761 = vadd.f32 %v2759, %v2760
      %2763 = vset.pattern.permute.xlu0 6
      %2764 = vperm.xlu0 %2763, %v2761
      %v2765 = vpop.permute.xlu0 %2764
      %v2767 = vsel %vm759, %v2765, %v2743
      %2769 = vset.pattern.permute.xlu0 6
      %2770 = vperm.xlu0 %2769, %v2758
      %v2771 = vpop.permute.xlu0 %2770
      %v2773 = vsel %vm657, %v2771, %v2767
      %v2774 = vand.u32 2147483647, %v2773
      %vm2775 = vcmp.gt.f32.partialorder %v2774, 1e-12
      %v2776 = vsel %vm2775, %v2773, 1.0
      %v2778 = vrot.slane %v2773, 6
      %2779 = vrot.lane.b32.xlu0 %v2778, 2
      %v2780 = vpop.permute.xlu0 %2779
      %v2782 = vsub.f32 %v2773, %v2780
      %v2783 = vmul.f32 %v2776, 2.0
      %v2785 = vrot.slane %v2783, 6
      %v2787 = vrcp.pop %v2785
      %v2788 = vmul.f32 %v2782, %v2787
      %vm2789 = vcmp.ge.f32.partialorder %v2788, 0.0
      %v2790 = vsel %vm2789, 1.0, -1.0
      %v2791 = vand.u32 2147483647, %v2788
      %v2792 = vmul.f32 %v2788, %v2788
      %v2793 = vadd.f32 %v2792, 1.0
      %v2794 = vrsqrt.pop %v2793
      %v2795 = vmul.f32 %v2793, %v2794
      %vm2796 = vcmp.eq.f32.partialorder %v2793, inf
      %v2797 = vsel %vm2796, %v2793, %v2795
      %vm2798 = vcmp.eq.f32.partialorder %v2793, 0.0
      %v2799 = vand.u32 %v2793, 2147483648
      %v2800 = vsel %vm2798, %v2799, %v2797
      %v2801 = vadd.f32 %v2791, %v2800
      %v2802 = vrcp.pop %v2801
      %v2803 = vmul.f32 %v2790, %v2802
      %v2804 = vmul.f32 %v2803, %v2803
      %v2805 = vadd.f32 %v2804, 1.0
      %v2806 = vrsqrt.pop %v2805
      %v2807 = vmul.f32 %v2803, %v2806
      %v2809 = vrot.slane %v2806, 2
      %v2811 = vsel %vm2775, %v2809, 1.0
      %v2813 = vrot.slane %v2807, 2
      %v2815 = vsel %vm2775, %v2813, 0.0
      %2817 = vset.pattern.permute.xlu0 7
      %2818 = vperm.xlu0 %2817, %v2811
      %v2819 = vpop.permute.xlu0 %2818
      %v2821 = vmul.f32 %v2819, %v2773
      %2823 = vset.pattern.permute.xlu0 7
      %2824 = vperm.xlu0 %2823, %v2815
      %v2825 = vpop.permute.xlu0 %2824
      %v2827 = vrot.slane %v2773, 2
      %v2829 = vmul.f32 %v2825, %v2827
      %v2830 = vsub.f32 %v2821, %v2829
      %v2831 = vmul.f32 %v2825, %v2773
      %v2832 = vmul.f32 %v2819, %v2827
      %v2833 = vadd.f32 %v2831, %v2832
      %v2834 = vlaneseq
      %v2835 = vshrl.u32 %v2834, 7
      %v2836 = vsub.s32 5, %v2835
      %v2837 = vrot.slane %v2833, %v2836
      %v2838 = vsel %vm832, %v2837, %v2773
      %v2839 = vlaneseq
      %v2840 = vshrl.u32 %v2839, 7
      %v2841 = vsub.s32 5, %v2840
      %v2842 = vrot.slane %v2830, %v2841
      %v2843 = vsel %vm628, %v2842, %v2838
      %v2844 = vlaneseq
      %v2845 = vshrl.u32 %v2844, 7
      %v2846 = vsub.s32 5, %v2845
      %v2847 = vrot.slane %v2811, %v2846
      %2849 = vrot.lane.b32.xlu0 %v2843, 2
      %v2850 = vpop.permute.xlu0 %2849
      %v2852 = vmul.f32 %v2847, %v2850
      %v2853 = vlaneseq
      %v2854 = vshrl.u32 %v2853, 7
      %v2855 = vsub.s32 5, %v2854
      %v2856 = vrot.slane %v2815, %v2855
      %v2857 = vmul.f32 %v2856, %v2843
      %v2858 = vsub.f32 %v2852, %v2857
      %v2859 = vmul.f32 %v2856, %v2850
      %v2860 = vmul.f32 %v2847, %v2843
      %v2861 = vadd.f32 %v2859, %v2860
      %2863 = vset.pattern.permute.xlu0 7
      %2864 = vperm.xlu0 %2863, %v2861
      %v2865 = vpop.permute.xlu0 %2864
      %v2867 = vsel %vm861, %v2865, %v2843
      %2869 = vset.pattern.permute.xlu0 7
      %2870 = vperm.xlu0 %2869, %v2858
      %v2871 = vpop.permute.xlu0 %2870
      %v2873 = vsel %vm657, %v2871, %v2867
      %v2874 = vand.u32 2147483647, %v2873
      %vm2875 = vcmp.gt.f32.partialorder %v2874, 1e-12
      %v2876 = vsel %vm2875, %v2873, 1.0
      %v2878 = vrot.slane %v2873, 7
      %2879 = vrot.lane.b32.xlu0 %v2878, 1
      %v2880 = vpop.permute.xlu0 %2879
      %v2882 = vsub.f32 %v2873, %v2880
      %v2883 = vmul.f32 %v2876, 2.0
      %v2885 = vrot.slane %v2883, 7
      %v2887 = vrcp.pop %v2885
      %v2888 = vmul.f32 %v2882, %v2887
      %vm2889 = vcmp.ge.f32.partialorder %v2888, 0.0
      %v2890 = vsel %vm2889, 1.0, -1.0
      %v2891 = vand.u32 2147483647, %v2888
      %v2892 = vmul.f32 %v2888, %v2888
      %v2893 = vadd.f32 %v2892, 1.0
      %v2894 = vrsqrt.pop %v2893
      %v2895 = vmul.f32 %v2893, %v2894
      %vm2896 = vcmp.eq.f32.partialorder %v2893, inf
      %v2897 = vsel %vm2896, %v2893, %v2895
      %vm2898 = vcmp.eq.f32.partialorder %v2893, 0.0
      %v2899 = vand.u32 %v2893, 2147483648
      %v2900 = vsel %vm2898, %v2899, %v2897
      %v2901 = vadd.f32 %v2891, %v2900
      %v2902 = vrcp.pop %v2901
      %v2903 = vmul.f32 %v2890, %v2902
      %v2904 = vmul.f32 %v2903, %v2903
      %v2905 = vadd.f32 %v2904, 1.0
      %v2906 = vrsqrt.pop %v2905
      %v2907 = vmul.f32 %v2903, %v2906
      %v2909 = vrot.slane %v2906, 1
      %v2911 = vsel %vm2875, %v2909, 1.0
      %v2913 = vrot.slane %v2907, 1
      %v2915 = vsel %vm2875, %v2913, 0.0
      %2917 = vset.pattern.permute.xlu0 7
      %2918 = vperm.xlu0 %2917, %v2911
      %v2919 = vpop.permute.xlu0 %2918
      %v2921 = vmul.f32 %v2919, %v2873
      %2923 = vset.pattern.permute.xlu0 7
      %2924 = vperm.xlu0 %2923, %v2915
      %v2925 = vpop.permute.xlu0 %2924
      %v2927 = vrot.slane %v2873, 1
      %v2929 = vmul.f32 %v2925, %v2927
      %v2930 = vsub.f32 %v2921, %v2929
      %v2931 = vmul.f32 %v2925, %v2873
      %v2932 = vmul.f32 %v2919, %v2927
      %v2933 = vadd.f32 %v2931, %v2932
      %v2934 = vlaneseq
      %v2935 = vshrl.u32 %v2934, 7
      %v2936 = vsub.s32 6, %v2935
      %v2937 = vrot.slane %v2933, %v2936
      %v2938 = vsel %vm832, %v2937, %v2873
      %v2939 = vlaneseq
      %v2940 = vshrl.u32 %v2939, 7
      %v2941 = vsub.s32 6, %v2940
      %v2942 = vrot.slane %v2930, %v2941
      %v2943 = vsel %vm730, %v2942, %v2938
      %v2944 = vlaneseq
      %v2945 = vshrl.u32 %v2944, 7
      %v2946 = vsub.s32 6, %v2945
      %v2947 = vrot.slane %v2911, %v2946
      %2949 = vrot.lane.b32.xlu0 %v2943, 1
      %v2950 = vpop.permute.xlu0 %2949
      %v2952 = vmul.f32 %v2947, %v2950
      %v2953 = vlaneseq
      %v2954 = vshrl.u32 %v2953, 7
      %v2955 = vsub.s32 6, %v2954
      %v2956 = vrot.slane %v2915, %v2955
      %v2957 = vmul.f32 %v2956, %v2943
      %v2958 = vsub.f32 %v2952, %v2957
      %v2959 = vmul.f32 %v2956, %v2950
      %v2960 = vmul.f32 %v2947, %v2943
      %v2961 = vadd.f32 %v2959, %v2960
      %2963 = vset.pattern.permute.xlu0 7
      %2964 = vperm.xlu0 %2963, %v2961
      %v2965 = vpop.permute.xlu0 %2964
      %v2967 = vsel %vm861, %v2965, %v2943
      %2969 = vset.pattern.permute.xlu0 7
      %2970 = vperm.xlu0 %2969, %v2958
      %v2971 = vpop.permute.xlu0 %2970
      %v2973 = vsel %vm759, %v2971, %v2967
    $region10: #{net_forward.1} parent=1 // loop_footer
      %s160 = sadd.s32 1, %s156
    $region11: #{net_forward.1} parent=1 // loop_footer_branch
      %155 = sbr.rel target = $region7
    $region12: #{net_forward.1} parent=1 // loop_exit
      _
    %v2974 = vsel %vm150, %v161, 0.0
    %v2975 = vsel %vm142, %v2974, 0.0
    %v2976 = vrot.slane %v2975, 4
    %v2977 = vadd.f32 %v2975, %v2976
    %v2978 = vrot.slane %v2977, 2
    %v2979 = vadd.f32 %v2977, %v2978
    %v2980 = vrot.slane %v2979, 1
    %v2981 = vadd.f32 %v2979, %v2980
    %v2982 = vand.u32 2147483647, %v2981
    %2983 = vadd.xlane.f32.xlu0 %v2975
    %v2984 = vpop.xlane.xlu0 %2983
    %v2985 = vand.u32 2147483647, %v2984
    %vm2986 = vcmp.gt.f32.partialorder %v2985, %v2982
    %vm2987 = vcmp.eq.f32.partialorder %v2985, %v2982
    %vm2988 = vcmp.lt.s32.totalorder %v147, %v149
    %vm2989 = vmand %vm2987, %vm2988
    %vm2990 = vmor %vm2986, %vm2989
    %v2991 = vsel %vm2990, 1, 0
    %v2992 = vsel %vm142, %v2991, 0
    %v2993 = vrot.slane %v2992, 4
    %v2994 = vadd.s32 %v2992, %v2993
    %v2995 = vrot.slane %v2994, 2
    %v2996 = vadd.s32 %v2994, %v2995
    %v2997 = vrot.slane %v2996, 1
    %v2998 = vadd.s32 %v2996, %v2997
    %vm2999 = vcmp.eq.s32.totalorder %v2998, %v147
    %v3000 = vsel %vm2999, %v2982, 0.0
    %v3001 = vsel %vm142, %v3000, 0.0
    %3002 = vadd.xlane.f32.xlu0 %v3001
    %v3003 = vpop.xlane.xlu0 %3002
    %vm3004 = vcmask 7168
    %3005 = vst.msk [vmem:[%s1] sm:$0xff] %vm3004, %v3003
    // Predicated region
    $region13: #{net_forward.1} parent=1 // pred_check
      _
    $region14: #{net_forward.1} parent=1 // pred_check_branch
      %3007 = sbr.rel (0) target = $region16
    $region15: #{net_forward.1} parent=1 // pred_region
      _
    $region16: #{net_forward.1} parent=1 // pred_fallthru
      _
    // Predicated region
    $region17: #{net_forward.1} parent=1 // pred_check
      _
    $region18: #{net_forward.1} parent=1 // pred_check_branch
      %3009 = sbr.rel (0) target = $region20
    $region19: #{net_forward.1} parent=1 // pred_region
      %s3011 = ssub.s32 128, 128
      %3012 = vsyncadd [#allocation3], %s3011
      %s3014 = sshll.u32 [#allocation2], 4
      %s3015 = int_to_ptr.vmem [resolvable:$true] %s3014
      %3017 = dma.vmem_to_hbm [thread:$0]  %s3015, 128, %s2, [#allocation3]
    $region20: #{net_forward.1} parent=1 // pred_fallthru
      _
    // Predicated region
    $region21: #{net_forward.1} parent=1 // pred_check
      _
    $region22: #{net_forward.1} parent=1 // pred_check_branch
      %3019 = sbr.rel (0) target = $region24
    $region23: #{net_forward.1} parent=1 // pred_region
      _
    $region24: #{net_forward.1} parent=1 // pred_fallthru
      _
    // Predicated region
    $region25: #{net_forward.1} parent=1 // pred_check
      _
    $region26: #{net_forward.1} parent=1 // pred_check_branch
      %3021 = sbr.rel (0) target = $region28
    $region27: #{net_forward.1} parent=1 // pred_region
      %3022 = dma.done [#allocation3], 128
    $region28: #{net_forward.1} parent=1 // pred_fallthru
      _
    %3023 = vsyncpa [#allocation3], 1

</llo_original>
